<compile_context>
chip_gen: v5e
topology: v5e:2x2
jax: 0.10.0
libtpu: 0.0.40
codegen_flags: <defaults>
</compile_context>

<pallas_src>
import math
import numpy as np
import jax
import jax.numpy as jnp
from jax.experimental import pallas as pl
from jax.experimental.pallas import tpu as pltpu

# ----------------------------- configuration -------------------------------
IND = 16          # "ind"  (2048 in the original, scaled down)
CH = 32           # "ch"   (1024 in the original)
F_DIM = 32        # transformer dim; equals CH (1024 == 1024 originally)
N_HEAD = 4
HEAD_DIM = F_DIM // N_HEAD
N_GROUPS = 8
TIME_DIM = 16
PE_DIM = 128      # hard-coded in the original TransInr.__init__
PE_SIGMA = 1024.0

MATMUL_DTYPE = jnp.bfloat16   # MXU input dtype (f32 accumulation); set to
                              # jnp.float32 for full-precision matmuls.

# HypoMlp(depth=2, in_dim=2, out_dim=CH, hidden_dim=F_DIM, use_pe=True, pe_dim=128)
HYPO_SHAPES = {
    "wb0": (2 * PE_DIM + 1, F_DIM),
    "wb1": (F_DIM + 1, CH),
}

WTOKEN_RNG = {}
_off = 0
for _name, _shape in HYPO_SHAPES.items():
    _g = min(N_GROUPS, _shape[1])
    assert _shape[1] % _g == 0
    WTOKEN_RNG[_name] = (_off, _off + _g)
    _off += _g
N_WTOKENS = _off


# --------------------------- in-kernel helpers ------------------------------
def _mm(a, b):
    """MXU matmul, bf16 inputs, f32 accumulation."""
    return jnp.dot(a.astype(MATMUL_DTYPE), b.astype(MATMUL_DTYPE),
                   preferred_element_type=jnp.float32)


def _mm_t(a, b):
    """a @ b.T without materializing a transpose (MXU 'NT' matmul)."""
    return jax.lax.dot_general(
        a.astype(MATMUL_DTYPE), b.astype(MATMUL_DTYPE),
        dimension_numbers=(((1,), (1,)), ((), ())),
        preferred_element_type=jnp.float32)


def _layer_norm(x, g, b, eps=1e-5):
    mu = jnp.mean(x, axis=-1, keepdims=True)
    var = jnp.mean(jnp.square(x - mu), axis=-1, keepdims=True)
    return (x - mu) * jax.lax.rsqrt(var + eps) * g + b


def _channel_ln_cm(x, eps):
    """Per-pixel LayerNorm over the channel (sublane) axis, no affine.
    x is channel-major: (C, HW)."""
    mu = jnp.mean(x, axis=0, keepdims=True)
    var = jnp.mean(jnp.square(x - mu), axis=0, keepdims=True)
    return (x - mu) * jax.lax.rsqrt(var + eps)


def _gelu(x):
    # TODO(synk): PyTorch nn.GELU() is the exact erf form; erf has no Mosaic
    # lowering, so the tanh approximation is used inside the kernels.
    c = 0.7978845608028654  # sqrt(2/pi)
    return 0.5 * x * (1.0 + jnp.tanh(c * (x + 0.044715 * x * x * x)))


# ----------------------------- BlockSpec helpers ----------------------------
def _full_spec(a):
    """Whole array resident in VMEM; block index constant -> DMA'd once."""
    zeros = (0,) * a.ndim
    return pl.BlockSpec(a.shape, lambda b: zeros)


def _batch_spec(a):
    """One leading-batch slice per grid step."""
    blk = (1,) + tuple(a.shape[1:])
    zeros = (0,) * (a.ndim - 1)
    return pl.BlockSpec(blk, lambda b: (b,) + zeros)


# ------------------------- fused encoder kernel ------------------------------
def _make_encoder_kernel(hw):
    def kernel(x_ref, w_in_ref, b_in_ref, w_tok_ref, b_tok_ref, pos_ref,
               wtok_ref, ln1g_ref, ln1b_ref, wqkv_ref, bqkv_ref,
               wo_ref, bo_ref, ln2g_ref, ln2b_ref,
               f1w_ref, f1b_ref, f2w_ref, f2b_ref, o_ref):
        # input_layer: Conv2d(ind, ch, 1) == per-pixel matmul
        x = x_ref[0]                                            # (hw, IND)
        feat = _mm(x, w_in_ref[...]) + b_in_ref[...]            # (hw, CH)
        # TODO(synk): ImgrecTokenizer definition not provided; per-pixel linear
        # projection + learned positional embedding is used as the tokenizer.
        tok = _mm(feat, w_tok_ref[...]) + b_tok_ref[...] + pos_ref[...]
        seq = jnp.concatenate([tok, wtok_ref[...]], axis=0)     # (hw+NW, D)

        # TODO(synk): TransformerEncoder definition not provided; a standard
        # pre-norm encoder layer (MHA + GELU MLP), depth=1, is used.
        hln = _layer_norm(seq, ln1g_ref[...], ln1b_ref[...])
        # Single fused QKV matmul (attention scale pre-folded into Q columns).
        qkv = _mm(hln, wqkv_ref[...]) + bqkv_ref[...]           # (N, 3*D)
        heads = []
        for hh in range(N_HEAD):                                # unrolled heads
            lo = hh * HEAD_DIM
            qh = qkv[:, lo:lo + HEAD_DIM]
            kh = qkv[:, F_DIM + lo:F_DIM + lo + HEAD_DIM]
            vh = qkv[:, 2 * F_DIM + lo:2 * F_DIM + lo + HEAD_DIM]
            s = _mm_t(qh, kh)                                   # (N, N) f32
            s = s - jnp.max(s, axis=-1, keepdims=True)
            p = jnp.exp(s)
            p = p / jnp.sum(p, axis=-1, keepdims=True)
            heads.append(_mm(p, vh))                            # (N, HD)
        # Single fused out-projection over the concatenated heads.
        att = _mm(jnp.concatenate(heads, axis=-1), wo_ref[...]) + bo_ref[...]
        seq = seq + att

        h2 = _layer_norm(seq, ln2g_ref[...], ln2b_ref[...])
        f = _gelu(_mm(h2, f1w_ref[...]) + f1b_ref[...])
        f = _mm(f, f2w_ref[...]) + f2b_ref[...]
        seq = seq + f

        o_ref[0] = seq[hw:, :].astype(o_ref.dtype)              # wtokens only
    return kernel


def encoder_forward(params, tokens):
    """Fused: input conv + tokenizer + 1 transformer layer.  grid=(B,)."""
    B, hw, ind = tokens.shape
    scale = 1.0 / math.sqrt(HEAD_DIM)

    # Fused Q|K|V weights (D, 3D); attention scale folded into the Q block.
    wqkv = jnp.concatenate([params["wq"] * scale, params["wk"], params["wv"]],
                           axis=1)                              # (D, 3D)
    bqkv = jnp.concatenate([params["bq"] * scale, params["bk"], params["bv"]],
                           axis=0).reshape(1, 3 * F_DIM)        # (1, 3D)

    args = [
        (tokens, True),
        (params["input_w"], False), (params["input_b"].reshape(1, CH), False),
        (params["tok_w"], False), (params["tok_b"].reshape(1, F_DIM), False),
        (params["tok_pos"], False),
        (params["wtokens"], False),
        (params["ln1_g"].reshape(1, F_DIM), False),
        (params["ln1_b"].reshape(1, F_DIM), False),
        (wqkv, False), (bqkv, False),
        (params["wo"], False), (params["bo"].reshape(1, F_DIM), False),
        (params["ln2_g"].reshape(1, F_DIM), False),
        (params["ln2_b"].reshape(1, F_DIM), False),
        (params["ff1_w"], False), (params["ff1_b"].reshape(1, F_DIM), False),
        (params["ff2_w"], False), (params["ff2_b"].reshape(1, F_DIM), False),
    ]
    inputs = [a for a, _ in args]
    in_specs = [(_batch_spec(a) if bat else _full_spec(a)) for a, bat in args]

    n = hw + N_WTOKENS
    flops = 2 * B * (hw * ind * CH + hw * CH * F_DIM
                     + 3 * n * F_DIM * F_DIM
                     + 2 * N_HEAD * n * n * HEAD_DIM
                     + 3 * n * F_DIM * F_DIM)
    transc = B * (N_HEAD * n * n + n * F_DIM)
    bytes_acc = sum(int(a.size) * 4 for a in inputs) + B * N_WTOKENS * F_DIM * 4

    return pl.pallas_call(
        _make_encoder_kernel(hw),
        out_shape=jax.ShapeDtypeStruct((B, N_WTOKENS, F_DIM), tokens.dtype),
        grid=(B,),
        in_specs=in_specs,
        out_specs=pl.BlockSpec((1, N_WTOKENS, F_DIM), lambda b: (b, 0, 0)),
        compiler_params=pltpu.CompilerParams(dimension_semantics=("parallel",)),
        cost_estimate=pl.CostEstimate(flops=flops, transcendentals=transc,
                                      bytes_accessed=bytes_acc),
    )(*inputs)


# ------------------------- fused decoder kernel ------------------------------
# Everything is CHANNEL-MAJOR: tensors are (channels, H*W) so the lane axis is
# the (large, 128-aligned) pixel axis -> full-width MXU matmuls, unmasked
# lane-dense stores, and no NCHW<->NHWC transposes at the API boundary.
def _decoder_kernel(pe_ref, w0_ref, b0_ref, w1_ref, b1_ref,
                    outw_ref, outb_ref, ori_ref, tgt_ref,
                    tw1a_ref, tw1b_ref, tb1_ref, tw2_ref, tb2_ref,
                    scale_ref, shift_ref, hrs_ref, o_ref):
    pe = pe_ref[...]                                            # (2*PE_DIM, HW)
    # HypoMlp with per-sample (modulated + L2-normalized) weights.
    hid = jnp.maximum(_mm(w0_ref[0], pe) + b0_ref[0], 0.0)      # (F_DIM, HW)
    hypo = _mm(w1_ref[0], hid) + b1_ref[0]                      # (CH, HW), out_bias=0
    # output_layer (1x1 conv) + nearest-upsampled residual.
    hr = _mm(outw_ref[...], hypo) + outb_ref[...] + ori_ref[0]  # (IND, HW)
    # toout MLP on channel-concat [hr, target]; concat folded into split weights.
    t = _mm(tw1a_ref[...], hr) + _mm(tw1b_ref[...], tgt_ref[0]) + tb1_ref[...]
    t = _gelu(t)                                                # (IND//4, HW)
    y = _mm(tw2_ref[...], t) + tb2_ref[...]                     # (IND, HW)
    # TODO(synk): TimestepBlock definition not provided; SiLU->Linear FiLM
    # (scale/shift computed in the wrapper) is used.
    z = y * (1.0 + scale_ref[0]) + shift_ref[0]
    # normalize_final: LayerNorm2d over channels (no affine, eps=1e-6).
    z = _channel_ln_cm(z, 1e-6)
    # TODO(synk): ScaleNormalize_res definition not provided; residual
    # per-channel-scaled channel LayerNorm is used as an approximation.
    z = z + hrs_ref[...] * _channel_ln_cm(z, 1e-6)
    o_ref[0] = z.astype(o_ref.dtype)


def decoder_forward(params, pe_cm, hypo_w, ori_cm, tgt_cm, film_scale, film_shift):
    """Fused: hyponet + output conv + residual + toout + FiLM + norms. grid=(B,).
    All operands channel-major (C, HW)."""
    B, ind, HW = ori_cm.shape
    w0t, b0 = hypo_w["wb0"]                  # (B, F_DIM, 2*PE_DIM), (B, F_DIM, 1)
    w1t, b1 = hypo_w["wb1"]                  # (B, CH, F_DIM),       (B, CH, 1)
    outw_t = params["output_w"].T            # (IND, CH)
    tw1a_t = params["toout_w1"][:ind, :].T   # (IND//4, IND) acting on hr_rec
    tw1b_t = params["toout_w1"][ind:, :].T   # (IND//4, IND) acting on target
    tw2_t = params["toout_w2"].T             # (IND, IND//4)

    args = [
        (pe_cm, False),
        (w0t, True), (b0, True), (w1t, True), (b1, True),
        (outw_t, False), (params["output_b"].reshape(ind, 1), False),
        (ori_cm, True), (tgt_cm, True),
        (tw1a_t, False), (tw1b_t, False),
        (params["toout_b1"].reshape(-1, 1), False),
        (tw2_t, False), (params["toout_b2"].reshape(ind, 1), False),
        (film_scale, True), (film_shift, True),
        (params["hrnorm_scale"].reshape(ind, 1), False),
    ]
    inputs = [a for a, _ in args]
    in_specs = [(_batch_spec(a) if bat else _full_spec(a)) for a, bat in args]

    flops = 2 * B * HW * (2 * PE_DIM * F_DIM + F_DIM * CH + CH * ind
                          + 2 * ind * (ind // 4) + (ind // 4) * ind)
    transc = B * HW * (ind // 4)
    bytes_acc = sum(int(a.size) * 4 for a in inputs) + B * HW * ind * 4

    return pl.pallas_call(
        _decoder_kernel,
        out_shape=jax.ShapeDtypeStruct((B, ind, HW), ori_cm.dtype),
        grid=(B,),
        in_specs=in_specs,
        out_specs=pl.BlockSpec((1, ind, HW), lambda b: (b, 0, 0)),
        compiler_params=pltpu.CompilerParams(dimension_semantics=("parallel",)),
        cost_estimate=pl.CostEstimate(flops=flops, transcendentals=transc,
                                      bytes_accessed=bytes_acc),
    )(*inputs)


# ----------------------------- plain-JAX glue -------------------------------
def build_hypo_params(params, trans_out):
    """Per-sample hyponet weights (modulate + L2-normalize over the input dim),
    returned TRANSPOSED (out_dim, in_dim) for the channel-major decoder.
    Tensors are tiny (<= 2x257x32) so this stays in XLA by design."""
    B = trans_out.shape[0]
    out = {}
    for name, shape in HYPO_SHAPES.items():
        K, N = shape[0] - 1, shape[1]
        base = params[f"base_{name}"]                        # (K+1, N)
        wbase = base[:-1, :]
        bias = jnp.broadcast_to(base[-1, :].reshape(1, N, 1), (B, N, 1))
        l, r = WTOKEN_RNG[name]
        g = r - l
        xg = trans_out[:, l:r, :]                            # (B, g, F_DIM)
        xg = _layer_norm(xg, params[f"postfc_{name}_ln_g"],
                         params[f"postfc_{name}_ln_b"])
        xg = jnp.matmul(xg, params[f"postfc_{name}_w"]) + params[f"postfc_{name}_b"]
        xg = jnp.swapaxes(xg, 1, 2)                          # (B, K, g)
        xg = jnp.tile(xg, (1, 1, N // g))                    # (B, K, N)
        wmod = wbase[None] * xg
        norm = jnp.sqrt(jnp.sum(wmod * wmod, axis=1, keepdims=True))
        wnorm = wmod / jnp.maximum(norm, 1e-12)              # F.normalize(dim=1)
        out[name] = (jnp.swapaxes(wnorm, 1, 2), bias)        # (B, N, K), (B, N, 1)
    return out


# ----------------------------- forward pass ---------------------------------
def trans_inr_forward(params, target_shape, target, dtokens, t_emb):
    B, ind, h, w = dtokens.shape
    H, W = target_shape[2], target_shape[3]

    # Encoder tokens (the only NHWC-layout consumer): one tiny relayout.
    tokens = jnp.transpose(dtokens, (0, 2, 3, 1)).reshape(B, h * w, ind)

    # Fused encoder (input conv + tokenizer + transformer layer).
    trans_out = encoder_forward(params, tokens)              # (B, N_WTOKENS, D)

    # Per-sample hyponet weights (tiny XLA glue), pre-transposed for the
    # channel-major decoder.
    hypo_w = build_hypo_params(params, trans_out)

    # Fourier positional encoding of the coord grid, built channel-major
    # (2*PE_DIM, H*W).  Batch-invariant and made of compile-time constants.
    ys = -1.0 + 2.0 * (0.5 + jnp.arange(H, dtype=jnp.float32)) / H
    xs = -1.0 + 2.0 * (0.5 + jnp.arange(W, dtype=jnp.float32)) / W
    gy, gx = jnp.meshgrid(ys, xs, indexing="ij")
    coord = jnp.stack([gy, gx], axis=-1).reshape(H * W, 2)
    wpe = jnp.exp(jnp.linspace(0.0, np.log(PE_SIGMA), PE_DIM // 2)).astype(jnp.float32)
    xp = (coord[:, :, None] * wpe[None, None, :]).reshape(H * W, 2 * (PE_DIM // 2))
    pe = jnp.concatenate([jnp.cos(np.pi * xp), jnp.sin(np.pi * xp)], axis=-1)
    pe_cm = pe.T                                             # (2*PE_DIM, H*W)

    # Nearest-neighbour upsampled residual (F.interpolate 'nearest'), NCHW-native.
    hi = (jnp.arange(H) * h) // H
    wi = (jnp.arange(W) * w) // W
    ori_cm = dtokens[:, :, hi][:, :, :, wi].reshape(B, ind, H * W)

    if target.shape[0] == 1:
        target = jnp.broadcast_to(target, (B,) + target.shape[1:])
    tgt_cm = target.reshape(B, ind, H * W)                   # NCHW-native, no transpose

    # TimestepBlock FiLM parameters (tiny XLA glue), channel-major (B, ind, 1).
    emb = jnp.dot(jax.nn.silu(t_emb), params["mapp_w"]) + params["mapp_b"]
    film_scale = emb[:, :ind].reshape(B, ind, 1)
    film_shift = emb[:, ind:].reshape(B, ind, 1)

    # Fused decoder (hyponet + output conv + residual + toout + FiLM + norms).
    out_cm = decoder_forward(params, pe_cm, hypo_w, ori_cm, tgt_cm,
                             film_scale, film_shift)         # (B, ind, H*W)
    return out_cm.reshape(B, ind, H, W)                      # NCHW, no transpose


# ----------------------------- parameter init -------------------------------
def init_params(seed=0):
    key = jax.random.PRNGKey(seed)
    params = {}

    def take(shape, scale):
        nonlocal key
        key, sub = jax.random.split(key)
        return scale * jax.random.normal(sub, shape, jnp.float32)

    def lin_init(prefix, k, n):
        params[f"{prefix}_w"] = take((k, n), 1.0 / math.sqrt(k))
        params[f"{prefix}_b"] = take((n,), 1.0 / math.sqrt(k))

    # input / output 1x1 convs
    lin_init("input", IND, CH)
    lin_init("output", CH, IND)
    # tokenizer (TODO(synk) approximation): per-pixel proj + learned pos-emb
    lin_init("tok", CH, F_DIM)
    params["tok_pos"] = take((8 * 8, F_DIM), 0.02)
    # transformer encoder (1 layer)
    params["ln1_g"] = jnp.ones((F_DIM,), jnp.float32)
    params["ln1_b"] = jnp.zeros((F_DIM,), jnp.float32)
    params["ln2_g"] = jnp.ones((F_DIM,), jnp.float32)
    params["ln2_b"] = jnp.zeros((F_DIM,), jnp.float32)
    for name in ("wq", "wk", "wv", "wo"):
        params[name] = take((F_DIM, F_DIM), 1.0 / math.sqrt(F_DIM))
        params["b" + name[1]] = jnp.zeros((F_DIM,), jnp.float32)
    lin_init("ff1", F_DIM, F_DIM)
    lin_init("ff2", F_DIM, F_DIM)
    # base hyponet weights (init_wb analogue) + postfc heads
    for name, shape in HYPO_SHAPES.items():
        params[f"base_{name}"] = take(shape, 1.0 / math.sqrt(shape[0] - 1))
        params[f"postfc_{name}_ln_g"] = jnp.ones((F_DIM,), jnp.float32)
        params[f"postfc_{name}_ln_b"] = jnp.zeros((F_DIM,), jnp.float32)
        lin_init(f"postfc_{name}", F_DIM, shape[0] - 1)
    params["wtokens"] = take((N_WTOKENS, F_DIM), 1.0)
    # toout MLP
    params["toout_w1"] = take((2 * IND, IND // 4), 1.0 / math.sqrt(2 * IND))
    params["toout_b1"] = jnp.zeros((IND // 4,), jnp.float32)
    params["toout_w2"] = take((IND // 4, IND), 1.0 / math.sqrt(IND // 4))
    params["toout_b2"] = jnp.zeros((IND,), jnp.float32)
    # timestep modulation
    params["mapp_w"] = take((TIME_DIM, 2 * IND), 1.0 / math.sqrt(TIME_DIM))
    params["mapp_b"] = jnp.zeros((2 * IND,), jnp.float32)
    # hr_norm scale
    params["hrnorm_scale"] = 0.1 * jnp.ones((IND,), jnp.float32)
    return params


# ----------------------------- main ------------------------------------------
if __name__ == "__main__":
    B, h, w = 2, 8, 8
    H, W = 16, 16
    params = init_params(0)

    key = jax.random.PRNGKey(0)
    k1, k2, k3 = jax.random.split(key, 3)
    dtokens = jax.random.normal(k1, (B, IND, h, w), jnp.float32)
    target = jax.random.normal(k2, (1, IND, H, W), jnp.float32)  # exercises repeat branch
    t_emb = jax.random.normal(k3, (B, TIME_DIM), jnp.float32)
    target_shape = (B, IND, H, W)

    fwd = jax.jit(lambda p, tgt, dt, te: trans_inr_forward(p, target_shape, tgt, dt, te))
    out = jax.block_until_ready(fwd(params, target, dtokens, t_emb))
    assert out.shape == (B, IND, H, W)
    assert bool(jnp.all(jnp.isfinite(out)))
    print("KERNEL_OK")
</pallas_src>

<mosaic_0001>
module attributes {stable_mosaic.version = 11 : i64} {
  func.func @kernel(%arg0: i32, %arg1: memref<1x64x16xf32, #tpu.memory_space<vmem>>, %arg2: memref<16x32xf32, #tpu.memory_space<vmem>>, %arg3: memref<1x32xf32, #tpu.memory_space<vmem>>, %arg4: memref<32x32xf32, #tpu.memory_space<vmem>>, %arg5: memref<1x32xf32, #tpu.memory_space<vmem>>, %arg6: memref<64x32xf32, #tpu.memory_space<vmem>>, %arg7: memref<16x32xf32, #tpu.memory_space<vmem>>, %arg8: memref<1x32xf32, #tpu.memory_space<vmem>>, %arg9: memref<1x32xf32, #tpu.memory_space<vmem>>, %arg10: memref<32x96xf32, #tpu.memory_space<vmem>>, %arg11: memref<1x96xf32, #tpu.memory_space<vmem>>, %arg12: memref<32x32xf32, #tpu.memory_space<vmem>>, %arg13: memref<1x32xf32, #tpu.memory_space<vmem>>, %arg14: memref<1x32xf32, #tpu.memory_space<vmem>>, %arg15: memref<1x32xf32, #tpu.memory_space<vmem>>, %arg16: memref<32x32xf32, #tpu.memory_space<vmem>>, %arg17: memref<1x32xf32, #tpu.memory_space<vmem>>, %arg18: memref<32x32xf32, #tpu.memory_space<vmem>>, %arg19: memref<1x32xf32, #tpu.memory_space<vmem>>, %arg20: memref<1x16x32xf32, #tpu.memory_space<vmem>>) attributes {dimension_semantics = [#tpu.dimension_semantics<parallel>], iteration_bounds = array<i64: 2>, scalar_prefetch = 0 : i64, scratch_operands = 0 : i64, tpu.core_type = #tpu.core_type<tc>, window_params = [{transform_indices = @transform_0, window_bounds = array<i64: 1, 64, 16>}, {pipeline_mode = #tpu.pipeline_mode<synchronous>, transform_indices = @transform_1, window_bounds = array<i64: 16, 32>}, {pipeline_mode = #tpu.pipeline_mode<synchronous>, transform_indices = @transform_2, window_bounds = array<i64: 1, 32>}, {pipeline_mode = #tpu.pipeline_mode<synchronous>, transform_indices = @transform_3, window_bounds = array<i64: 32, 32>}, {pipeline_mode = #tpu.pipeline_mode<synchronous>, transform_indices = @transform_4, window_bounds = array<i64: 1, 32>}, {pipeline_mode = #tpu.pipeline_mode<synchronous>, transform_indices = @transform_5, window_bounds = array<i64: 64, 32>}, {pipeline_mode = #tpu.pipeline_mode<synchronous>, transform_indices = @transform_6, window_bounds = array<i64: 16, 32>}, {pipeline_mode = #tpu.pipeline_mode<synchronous>, transform_indices = @transform_7, window_bounds = array<i64: 1, 32>}, {pipeline_mode = #tpu.pipeline_mode<synchronous>, transform_indices = @transform_8, window_bounds = array<i64: 1, 32>}, {pipeline_mode = #tpu.pipeline_mode<synchronous>, transform_indices = @transform_9, window_bounds = array<i64: 32, 96>}, {pipeline_mode = #tpu.pipeline_mode<synchronous>, transform_indices = @transform_10, window_bounds = array<i64: 1, 96>}, {pipeline_mode = #tpu.pipeline_mode<synchronous>, transform_indices = @transform_11, window_bounds = array<i64: 32, 32>}, {pipeline_mode = #tpu.pipeline_mode<synchronous>, transform_indices = @transform_12, window_bounds = array<i64: 1, 32>}, {pipeline_mode = #tpu.pipeline_mode<synchronous>, transform_indices = @transform_13, window_bounds = array<i64: 1, 32>}, {pipeline_mode = #tpu.pipeline_mode<synchronous>, transform_indices = @transform_14, window_bounds = array<i64: 1, 32>}, {pipeline_mode = #tpu.pipeline_mode<synchronous>, transform_indices = @transform_15, window_bounds = array<i64: 32, 32>}, {pipeline_mode = #tpu.pipeline_mode<synchronous>, transform_indices = @transform_16, window_bounds = array<i64: 1, 32>}, {pipeline_mode = #tpu.pipeline_mode<synchronous>, transform_indices = @transform_17, window_bounds = array<i64: 32, 32>}, {pipeline_mode = #tpu.pipeline_mode<synchronous>, transform_indices = @transform_18, window_bounds = array<i64: 1, 32>}, {transform_indices = @transform_19, window_bounds = array<i64: 1, 16, 32>}]} {
    %c0 = arith.constant 0 : index
    %c0_0 = arith.constant 0 : index
    %c0_1 = arith.constant 0 : index
    %0 = vector.load %arg1[%c0, %c0_0, %c0_1] : memref<1x64x16xf32, #tpu.memory_space<vmem>>, vector<1x64x16xf32>
    %1 = vector.shape_cast %0 : vector<1x64x16xf32> to vector<64x16xf32>
    %c0_2 = arith.constant 0 : index
    %c0_3 = arith.constant 0 : index
    %2 = vector.load %arg2[%c0_2, %c0_3] : memref<16x32xf32, #tpu.memory_space<vmem>>, vector<16x32xf32>
    %3 = arith.truncf %1 : vector<64x16xf32> to vector<64x16xbf16>
    %4 = arith.truncf %2 : vector<16x32xf32> to vector<16x32xbf16>
    %cst = arith.constant dense<0.000000e+00> : vector<64x32xf32>
    %5 = tpu.matmul %3, %4, %cst {dimension_numbers = #tpu.dot_dimension_numbers<[1], [0], [0], [1], [0, 0, 1, 1], [], []>} : vector<64x16xbf16>, vector<16x32xbf16>, vector<64x32xf32> -> vector<64x32xf32>
    %c0_4 = arith.constant 0 : index
    %c0_5 = arith.constant 0 : index
    %6 = vector.load %arg3[%c0_4, %c0_5] : memref<1x32xf32, #tpu.memory_space<vmem>>, vector<1x32xf32>
    %7 = vector.broadcast %6 : vector<1x32xf32> to vector<64x32xf32>
    %8 = arith.addf %5, %7 : vector<64x32xf32>
    %c0_6 = arith.constant 0 : index
    %c0_7 = arith.constant 0 : index
    %9 = vector.load %arg4[%c0_6, %c0_7] : memref<32x32xf32, #tpu.memory_space<vmem>>, vector<32x32xf32>
    %10 = arith.truncf %8 : vector<64x32xf32> to vector<64x32xbf16>
    %11 = arith.truncf %9 : vector<32x32xf32> to vector<32x32xbf16>
    %cst_8 = arith.constant dense<0.000000e+00> : vector<64x32xf32>
    %12 = tpu.matmul %10, %11, %cst_8 {dimension_numbers = #tpu.dot_dimension_numbers<[1], [0], [0], [1], [0, 0, 1, 1], [], []>} : vector<64x32xbf16>, vector<32x32xbf16>, vector<64x32xf32> -> vector<64x32xf32>
    %c0_9 = arith.constant 0 : index
    %c0_10 = arith.constant 0 : index
    %13 = vector.load %arg5[%c0_9, %c0_10] : memref<1x32xf32, #tpu.memory_space<vmem>>, vector<1x32xf32>
    %14 = vector.broadcast %13 : vector<1x32xf32> to vector<64x32xf32>
    %15 = arith.addf %12, %14 : vector<64x32xf32>
    %c0_11 = arith.constant 0 : index
    %c0_12 = arith.constant 0 : index
    %16 = vector.load %arg6[%c0_11, %c0_12] : memref<64x32xf32, #tpu.memory_space<vmem>>, vector<64x32xf32>
    %17 = arith.addf %15, %16 : vector<64x32xf32>
    %c0_13 = arith.constant 0 : index
    %c0_14 = arith.constant 0 : index
    %18 = vector.load %arg7[%c0_13, %c0_14] : memref<16x32xf32, #tpu.memory_space<vmem>>, vector<16x32xf32>
    %19 = tpu.concatenate %17, %18 in 0 : vector<64x32xf32>, vector<16x32xf32> -> vector<80x32xf32>
    %c0_15 = arith.constant 0 : index
    %c0_16 = arith.constant 0 : index
    %20 = vector.load %arg8[%c0_15, %c0_16] : memref<1x32xf32, #tpu.memory_space<vmem>>, vector<1x32xf32>
    %c0_17 = arith.constant 0 : index
    %c0_18 = arith.constant 0 : index
    %21 = vector.load %arg9[%c0_17, %c0_18] : memref<1x32xf32, #tpu.memory_space<vmem>>, vector<1x32xf32>
    %cst_19 = arith.constant dense<0.000000e+00> : vector<80xf32>
    %22 = vector.multi_reduction <add>, %19, %cst_19 [1] : vector<80x32xf32> to vector<80xf32>
    %23 = vector.shape_cast %22 : vector<80xf32> to vector<80x1xf32>
    %cst_20 = arith.constant 3.200000e+01 : f32
    %24 = vector.broadcast %cst_20 : f32 to vector<80x1xf32>
    %25 = arith.divf %23, %24 : vector<80x1xf32>
    %26 = vector.broadcast %25 : vector<80x1xf32> to vector<80x32xf32>
    %27 = arith.subf %19, %26 : vector<80x32xf32>
    %28 = arith.mulf %27, %27 : vector<80x32xf32>
    %cst_21 = arith.constant dense<0.000000e+00> : vector<80xf32>
    %29 = vector.multi_reduction <add>, %28, %cst_21 [1] : vector<80x32xf32> to vector<80xf32>
    %30 = vector.shape_cast %29 : vector<80xf32> to vector<80x1xf32>
    %cst_22 = arith.constant 3.200000e+01 : f32
    %31 = vector.broadcast %cst_22 : f32 to vector<80x1xf32>
    %32 = arith.divf %30, %31 : vector<80x1xf32>
    %33 = vector.broadcast %25 : vector<80x1xf32> to vector<80x32xf32>
    %34 = arith.subf %19, %33 : vector<80x32xf32>
    %cst_23 = arith.constant 9.99999974E-6 : f32
    %35 = vector.broadcast %cst_23 : f32 to vector<80x1xf32>
    %36 = arith.addf %32, %35 : vector<80x1xf32>
    %37 = math.rsqrt %36 : vector<80x1xf32>
    %38 = vector.broadcast %37 : vector<80x1xf32> to vector<80x32xf32>
    %39 = arith.mulf %34, %38 : vector<80x32xf32>
    %40 = vector.broadcast %20 : vector<1x32xf32> to vector<80x32xf32>
    %41 = arith.mulf %39, %40 : vector<80x32xf32>
    %42 = vector.broadcast %21 : vector<1x32xf32> to vector<80x32xf32>
    %43 = arith.addf %41, %42 : vector<80x32xf32>
    %c0_24 = arith.constant 0 : index
    %c0_25 = arith.constant 0 : index
    %44 = vector.load %arg10[%c0_24, %c0_25] : memref<32x96xf32, #tpu.memory_space<vmem>>, vector<32x96xf32>
    %45 = arith.truncf %43 : vector<80x32xf32> to vector<80x32xbf16>
    %46 = arith.truncf %44 : vector<32x96xf32> to vector<32x96xbf16>
    %cst_26 = arith.constant dense<0.000000e+00> : vector<80x96xf32>
    %47 = tpu.matmul %45, %46, %cst_26 {dimension_numbers = #tpu.dot_dimension_numbers<[1], [0], [0], [1], [0, 0, 1, 1], [], []>} : vector<80x32xbf16>, vector<32x96xbf16>, vector<80x96xf32> -> vector<80x96xf32>
    %c0_27 = arith.constant 0 : index
    %c0_28 = arith.constant 0 : index
    %48 = vector.load %arg11[%c0_27, %c0_28] : memref<1x96xf32, #tpu.memory_space<vmem>>, vector<1x96xf32>
    %49 = vector.broadcast %48 : vector<1x96xf32> to vector<80x96xf32>
    %50 = arith.addf %47, %49 : vector<80x96xf32>
    %51 = vector.extract_strided_slice %50 {offsets = [0, 0], sizes = [80, 8], strides = [1, 1]} : vector<80x96xf32> to vector<80x8xf32>
    %52 = vector.extract_strided_slice %50 {offsets = [0, 32], sizes = [80, 8], strides = [1, 1]} : vector<80x96xf32> to vector<80x8xf32>
    %53 = vector.extract_strided_slice %50 {offsets = [0, 64], sizes = [80, 8], strides = [1, 1]} : vector<80x96xf32> to vector<80x8xf32>
    %54 = arith.truncf %51 : vector<80x8xf32> to vector<80x8xbf16>
    %55 = arith.truncf %52 : vector<80x8xf32> to vector<80x8xbf16>
    %cst_29 = arith.constant dense<0.000000e+00> : vector<80x80xf32>
    %56 = tpu.matmul %54, %55, %cst_29 {dimension_numbers = #tpu.dot_dimension_numbers<[1], [1], [0], [0], [0, 0, 1, 0], [], []>} : vector<80x8xbf16>, vector<80x8xbf16>, vector<80x80xf32> -> vector<80x80xf32>
    %cst_30 = arith.constant dense<0xFF800000> : vector<80xf32>
    %57 = vector.multi_reduction <maximumf>, %56, %cst_30 [1] : vector<80x80xf32> to vector<80xf32>
    %58 = vector.shape_cast %57 : vector<80xf32> to vector<80x1xf32>
    %59 = vector.broadcast %58 : vector<80x1xf32> to vector<80x80xf32>
    %60 = arith.subf %56, %59 : vector<80x80xf32>
    %61 = math.exp %60 : vector<80x80xf32>
    %cst_31 = arith.constant dense<0.000000e+00> : vector<80xf32>
    %62 = vector.multi_reduction <add>, %61, %cst_31 [1] : vector<80x80xf32> to vector<80xf32>
    %63 = vector.shape_cast %62 : vector<80xf32> to vector<80x1xf32>
    %64 = vector.broadcast %63 : vector<80x1xf32> to vector<80x80xf32>
    %65 = arith.divf %61, %64 : vector<80x80xf32>
    %66 = arith.truncf %65 : vector<80x80xf32> to vector<80x80xbf16>
    %67 = arith.truncf %53 : vector<80x8xf32> to vector<80x8xbf16>
    %cst_32 = arith.constant dense<0.000000e+00> : vector<80x8xf32>
    %68 = tpu.matmul %66, %67, %cst_32 {dimension_numbers = #tpu.dot_dimension_numbers<[1], [0], [0], [1], [0, 0, 1, 1], [], []>} : vector<80x80xbf16>, vector<80x8xbf16>, vector<80x8xf32> -> vector<80x8xf32>
    %69 = vector.extract_strided_slice %50 {offsets = [0, 8], sizes = [80, 8], strides = [1, 1]} : vector<80x96xf32> to vector<80x8xf32>
    %70 = vector.extract_strided_slice %50 {offsets = [0, 40], sizes = [80, 8], strides = [1, 1]} : vector<80x96xf32> to vector<80x8xf32>
    %71 = vector.extract_strided_slice %50 {offsets = [0, 72], sizes = [80, 8], strides = [1, 1]} : vector<80x96xf32> to vector<80x8xf32>
    %72 = arith.truncf %69 : vector<80x8xf32> to vector<80x8xbf16>
    %73 = arith.truncf %70 : vector<80x8xf32> to vector<80x8xbf16>
    %cst_33 = arith.constant dense<0.000000e+00> : vector<80x80xf32>
    %74 = tpu.matmul %72, %73, %cst_33 {dimension_numbers = #tpu.dot_dimension_numbers<[1], [1], [0], [0], [0, 0, 1, 0], [], []>} : vector<80x8xbf16>, vector<80x8xbf16>, vector<80x80xf32> -> vector<80x80xf32>
    %cst_34 = arith.constant dense<0xFF800000> : vector<80xf32>
    %75 = vector.multi_reduction <maximumf>, %74, %cst_34 [1] : vector<80x80xf32> to vector<80xf32>
    %76 = vector.shape_cast %75 : vector<80xf32> to vector<80x1xf32>
    %77 = vector.broadcast %76 : vector<80x1xf32> to vector<80x80xf32>
    %78 = arith.subf %74, %77 : vector<80x80xf32>
    %79 = math.exp %78 : vector<80x80xf32>
    %cst_35 = arith.constant dense<0.000000e+00> : vector<80xf32>
    %80 = vector.multi_reduction <add>, %79, %cst_35 [1] : vector<80x80xf32> to vector<80xf32>
    %81 = vector.shape_cast %80 : vector<80xf32> to vector<80x1xf32>
    %82 = vector.broadcast %81 : vector<80x1xf32> to vector<80x80xf32>
    %83 = arith.divf %79, %82 : vector<80x80xf32>
    %84 = arith.truncf %83 : vector<80x80xf32> to vector<80x80xbf16>
    %85 = arith.truncf %71 : vector<80x8xf32> to vector<80x8xbf16>
    %cst_36 = arith.constant dense<0.000000e+00> : vector<80x8xf32>
    %86 = tpu.matmul %84, %85, %cst_36 {dimension_numbers = #tpu.dot_dimension_numbers<[1], [0], [0], [1], [0, 0, 1, 1], [], []>} : vector<80x80xbf16>, vector<80x8xbf16>, vector<80x8xf32> -> vector<80x8xf32>
    %87 = vector.extract_strided_slice %50 {offsets = [0, 16], sizes = [80, 8], strides = [1, 1]} : vector<80x96xf32> to vector<80x8xf32>
    %88 = vector.extract_strided_slice %50 {offsets = [0, 48], sizes = [80, 8], strides = [1, 1]} : vector<80x96xf32> to vector<80x8xf32>
    %89 = vector.extract_strided_slice %50 {offsets = [0, 80], sizes = [80, 8], strides = [1, 1]} : vector<80x96xf32> to vector<80x8xf32>
    %90 = arith.truncf %87 : vector<80x8xf32> to vector<80x8xbf16>
    %91 = arith.truncf %88 : vector<80x8xf32> to vector<80x8xbf16>
    %cst_37 = arith.constant dense<0.000000e+00> : vector<80x80xf32>
    %92 = tpu.matmul %90, %91, %cst_37 {dimension_numbers = #tpu.dot_dimension_numbers<[1], [1], [0], [0], [0, 0, 1, 0], [], []>} : vector<80x8xbf16>, vector<80x8xbf16>, vector<80x80xf32> -> vector<80x80xf32>
    %cst_38 = arith.constant dense<0xFF800000> : vector<80xf32>
    %93 = vector.multi_reduction <maximumf>, %92, %cst_38 [1] : vector<80x80xf32> to vector<80xf32>
    %94 = vector.shape_cast %93 : vector<80xf32> to vector<80x1xf32>
    %95 = vector.broadcast %94 : vector<80x1xf32> to vector<80x80xf32>
    %96 = arith.subf %92, %95 : vector<80x80xf32>
    %97 = math.exp %96 : vector<80x80xf32>
    %cst_39 = arith.constant dense<0.000000e+00> : vector<80xf32>
    %98 = vector.multi_reduction <add>, %97, %cst_39 [1] : vector<80x80xf32> to vector<80xf32>
    %99 = vector.shape_cast %98 : vector<80xf32> to vector<80x1xf32>
    %100 = vector.broadcast %99 : vector<80x1xf32> to vector<80x80xf32>
    %101 = arith.divf %97, %100 : vector<80x80xf32>
    %102 = arith.truncf %101 : vector<80x80xf32> to vector<80x80xbf16>
    %103 = arith.truncf %89 : vector<80x8xf32> to vector<80x8xbf16>
    %cst_40 = arith.constant dense<0.000000e+00> : vector<80x8xf32>
    %104 = tpu.matmul %102, %103, %cst_40 {dimension_numbers = #tpu.dot_dimension_numbers<[1], [0], [0], [1], [0, 0, 1, 1], [], []>} : vector<80x80xbf16>, vector<80x8xbf16>, vector<80x8xf32> -> vector<80x8xf32>
    %105 = vector.extract_strided_slice %50 {offsets = [0, 24], sizes = [80, 8], strides = [1, 1]} : vector<80x96xf32> to vector<80x8xf32>
    %106 = vector.extract_strided_slice %50 {offsets = [0, 56], sizes = [80, 8], strides = [1, 1]} : vector<80x96xf32> to vector<80x8xf32>
    %107 = vector.extract_strided_slice %50 {offsets = [0, 88], sizes = [80, 8], strides = [1, 1]} : vector<80x96xf32> to vector<80x8xf32>
    %108 = arith.truncf %105 : vector<80x8xf32> to vector<80x8xbf16>
    %109 = arith.truncf %106 : vector<80x8xf32> to vector<80x8xbf16>
    %cst_41 = arith.constant dense<0.000000e+00> : vector<80x80xf32>
    %110 = tpu.matmul %108, %109, %cst_41 {dimension_numbers = #tpu.dot_dimension_numbers<[1], [1], [0], [0], [0, 0, 1, 0], [], []>} : vector<80x8xbf16>, vector<80x8xbf16>, vector<80x80xf32> -> vector<80x80xf32>
    %cst_42 = arith.constant dense<0xFF800000> : vector<80xf32>
    %111 = vector.multi_reduction <maximumf>, %110, %cst_42 [1] : vector<80x80xf32> to vector<80xf32>
    %112 = vector.shape_cast %111 : vector<80xf32> to vector<80x1xf32>
    %113 = vector.broadcast %112 : vector<80x1xf32> to vector<80x80xf32>
    %114 = arith.subf %110, %113 : vector<80x80xf32>
    %115 = math.exp %114 : vector<80x80xf32>
    %cst_43 = arith.constant dense<0.000000e+00> : vector<80xf32>
    %116 = vector.multi_reduction <add>, %115, %cst_43 [1] : vector<80x80xf32> to vector<80xf32>
    %117 = vector.shape_cast %116 : vector<80xf32> to vector<80x1xf32>
    %118 = vector.broadcast %117 : vector<80x1xf32> to vector<80x80xf32>
    %119 = arith.divf %115, %118 : vector<80x80xf32>
    %120 = arith.truncf %119 : vector<80x80xf32> to vector<80x80xbf16>
    %121 = arith.truncf %107 : vector<80x8xf32> to vector<80x8xbf16>
    %cst_44 = arith.constant dense<0.000000e+00> : vector<80x8xf32>
    %122 = tpu.matmul %120, %121, %cst_44 {dimension_numbers = #tpu.dot_dimension_numbers<[1], [0], [0], [1], [0, 0, 1, 1], [], []>} : vector<80x80xbf16>, vector<80x8xbf16>, vector<80x8xf32> -> vector<80x8xf32>
    %123 = tpu.concatenate %68, %86, %104, %122 in 1 : vector<80x8xf32>, vector<80x8xf32>, vector<80x8xf32>, vector<80x8xf32> -> vector<80x32xf32>
    %c0_45 = arith.constant 0 : index
    %c0_46 = arith.constant 0 : index
    %124 = vector.load %arg12[%c0_45, %c0_46] : memref<32x32xf32, #tpu.memory_space<vmem>>, vector<32x32xf32>
    %125 = arith.truncf %123 : vector<80x32xf32> to vector<80x32xbf16>
    %126 = arith.truncf %124 : vector<32x32xf32> to vector<32x32xbf16>
    %cst_47 = arith.constant dense<0.000000e+00> : vector<80x32xf32>
    %127 = tpu.matmul %125, %126, %cst_47 {dimension_numbers = #tpu.dot_dimension_numbers<[1], [0], [0], [1], [0, 0, 1, 1], [], []>} : vector<80x32xbf16>, vector<32x32xbf16>, vector<80x32xf32> -> vector<80x32xf32>
    %c0_48 = arith.constant 0 : index
    %c0_49 = arith.constant 0 : index
    %128 = vector.load %arg13[%c0_48, %c0_49] : memref<1x32xf32, #tpu.memory_space<vmem>>, vector<1x32xf32>
    %129 = vector.broadcast %128 : vector<1x32xf32> to vector<80x32xf32>
    %130 = arith.addf %127, %129 : vector<80x32xf32>
    %131 = arith.addf %19, %130 : vector<80x32xf32>
    %c0_50 = arith.constant 0 : index
    %c0_51 = arith.constant 0 : index
    %132 = vector.load %arg14[%c0_50, %c0_51] : memref<1x32xf32, #tpu.memory_space<vmem>>, vector<1x32xf32>
    %c0_52 = arith.constant 0 : index
    %c0_53 = arith.constant 0 : index
    %133 = vector.load %arg15[%c0_52, %c0_53] : memref<1x32xf32, #tpu.memory_space<vmem>>, vector<1x32xf32>
    %cst_54 = arith.constant dense<0.000000e+00> : vector<80xf32>
    %134 = vector.multi_reduction <add>, %131, %cst_54 [1] : vector<80x32xf32> to vector<80xf32>
    %135 = vector.shape_cast %134 : vector<80xf32> to vector<80x1xf32>
    %cst_55 = arith.constant 3.200000e+01 : f32
    %136 = vector.broadcast %cst_55 : f32 to vector<80x1xf32>
    %137 = arith.divf %135, %136 : vector<80x1xf32>
    %138 = vector.broadcast %137 : vector<80x1xf32> to vector<80x32xf32>
    %139 = arith.subf %131, %138 : vector<80x32xf32>
    %140 = arith.mulf %139, %139 : vector<80x32xf32>
    %cst_56 = arith.constant dense<0.000000e+00> : vector<80xf32>
    %141 = vector.multi_reduction <add>, %140, %cst_56 [1] : vector<80x32xf32> to vector<80xf32>
    %142 = vector.shape_cast %141 : vector<80xf32> to vector<80x1xf32>
    %cst_57 = arith.constant 3.200000e+01 : f32
    %143 = vector.broadcast %cst_57 : f32 to vector<80x1xf32>
    %144 = arith.divf %142, %143 : vector<80x1xf32>
    %145 = vector.broadcast %137 : vector<80x1xf32> to vector<80x32xf32>
    %146 = arith.subf %131, %145 : vector<80x32xf32>
    %cst_58 = arith.constant 9.99999974E-6 : f32
    %147 = vector.broadcast %cst_58 : f32 to vector<80x1xf32>
    %148 = arith.addf %144, %147 : vector<80x1xf32>
    %149 = math.rsqrt %148 : vector<80x1xf32>
    %150 = vector.broadcast %149 : vector<80x1xf32> to vector<80x32xf32>
    %151 = arith.mulf %146, %150 : vector<80x32xf32>
    %152 = vector.broadcast %132 : vector<1x32xf32> to vector<80x32xf32>
    %153 = arith.mulf %151, %152 : vector<80x32xf32>
    %154 = vector.broadcast %133 : vector<1x32xf32> to vector<80x32xf32>
    %155 = arith.addf %153, %154 : vector<80x32xf32>
    %c0_59 = arith.constant 0 : index
    %c0_60 = arith.constant 0 : index
    %156 = vector.load %arg16[%c0_59, %c0_60] : memref<32x32xf32, #tpu.memory_space<vmem>>, vector<32x32xf32>
    %157 = arith.truncf %155 : vector<80x32xf32> to vector<80x32xbf16>
    %158 = arith.truncf %156 : vector<32x32xf32> to vector<32x32xbf16>
    %cst_61 = arith.constant dense<0.000000e+00> : vector<80x32xf32>
    %159 = tpu.matmul %157, %158, %cst_61 {dimension_numbers = #tpu.dot_dimension_numbers<[1], [0], [0], [1], [0, 0, 1, 1], [], []>} : vector<80x32xbf16>, vector<32x32xbf16>, vector<80x32xf32> -> vector<80x32xf32>
    %c0_62 = arith.constant 0 : index
    %c0_63 = arith.constant 0 : index
    %160 = vector.load %arg17[%c0_62, %c0_63] : memref<1x32xf32, #tpu.memory_space<vmem>>, vector<1x32xf32>
    %161 = vector.broadcast %160 : vector<1x32xf32> to vector<80x32xf32>
    %162 = arith.addf %159, %161 : vector<80x32xf32>
    %cst_64 = arith.constant 5.000000e-01 : f32
    %163 = vector.broadcast %cst_64 : f32 to vector<80x32xf32>
    %164 = arith.mulf %163, %162 : vector<80x32xf32>
    %cst_65 = arith.constant 4.471500e-02 : f32
    %165 = vector.broadcast %cst_65 : f32 to vector<80x32xf32>
    %166 = arith.mulf %165, %162 : vector<80x32xf32>
    %167 = arith.mulf %166, %162 : vector<80x32xf32>
    %168 = arith.mulf %167, %162 : vector<80x32xf32>
    %169 = arith.addf %162, %168 : vector<80x32xf32>
    %cst_66 = arith.constant 0.797884583 : f32
    %170 = vector.broadcast %cst_66 : f32 to vector<80x32xf32>
    %171 = arith.mulf %170, %169 : vector<80x32xf32>
    %172 = math.tanh %171 : vector<80x32xf32>
    %cst_67 = arith.constant 1.000000e+00 : f32
    %173 = vector.broadcast %cst_67 : f32 to vector<80x32xf32>
    %174 = arith.addf %173, %172 : vector<80x32xf32>
    %175 = arith.mulf %164, %174 : vector<80x32xf32>
    %c0_68 = arith.constant 0 : index
    %c0_69 = arith.constant 0 : index
    %176 = vector.load %arg18[%c0_68, %c0_69] : memref<32x32xf32, #tpu.memory_space<vmem>>, vector<32x32xf32>
    %177 = arith.truncf %175 : vector<80x32xf32> to vector<80x32xbf16>
    %178 = arith.truncf %176 : vector<32x32xf32> to vector<32x32xbf16>
    %cst_70 = arith.constant dense<0.000000e+00> : vector<80x32xf32>
    %179 = tpu.matmul %177, %178, %cst_70 {dimension_numbers = #tpu.dot_dimension_numbers<[1], [0], [0], [1], [0, 0, 1, 1], [], []>} : vector<80x32xbf16>, vector<32x32xbf16>, vector<80x32xf32> -> vector<80x32xf32>
    %c0_71 = arith.constant 0 : index
    %c0_72 = arith.constant 0 : index
    %180 = vector.load %arg19[%c0_71, %c0_72] : memref<1x32xf32, #tpu.memory_space<vmem>>, vector<1x32xf32>
    %181 = vector.broadcast %180 : vector<1x32xf32> to vector<80x32xf32>
    %182 = arith.addf %179, %181 : vector<80x32xf32>
    %183 = arith.addf %131, %182 : vector<80x32xf32>
    %184 = vector.extract_strided_slice %183 {offsets = [64, 0], sizes = [16, 32], strides = [1, 1]} : vector<80x32xf32> to vector<16x32xf32>
    %c0_73 = arith.constant 0 : index
    %c0_74 = arith.constant 0 : index
    %c0_75 = arith.constant 0 : index
    %185 = vector.load %arg20[%c0_73, %c0_74, %c0_75] : memref<1x16x32xf32, #tpu.memory_space<vmem>>, vector<1x16x32xf32>
    %186 = vector.shape_cast %185 : vector<1x16x32xf32> to vector<16x32xf32>
    %187 = vector.shape_cast %184 : vector<16x32xf32> to vector<1x16x32xf32>
    tpu.vector_store %arg20[%c0_73, %c0_74, %c0_75], %187 {strides = array<i32>} : memref<1x16x32xf32, #tpu.memory_space<vmem>>, vector<1x16x32xf32>,
    return
  }
  func.func @transform_0(%arg0: i32) -> (i32, i32, i32) {
    %c0_i32 = arith.constant 0 : i32
    %c0_i32_0 = arith.constant 0 : i32
    %c0_i32_1 = arith.constant 0 : i32
    return %arg0, %c0_i32, %c0_i32_0 : i32, i32, i32
  }
  func.func @transform_1(%arg0: i32) -> (i32, i32) {
    %c0_i32 = arith.constant 0 : i32
    %c0_i32_0 = arith.constant 0 : i32
    %c0_i32_1 = arith.constant 0 : i32
    return %c0_i32, %c0_i32_0 : i32, i32
  }
  func.func @transform_2(%arg0: i32) -> (i32, i32) {
    %c0_i32 = arith.constant 0 : i32
    %c0_i32_0 = arith.constant 0 : i32
    %c0_i32_1 = arith.constant 0 : i32
    return %c0_i32, %c0_i32_0 : i32, i32
  }
  func.func @transform_3(%arg0: i32) -> (i32, i32) {
    %c0_i32 = arith.constant 0 : i32
    %c0_i32_0 = arith.constant 0 : i32
    %c0_i32_1 = arith.constant 0 : i32
    return %c0_i32, %c0_i32_0 : i32, i32
  }
  func.func @transform_4(%arg0: i32) -> (i32, i32) {
    %c0_i32 = arith.constant 0 : i32
    %c0_i32_0 = arith.constant 0 : i32
    %c0_i32_1 = arith.constant 0 : i32
    return %c0_i32, %c0_i32_0 : i32, i32
  }
  func.func @transform_5(%arg0: i32) -> (i32, i32) {
    %c0_i32 = arith.constant 0 : i32
    %c0_i32_0 = arith.constant 0 : i32
    %c0_i32_1 = arith.constant 0 : i32
    return %c0_i32, %c0_i32_0 : i32, i32
  }
  func.func @transform_6(%arg0: i32) -> (i32, i32) {
    %c0_i32 = arith.constant 0 : i32
    %c0_i32_0 = arith.constant 0 : i32
    %c0_i32_1 = arith.constant 0 : i32
    return %c0_i32, %c0_i32_0 : i32, i32
  }
  func.func @transform_7(%arg0: i32) -> (i32, i32) {
    %c0_i32 = arith.constant 0 : i32
    %c0_i32_0 = arith.constant 0 : i32
    %c0_i32_1 = arith.constant 0 : i32
    return %c0_i32, %c0_i32_0 : i32, i32
  }
  func.func @transform_8(%arg0: i32) -> (i32, i32) {
    %c0_i32 = arith.constant 0 : i32
    %c0_i32_0 = arith.constant 0 : i32
    %c0_i32_1 = arith.constant 0 : i32
    return %c0_i32, %c0_i32_0 : i32, i32
  }
  func.func @transform_9(%arg0: i32) -> (i32, i32) {
    %c0_i32 = arith.constant 0 : i32
    %c0_i32_0 = arith.constant 0 : i32
    %c0_i32_1 = arith.constant 0 : i32
    return %c0_i32, %c0_i32_0 : i32, i32
  }
  func.func @transform_10(%arg0: i32) -> (i32, i32) {
    %c0_i32 = arith.constant 0 : i32
    %c0_i32_0 = arith.constant 0 : i32
    %c0_i32_1 = arith.constant 0 : i32
    return %c0_i32, %c0_i32_0 : i32, i32
  }
  func.func @transform_11(%arg0: i32) -> (i32, i32) {
    %c0_i32 = arith.constant 0 : i32
    %c0_i32_0 = arith.constant 0 : i32
    %c0_i32_1 = arith.constant 0 : i32
    return %c0_i32, %c0_i32_0 : i32, i32
  }
  func.func @transform_12(%arg0: i32) -> (i32, i32) {
    %c0_i32 = arith.constant 0 : i32
    %c0_i32_0 = arith.constant 0 : i32
    %c0_i32_1 = arith.constant 0 : i32
    return %c0_i32, %c0_i32_0 : i32, i32
  }
  func.func @transform_13(%arg0: i32) -> (i32, i32) {
    %c0_i32 = arith.constant 0 : i32
    %c0_i32_0 = arith.constant 0 : i32
    %c0_i32_1 = arith.constant 0 : i32
    return %c0_i32, %c0_i32_0 : i32, i32
  }
  func.func @transform_14(%arg0: i32) -> (i32, i32) {
    %c0_i32 = arith.constant 0 : i32
    %c0_i32_0 = arith.constant 0 : i32
    %c0_i32_1 = arith.constant 0 : i32
    return %c0_i32, %c0_i32_0 : i32, i32
  }
  func.func @transform_15(%arg0: i32) -> (i32, i32) {
    %c0_i32 = arith.constant 0 : i32
    %c0_i32_0 = arith.constant 0 : i32
    %c0_i32_1 = arith.constant 0 : i32
    return %c0_i32, %c0_i32_0 : i32, i32
  }
  func.func @transform_16(%arg0: i32) -> (i32, i32) {
    %c0_i32 = arith.constant 0 : i32
    %c0_i32_0 = arith.constant 0 : i32
    %c0_i32_1 = arith.constant 0 : i32
    return %c0_i32, %c0_i32_0 : i32, i32
  }
  func.func @transform_17(%arg0: i32) -> (i32, i32) {
    %c0_i32 = arith.constant 0 : i32
    %c0_i32_0 = arith.constant 0 : i32
    %c0_i32_1 = arith.constant 0 : i32
    return %c0_i32, %c0_i32_0 : i32, i32
  }
  func.func @transform_18(%arg0: i32) -> (i32, i32) {
    %c0_i32 = arith.constant 0 : i32
    %c0_i32_0 = arith.constant 0 : i32
    %c0_i32_1 = arith.constant 0 : i32
    return %c0_i32, %c0_i32_0 : i32, i32
  }
  func.func @transform_19(%arg0: i32) -> (i32, i32, i32) {
    %c0_i32 = arith.constant 0 : i32
    %c0_i32_0 = arith.constant 0 : i32
    %c0_i32_1 = arith.constant 0 : i32
    return %arg0, %c0_i32, %c0_i32_0 : i32, i32, i32
  }
}

module attributes {stable_mosaic.version = 11 : i64} {
  func.func @_decoder_kernel(%arg0: i32, %arg1: memref<256x256xf32, #tpu.memory_space<vmem>>, %arg2: memref<1x32x256xf32, #tpu.memory_space<vmem>>, %arg3: memref<1x32x1xf32, #tpu.memory_space<vmem>>, %arg4: memref<1x32x32xf32, #tpu.memory_space<vmem>>, %arg5: memref<1x32x1xf32, #tpu.memory_space<vmem>>, %arg6: memref<16x32xf32, #tpu.memory_space<vmem>>, %arg7: memref<16x1xf32, #tpu.memory_space<vmem>>, %arg8: memref<1x16x256xf32, #tpu.memory_space<vmem>>, %arg9: memref<1x16x256xf32, #tpu.memory_space<vmem>>, %arg10: memref<4x16xf32, #tpu.memory_space<vmem>>, %arg11: memref<4x16xf32, #tpu.memory_space<vmem>>, %arg12: memref<4x1xf32, #tpu.memory_space<vmem>>, %arg13: memref<16x4xf32, #tpu.memory_space<vmem>>, %arg14: memref<16x1xf32, #tpu.memory_space<vmem>>, %arg15: memref<1x16x1xf32, #tpu.memory_space<vmem>>, %arg16: memref<1x16x1xf32, #tpu.memory_space<vmem>>, %arg17: memref<16x1xf32, #tpu.memory_space<vmem>>, %arg18: memref<1x16x256xf32, #tpu.memory_space<vmem>>) attributes {dimension_semantics = [#tpu.dimension_semantics<parallel>], iteration_bounds = array<i64: 2>, scalar_prefetch = 0 : i64, scratch_operands = 0 : i64, tpu.core_type = #tpu.core_type<tc>, window_params = [{pipeline_mode = #tpu.pipeline_mode<synchronous>, transform_indices = @transform_0, window_bounds = array<i64: 256, 256>}, {transform_indices = @transform_1, window_bounds = array<i64: 1, 32, 256>}, {transform_indices = @transform_2, window_bounds = array<i64: 1, 32, 1>}, {transform_indices = @transform_3, window_bounds = array<i64: 1, 32, 32>}, {transform_indices = @transform_4, window_bounds = array<i64: 1, 32, 1>}, {pipeline_mode = #tpu.pipeline_mode<synchronous>, transform_indices = @transform_5, window_bounds = array<i64: 16, 32>}, {pipeline_mode = #tpu.pipeline_mode<synchronous>, transform_indices = @transform_6, window_bounds = array<i64: 16, 1>}, {transform_indices = @transform_7, window_bounds = array<i64: 1, 16, 256>}, {transform_indices = @transform_8, window_bounds = array<i64: 1, 16, 256>}, {pipeline_mode = #tpu.pipeline_mode<synchronous>, transform_indices = @transform_9, window_bounds = array<i64: 4, 16>}, {pipeline_mode = #tpu.pipeline_mode<synchronous>, transform_indices = @transform_10, window_bounds = array<i64: 4, 16>}, {pipeline_mode = #tpu.pipeline_mode<synchronous>, transform_indices = @transform_11, window_bounds = array<i64: 4, 1>}, {pipeline_mode = #tpu.pipeline_mode<synchronous>, transform_indices = @transform_12, window_bounds = array<i64: 16, 4>}, {pipeline_mode = #tpu.pipeline_mode<synchronous>, transform_indices = @transform_13, window_bounds = array<i64: 16, 1>}, {transform_indices = @transform_14, window_bounds = array<i64: 1, 16, 1>}, {transform_indices = @transform_15, window_bounds = array<i64: 1, 16, 1>}, {pipeline_mode = #tpu.pipeline_mode<synchronous>, transform_indices = @transform_16, window_bounds = array<i64: 16, 1>}, {transform_indices = @transform_17, window_bounds = array<i64: 1, 16, 256>}]} {
    %c0 = arith.constant 0 : index
    %c0_0 = arith.constant 0 : index
    %0 = vector.load %arg1[%c0, %c0_0] : memref<256x256xf32, #tpu.memory_space<vmem>>, vector<256x256xf32>
    %c0_1 = arith.constant 0 : index
    %c0_2 = arith.constant 0 : index
    %c0_3 = arith.constant 0 : index
    %1 = vector.load %arg2[%c0_1, %c0_2, %c0_3] : memref<1x32x256xf32, #tpu.memory_space<vmem>>, vector<1x32x256xf32>
    %2 = vector.shape_cast %1 : vector<1x32x256xf32> to vector<32x256xf32>
    %3 = arith.truncf %2 : vector<32x256xf32> to vector<32x256xbf16>
    %4 = arith.truncf %0 : vector<256x256xf32> to vector<256x256xbf16>
    %cst = arith.constant dense<0.000000e+00> : vector<32x256xf32>
    %5 = tpu.matmul %3, %4, %cst {dimension_numbers = #tpu.dot_dimension_numbers<[1], [0], [0], [1], [0, 0, 1, 1], [], []>} : vector<32x256xbf16>, vector<256x256xbf16>, vector<32x256xf32> -> vector<32x256xf32>
    %c0_4 = arith.constant 0 : index
    %c0_5 = arith.constant 0 : index
    %c0_6 = arith.constant 0 : index
    %6 = vector.load %arg3[%c0_4, %c0_5, %c0_6] : memref<1x32x1xf32, #tpu.memory_space<vmem>>, vector<1x32x1xf32>
    %7 = vector.shape_cast %6 : vector<1x32x1xf32> to vector<32x1xf32>
    %8 = vector.broadcast %7 : vector<32x1xf32> to vector<32x256xf32>
    %9 = arith.addf %5, %8 : vector<32x256xf32>
    %cst_7 = arith.constant 0.000000e+00 : f32
    %10 = vector.broadcast %cst_7 : f32 to vector<32x256xf32>
    %11 = arith.maximumf %9, %10 : vector<32x256xf32>
    %c0_8 = arith.constant 0 : index
    %c0_9 = arith.constant 0 : index
    %c0_10 = arith.constant 0 : index
    %12 = vector.load %arg4[%c0_8, %c0_9, %c0_10] : memref<1x32x32xf32, #tpu.memory_space<vmem>>, vector<1x32x32xf32>
    %13 = vector.shape_cast %12 : vector<1x32x32xf32> to vector<32x32xf32>
    %14 = arith.truncf %13 : vector<32x32xf32> to vector<32x32xbf16>
    %15 = arith.truncf %11 : vector<32x256xf32> to vector<32x256xbf16>
    %cst_11 = arith.constant dense<0.000000e+00> : vector<32x256xf32>
    %16 = tpu.matmul %14, %15, %cst_11 {dimension_numbers = #tpu.dot_dimension_numbers<[1], [0], [0], [1], [0, 0, 1, 1], [], []>} : vector<32x32xbf16>, vector<32x256xbf16>, vector<32x256xf32> -> vector<32x256xf32>
    %c0_12 = arith.constant 0 : index
    %c0_13 = arith.constant 0 : index
    %c0_14 = arith.constant 0 : index
    %17 = vector.load %arg5[%c0_12, %c0_13, %c0_14] : memref<1x32x1xf32, #tpu.memory_space<vmem>>, vector<1x32x1xf32>
    %18 = vector.shape_cast %17 : vector<1x32x1xf32> to vector<32x1xf32>
    %19 = vector.broadcast %18 : vector<32x1xf32> to vector<32x256xf32>
    %20 = arith.addf %16, %19 : vector<32x256xf32>
    %c0_15 = arith.constant 0 : index
    %c0_16 = arith.constant 0 : index
    %21 = vector.load %arg6[%c0_15, %c0_16] : memref<16x32xf32, #tpu.memory_space<vmem>>, vector<16x32xf32>
    %22 = arith.truncf %21 : vector<16x32xf32> to vector<16x32xbf16>
    %23 = arith.truncf %20 : vector<32x256xf32> to vector<32x256xbf16>
    %cst_17 = arith.constant dense<0.000000e+00> : vector<16x256xf32>
    %24 = tpu.matmul %22, %23, %cst_17 {dimension_numbers = #tpu.dot_dimension_numbers<[1], [0], [0], [1], [0, 0, 1, 1], [], []>} : vector<16x32xbf16>, vector<32x256xbf16>, vector<16x256xf32> -> vector<16x256xf32>
    %c0_18 = arith.constant 0 : index
    %c0_19 = arith.constant 0 : index
    %25 = vector.load %arg7[%c0_18, %c0_19] : memref<16x1xf32, #tpu.memory_space<vmem>>, vector<16x1xf32>
    %26 = vector.broadcast %25 : vector<16x1xf32> to vector<16x256xf32>
    %27 = arith.addf %24, %26 : vector<16x256xf32>
    %c0_20 = arith.constant 0 : index
    %c0_21 = arith.constant 0 : index
    %c0_22 = arith.constant 0 : index
    %28 = vector.load %arg8[%c0_20, %c0_21, %c0_22] : memref<1x16x256xf32, #tpu.memory_space<vmem>>, vector<1x16x256xf32>
    %29 = vector.shape_cast %28 : vector<1x16x256xf32> to vector<16x256xf32>
    %30 = arith.addf %27, %29 : vector<16x256xf32>
    %c0_23 = arith.constant 0 : index
    %c0_24 = arith.constant 0 : index
    %31 = vector.load %arg10[%c0_23, %c0_24] : memref<4x16xf32, #tpu.memory_space<vmem>>, vector<4x16xf32>
    %32 = arith.truncf %31 : vector<4x16xf32> to vector<4x16xbf16>
    %33 = arith.truncf %30 : vector<16x256xf32> to vector<16x256xbf16>
    %cst_25 = arith.constant dense<0.000000e+00> : vector<4x256xf32>
    %34 = tpu.matmul %32, %33, %cst_25 {dimension_numbers = #tpu.dot_dimension_numbers<[1], [0], [0], [1], [0, 0, 1, 1], [], []>} : vector<4x16xbf16>, vector<16x256xbf16>, vector<4x256xf32> -> vector<4x256xf32>
    %c0_26 = arith.constant 0 : index
    %c0_27 = arith.constant 0 : index
    %35 = vector.load %arg11[%c0_26, %c0_27] : memref<4x16xf32, #tpu.memory_space<vmem>>, vector<4x16xf32>
    %c0_28 = arith.constant 0 : index
    %c0_29 = arith.constant 0 : index
    %c0_30 = arith.constant 0 : index
    %36 = vector.load %arg9[%c0_28, %c0_29, %c0_30] : memref<1x16x256xf32, #tpu.memory_space<vmem>>, vector<1x16x256xf32>
    %37 = vector.shape_cast %36 : vector<1x16x256xf32> to vector<16x256xf32>
    %38 = arith.truncf %35 : vector<4x16xf32> to vector<4x16xbf16>
    %39 = arith.truncf %37 : vector<16x256xf32> to vector<16x256xbf16>
    %cst_31 = arith.constant dense<0.000000e+00> : vector<4x256xf32>
    %40 = tpu.matmul %38, %39, %cst_31 {dimension_numbers = #tpu.dot_dimension_numbers<[1], [0], [0], [1], [0, 0, 1, 1], [], []>} : vector<4x16xbf16>, vector<16x256xbf16>, vector<4x256xf32> -> vector<4x256xf32>
    %41 = arith.addf %34, %40 : vector<4x256xf32>
    %c0_32 = arith.constant 0 : index
    %c0_33 = arith.constant 0 : index
    %42 = vector.load %arg12[%c0_32, %c0_33] : memref<4x1xf32, #tpu.memory_space<vmem>>, vector<4x1xf32>
    %43 = vector.broadcast %42 : vector<4x1xf32> to vector<4x256xf32>
    %44 = arith.addf %41, %43 : vector<4x256xf32>
    %cst_34 = arith.constant 5.000000e-01 : f32
    %45 = vector.broadcast %cst_34 : f32 to vector<4x256xf32>
    %46 = arith.mulf %45, %44 : vector<4x256xf32>
    %cst_35 = arith.constant 4.471500e-02 : f32
    %47 = vector.broadcast %cst_35 : f32 to vector<4x256xf32>
    %48 = arith.mulf %47, %44 : vector<4x256xf32>
    %49 = arith.mulf %48, %44 : vector<4x256xf32>
    %50 = arith.mulf %49, %44 : vector<4x256xf32>
    %51 = arith.addf %44, %50 : vector<4x256xf32>
    %cst_36 = arith.constant 0.797884583 : f32
    %52 = vector.broadcast %cst_36 : f32 to vector<4x256xf32>
    %53 = arith.mulf %52, %51 : vector<4x256xf32>
    %54 = math.tanh %53 : vector<4x256xf32>
    %cst_37 = arith.constant 1.000000e+00 : f32
    %55 = vector.broadcast %cst_37 : f32 to vector<4x256xf32>
    %56 = arith.addf %55, %54 : vector<4x256xf32>
    %57 = arith.mulf %46, %56 : vector<4x256xf32>
    %c0_38 = arith.constant 0 : index
    %c0_39 = arith.constant 0 : index
    %58 = vector.load %arg13[%c0_38, %c0_39] : memref<16x4xf32, #tpu.memory_space<vmem>>, vector<16x4xf32>
    %59 = arith.truncf %58 : vector<16x4xf32> to vector<16x4xbf16>
    %60 = arith.truncf %57 : vector<4x256xf32> to vector<4x256xbf16>
    %cst_40 = arith.constant dense<0.000000e+00> : vector<16x256xf32>
    %61 = tpu.matmul %59, %60, %cst_40 {dimension_numbers = #tpu.dot_dimension_numbers<[1], [0], [0], [1], [0, 0, 1, 1], [], []>} : vector<16x4xbf16>, vector<4x256xbf16>, vector<16x256xf32> -> vector<16x256xf32>
    %c0_41 = arith.constant 0 : index
    %c0_42 = arith.constant 0 : index
    %62 = vector.load %arg14[%c0_41, %c0_42] : memref<16x1xf32, #tpu.memory_space<vmem>>, vector<16x1xf32>
    %63 = vector.broadcast %62 : vector<16x1xf32> to vector<16x256xf32>
    %64 = arith.addf %61, %63 : vector<16x256xf32>
    %c0_43 = arith.constant 0 : index
    %c0_44 = arith.constant 0 : index
    %c0_45 = arith.constant 0 : index
    %65 = vector.load %arg15[%c0_43, %c0_44, %c0_45] : memref<1x16x1xf32, #tpu.memory_space<vmem>>, vector<1x16x1xf32>
    %66 = vector.shape_cast %65 : vector<1x16x1xf32> to vector<16x1xf32>
    %cst_46 = arith.constant 1.000000e+00 : f32
    %67 = vector.broadcast %cst_46 : f32 to vector<16x1xf32>
    %68 = arith.addf %67, %66 : vector<16x1xf32>
    %69 = vector.broadcast %68 : vector<16x1xf32> to vector<16x256xf32>
    %70 = arith.mulf %64, %69 : vector<16x256xf32>
    %c0_47 = arith.constant 0 : index
    %c0_48 = arith.constant 0 : index
    %c0_49 = arith.constant 0 : index
    %71 = vector.load %arg16[%c0_47, %c0_48, %c0_49] : memref<1x16x1xf32, #tpu.memory_space<vmem>>, vector<1x16x1xf32>
    %72 = vector.shape_cast %71 : vector<1x16x1xf32> to vector<16x1xf32>
    %73 = vector.broadcast %72 : vector<16x1xf32> to vector<16x256xf32>
    %74 = arith.addf %70, %73 : vector<16x256xf32>
    %cst_50 = arith.constant dense<0.000000e+00> : vector<256xf32>
    %75 = vector.multi_reduction <add>, %74, %cst_50 [0] : vector<16x256xf32> to vector<256xf32>
    %76 = vector.shape_cast %75 : vector<256xf32> to vector<1x256xf32>
    %cst_51 = arith.constant 1.600000e+01 : f32
    %77 = vector.broadcast %cst_51 : f32 to vector<1x256xf32>
    %78 = arith.divf %76, %77 : vector<1x256xf32>
    %79 = vector.broadcast %78 : vector<1x256xf32> to vector<16x256xf32>
    %80 = arith.subf %74, %79 : vector<16x256xf32>
    %81 = arith.mulf %80, %80 : vector<16x256xf32>
    %cst_52 = arith.constant dense<0.000000e+00> : vector<256xf32>
    %82 = vector.multi_reduction <add>, %81, %cst_52 [0] : vector<16x256xf32> to vector<256xf32>
    %83 = vector.shape_cast %82 : vector<256xf32> to vector<1x256xf32>
    %cst_53 = arith.constant 1.600000e+01 : f32
    %84 = vector.broadcast %cst_53 : f32 to vector<1x256xf32>
    %85 = arith.divf %83, %84 : vector<1x256xf32>
    %86 = vector.broadcast %78 : vector<1x256xf32> to vector<16x256xf32>
    %87 = arith.subf %74, %86 : vector<16x256xf32>
    %cst_54 = arith.constant 9.99999997E-7 : f32
    %88 = vector.broadcast %cst_54 : f32 to vector<1x256xf32>
    %89 = arith.addf %85, %88 : vector<1x256xf32>
    %90 = math.rsqrt %89 : vector<1x256xf32>
    %91 = vector.broadcast %90 : vector<1x256xf32> to vector<16x256xf32>
    %92 = arith.mulf %87, %91 : vector<16x256xf32>
    %c0_55 = arith.constant 0 : index
    %c0_56 = arith.constant 0 : index
    %93 = vector.load %arg17[%c0_55, %c0_56] : memref<16x1xf32, #tpu.memory_space<vmem>>, vector<16x1xf32>
    %cst_57 = arith.constant dense<0.000000e+00> : vector<256xf32>
    %94 = vector.multi_reduction <add>, %92, %cst_57 [0] : vector<16x256xf32> to vector<256xf32>
    %95 = vector.shape_cast %94 : vector<256xf32> to vector<1x256xf32>
    %cst_58 = arith.constant 1.600000e+01 : f32
    %96 = vector.broadcast %cst_58 : f32 to vector<1x256xf32>
    %97 = arith.divf %95, %96 : vector<1x256xf32>
    %98 = vector.broadcast %97 : vector<1x256xf32> to vector<16x256xf32>
    %99 = arith.subf %92, %98 : vector<16x256xf32>
    %100 = arith.mulf %99, %99 : vector<16x256xf32>
    %cst_59 = arith.constant dense<0.000000e+00> : vector<256xf32>
    %101 = vector.multi_reduction <add>, %100, %cst_59 [0] : vector<16x256xf32> to vector<256xf32>
    %102 = vector.shape_cast %101 : vector<256xf32> to vector<1x256xf32>
    %cst_60 = arith.constant 1.600000e+01 : f32
    %103 = vector.broadcast %cst_60 : f32 to vector<1x256xf32>
    %104 = arith.divf %102, %103 : vector<1x256xf32>
    %105 = vector.broadcast %97 : vector<1x256xf32> to vector<16x256xf32>
    %106 = arith.subf %92, %105 : vector<16x256xf32>
    %cst_61 = arith.constant 9.99999997E-7 : f32
    %107 = vector.broadcast %cst_61 : f32 to vector<1x256xf32>
    %108 = arith.addf %104, %107 : vector<1x256xf32>
    %109 = math.rsqrt %108 : vector<1x256xf32>
    %110 = vector.broadcast %109 : vector<1x256xf32> to vector<16x256xf32>
    %111 = arith.mulf %106, %110 : vector<16x256xf32>
    %112 = vector.broadcast %93 : vector<16x1xf32> to vector<16x256xf32>
    %113 = arith.mulf %112, %111 : vector<16x256xf32>
    %114 = arith.addf %92, %113 : vector<16x256xf32>
    %c0_62 = arith.constant 0 : index
    %c0_63 = arith.constant 0 : index
    %c0_64 = arith.constant 0 : index
    %115 = vector.load %arg18[%c0_62, %c0_63, %c0_64] : memref<1x16x256xf32, #tpu.memory_space<vmem>>, vector<1x16x256xf32>
    %116 = vector.shape_cast %115 : vector<1x16x256xf32> to vector<16x256xf32>
    %117 = vector.shape_cast %114 : vector<16x256xf32> to vector<1x16x256xf32>
    tpu.vector_store %arg18[%c0_62, %c0_63, %c0_64], %117 {strides = array<i32>} : memref<1x16x256xf32, #tpu.memory_space<vmem>>, vector<1x16x256xf32>,
    return
  }
  func.func @transform_0(%arg0: i32) -> (i32, i32) {
    %c0_i32 = arith.constant 0 : i32
    %c0_i32_0 = arith.constant 0 : i32
    %c0_i32_1 = arith.constant 0 : i32
    return %c0_i32, %c0_i32_0 : i32, i32
  }
  func.func @transform_1(%arg0: i32) -> (i32, i32, i32) {
    %c0_i32 = arith.constant 0 : i32
    %c0_i32_0 = arith.constant 0 : i32
    %c0_i32_1 = arith.constant 0 : i32
    return %arg0, %c0_i32, %c0_i32_0 : i32, i32, i32
  }
  func.func @transform_2(%arg0: i32) -> (i32, i32, i32) {
    %c0_i32 = arith.constant 0 : i32
    %c0_i32_0 = arith.constant 0 : i32
    %c0_i32_1 = arith.constant 0 : i32
    return %arg0, %c0_i32, %c0_i32_0 : i32, i32, i32
  }
  func.func @transform_3(%arg0: i32) -> (i32, i32, i32) {
    %c0_i32 = arith.constant 0 : i32
    %c0_i32_0 = arith.constant 0 : i32
    %c0_i32_1 = arith.constant 0 : i32
    return %arg0, %c0_i32, %c0_i32_0 : i32, i32, i32
  }
  func.func @transform_4(%arg0: i32) -> (i32, i32, i32) {
    %c0_i32 = arith.constant 0 : i32
    %c0_i32_0 = arith.constant 0 : i32
    %c0_i32_1 = arith.constant 0 : i32
    return %arg0, %c0_i32, %c0_i32_0 : i32, i32, i32
  }
  func.func @transform_5(%arg0: i32) -> (i32, i32) {
    %c0_i32 = arith.constant 0 : i32
    %c0_i32_0 = arith.constant 0 : i32
    %c0_i32_1 = arith.constant 0 : i32
    return %c0_i32, %c0_i32_0 : i32, i32
  }
  func.func @transform_6(%arg0: i32) -> (i32, i32) {
    %c0_i32 = arith.constant 0 : i32
    %c0_i32_0 = arith.constant 0 : i32
    %c0_i32_1 = arith.constant 0 : i32
    return %c0_i32, %c0_i32_0 : i32, i32
  }
  func.func @transform_7(%arg0: i32) -> (i32, i32, i32) {
    %c0_i32 = arith.constant 0 : i32
    %c0_i32_0 = arith.constant 0 : i32
    %c0_i32_1 = arith.constant 0 : i32
    return %arg0, %c0_i32, %c0_i32_0 : i32, i32, i32
  }
  func.func @transform_8(%arg0: i32) -> (i32, i32, i32) {
    %c0_i32 = arith.constant 0 : i32
    %c0_i32_0 = arith.constant 0 : i32
    %c0_i32_1 = arith.constant 0 : i32
    return %arg0, %c0_i32, %c0_i32_0 : i32, i32, i32
  }
  func.func @transform_9(%arg0: i32) -> (i32, i32) {
    %c0_i32 = arith.constant 0 : i32
    %c0_i32_0 = arith.constant 0 : i32
    %c0_i32_1 = arith.constant 0 : i32
    return %c0_i32, %c0_i32_0 : i32, i32
  }
  func.func @transform_10(%arg0: i32) -> (i32, i32) {
    %c0_i32 = arith.constant 0 : i32
    %c0_i32_0 = arith.constant 0 : i32
    %c0_i32_1 = arith.constant 0 : i32
    return %c0_i32, %c0_i32_0 : i32, i32
  }
  func.func @transform_11(%arg0: i32) -> (i32, i32) {
    %c0_i32 = arith.constant 0 : i32
    %c0_i32_0 = arith.constant 0 : i32
    %c0_i32_1 = arith.constant 0 : i32
    return %c0_i32, %c0_i32_0 : i32, i32
  }
  func.func @transform_12(%arg0: i32) -> (i32, i32) {
    %c0_i32 = arith.constant 0 : i32
    %c0_i32_0 = arith.constant 0 : i32
    %c0_i32_1 = arith.constant 0 : i32
    return %c0_i32, %c0_i32_0 : i32, i32
  }
  func.func @transform_13(%arg0: i32) -> (i32, i32) {
    %c0_i32 = arith.constant 0 : i32
    %c0_i32_0 = arith.constant 0 : i32
    %c0_i32_1 = arith.constant 0 : i32
    return %c0_i32, %c0_i32_0 : i32, i32
  }
  func.func @transform_14(%arg0: i32) -> (i32, i32, i32) {
    %c0_i32 = arith.constant 0 : i32
    %c0_i32_0 = arith.constant 0 : i32
    %c0_i32_1 = arith.constant 0 : i32
    return %arg0, %c0_i32, %c0_i32_0 : i32, i32, i32
  }
  func.func @transform_15(%arg0: i32) -> (i32, i32, i32) {
    %c0_i32 = arith.constant 0 : i32
    %c0_i32_0 = arith.constant 0 : i32
    %c0_i32_1 = arith.constant 0 : i32
    return %arg0, %c0_i32, %c0_i32_0 : i32, i32, i32
  }
  func.func @transform_16(%arg0: i32) -> (i32, i32) {
    %c0_i32 = arith.constant 0 : i32
    %c0_i32_0 = arith.constant 0 : i32
    %c0_i32_1 = arith.constant 0 : i32
    return %c0_i32, %c0_i32_0 : i32, i32
  }
  func.func @transform_17(%arg0: i32) -> (i32, i32, i32) {
    %c0_i32 = arith.constant 0 : i32
    %c0_i32_0 = arith.constant 0 : i32
    %c0_i32_1 = arith.constant 0 : i32
    return %arg0, %c0_i32, %c0_i32_0 : i32, i32, i32
  }
}

</mosaic_0001>

<llo_original>
// kernel: mul.94
$region0: #{mul.94}
  %s0 = inlined_call_operand.vmem [shape: f32[16,16,2], index: 0, kind: input, shape index: {}]
  %s1 = inlined_call_operand.vmem [shape: f32[256,2], index: 1, kind: output, shape index: {}]
  $region1: #{mul.94} parent=0
    #allocation0 [shape = 'u8[8192]{0}', space=vmem, size = 0x2000, scoped, tag = 'scoped mem for output reshape']
    %v2 = vld [vmem:[%s0] ss:$8 sm:$0xf]
    %vm3 = vcmask 130048
    %4 = vst.msk [vmem:[#allocation0] ss:$8 sm:$0x3] %vm3, %v2
    %s5 = scalar_lea.vmem [#allocation0], 4294967281
    %6 = vst.msk [vmem:[%s5] ss:$8 sm:$0xc] %vm3, %v2
    %s7 = scalar_lea.vmem %s0, 7
    %s8 = smov 3
    %v9 = vld [vmem:[%s7] ss:$16 sm:%s8]
    %s10 = scalar_lea.vmem %s0, 4294967279
    %s11 = smov 12
    %v12 = vld [vmem:[%s10] ss:$16 sm:%s11]
    %vm13 = vcmask 1043458
    %v14 = vsel %vm13, %v12, %v9
    %15 = vrot.lane.b32.xlu0 %v14, 112
    %v16 = vpop.permute.xlu0 %15
    %vm17 = vcmask 1048448
    %18 = vst.msk [vmem:[#allocation0] sm:$0x3] %vm17, %v16
    %s19 = scalar_lea.vmem [#allocation0], 6
    %20 = vst.msk [vmem:[%s19] sm:$0xc] %vm17, %v16
    %s21 = scalar_lea.vmem %s0, 6
    %s22 = smov 3
    %v23 = vld [vmem:[%s21] ss:$16 sm:%s22]
    %s24 = scalar_lea.vmem %s0, 4294967278
    %s25 = smov 12
    %v26 = vld [vmem:[%s24] ss:$16 sm:%s25]
    %vm27 = vcmask 1043458
    %v28 = vsel %vm27, %v26, %v23
    %29 = vrot.lane.b32.xlu0 %v28, 96
    %v30 = vpop.permute.xlu0 %29
    %vm31 = vcmask 917248
    %32 = vst.msk [vmem:[#allocation0] sm:$0x3] %vm31, %v30
    %s33 = scalar_lea.vmem [#allocation0], 6
    %34 = vst.msk [vmem:[%s33] sm:$0xc] %vm31, %v30
    %s35 = scalar_lea.vmem %s0, 5
    %s36 = smov 3
    %v37 = vld [vmem:[%s35] ss:$16 sm:%s36]
    %s38 = scalar_lea.vmem %s0, 4294967277
    %s39 = smov 12
    %v40 = vld [vmem:[%s38] ss:$16 sm:%s39]
    %vm41 = vcmask 1043458
    %v42 = vsel %vm41, %v40, %v37
    %43 = vrot.lane.b32.xlu0 %v42, 80
    %v44 = vpop.permute.xlu0 %43
    %vm45 = vcmask 786048
    %46 = vst.msk [vmem:[#allocation0] sm:$0x3] %vm45, %v44
    %s47 = scalar_lea.vmem [#allocation0], 6
    %48 = vst.msk [vmem:[%s47] sm:$0xc] %vm45, %v44
    %s49 = scalar_lea.vmem %s0, 4
    %s50 = smov 3
    %v51 = vld [vmem:[%s49] ss:$16 sm:%s50]
    %s52 = scalar_lea.vmem %s0, 4294967276
    %s53 = smov 12
    %v54 = vld [vmem:[%s52] ss:$16 sm:%s53]
    %vm55 = vcmask 1043458
    %v56 = vsel %vm55, %v54, %v51
    %57 = vrot.lane.b32.xlu0 %v56, 64
    %v58 = vpop.permute.xlu0 %57
    %vm59 = vcmask 654848
    %60 = vst.msk [vmem:[#allocation0] sm:$0x3] %vm59, %v58
    %s61 = scalar_lea.vmem [#allocation0], 6
    %62 = vst.msk [vmem:[%s61] sm:$0xc] %vm59, %v58
    %s63 = scalar_lea.vmem %s0, 3
    %s64 = smov 3
    %v65 = vld [vmem:[%s63] ss:$16 sm:%s64]
    %s66 = scalar_lea.vmem %s0, 4294967275
    %s67 = smov 12
    %v68 = vld [vmem:[%s66] ss:$16 sm:%s67]
    %vm69 = vcmask 1043458
    %v70 = vsel %vm69, %v68, %v65
    %71 = vrot.lane.b32.xlu0 %v70, 48
    %v72 = vpop.permute.xlu0 %71
    %vm73 = vcmask 523648
    %74 = vst.msk [vmem:[#allocation0] sm:$0x3] %vm73, %v72
    %s75 = scalar_lea.vmem [#allocation0], 6
    %76 = vst.msk [vmem:[%s75] sm:$0xc] %vm73, %v72
    %s77 = scalar_lea.vmem %s0, 2
    %s78 = smov 3
    %v79 = vld [vmem:[%s77] ss:$16 sm:%s78]
    %s80 = scalar_lea.vmem %s0, 4294967274
    %s81 = smov 12
    %v82 = vld [vmem:[%s80] ss:$16 sm:%s81]
    %vm83 = vcmask 1043458
    %v84 = vsel %vm83, %v82, %v79
    %85 = vrot.lane.b32.xlu0 %v84, 32
    %v86 = vpop.permute.xlu0 %85
    %vm87 = vcmask 392448
    %88 = vst.msk [vmem:[#allocation0] sm:$0x3] %vm87, %v86
    %s89 = scalar_lea.vmem [#allocation0], 6
    %90 = vst.msk [vmem:[%s89] sm:$0xc] %vm87, %v86
    %s91 = scalar_lea.vmem %s0, 1
    %s92 = smov 3
    %v93 = vld [vmem:[%s91] ss:$16 sm:%s92]
    %s94 = scalar_lea.vmem %s0, 4294967273
    %s95 = smov 12
    %v96 = vld [vmem:[%s94] ss:$16 sm:%s95]
    %vm97 = vcmask 1043458
    %v98 = vsel %vm97, %v96, %v93
    %99 = vrot.lane.b32.xlu0 %v98, 16
    %v100 = vpop.permute.xlu0 %99
    %vm101 = vcmask 261248
    %102 = vst.msk [vmem:[#allocation0] sm:$0x3] %vm101, %v100
    %s103 = scalar_lea.vmem [#allocation0], 6
    %104 = vst.msk [vmem:[%s103] sm:$0xc] %vm101, %v100
    %s106 = ssub.s32 4, 1
    %v107 = vld [vmem:[#allocation0] sm:%s106]
    %s109 = ssub.s32 4, 1
    %110 = vst [vmem:[%s1] sm:%s109] %v107
    %s111 = scalar_lea.vmem [#allocation0], 8
    %v112 = vld [vmem:[%s111] sm:%s106]
    %s114 = ssub.s32 4, 1
    %s115 = scalar_lea.vmem %s1, 2
    %116 = vst [vmem:[%s115] sm:%s114] %v112

// kernel: _lambda_.2
$region0: #{_lambda_.2}
  #allocation0 [shape = 'u32[]', space=smem, size = 0x4, offset = 0x4, fixed_abs, tag = 'smem constant byte address 0x4 - core index']
  #allocation1 [shape = 'u32[72,128]{1,0:T(1,128)}', space=vmem, size = 0x9000, scoped, tag = 'internal scratch']
  %s0 = inlined_call_operand.vmem [shape: f32[2,64,16], index: 0, kind: input, shape index: {}]
  %s1 = inlined_call_operand.hbm [shape: f32[16,32], index: 1, kind: input, shape index: {}]
  %s2 = inlined_call_operand.vmem [shape: f32[1,32], index: 2, kind: input, shape index: {}]
  %s3 = inlined_call_operand.vmem [shape: f32[32,32], index: 3, kind: input, shape index: {}]
  %s4 = inlined_call_operand.vmem [shape: f32[1,32], index: 4, kind: input, shape index: {}]
  %s5 = inlined_call_operand.vmem [shape: f32[64,32], index: 5, kind: input, shape index: {}]
  %s6 = inlined_call_operand.hbm [shape: f32[16,32], index: 6, kind: input, shape index: {}]
  %s7 = inlined_call_operand.vmem [shape: f32[1,32], index: 7, kind: input, shape index: {}]
  %s8 = inlined_call_operand.vmem [shape: f32[1,32], index: 8, kind: input, shape index: {}]
  %s9 = inlined_call_operand.vmem [shape: f32[32,96], index: 9, kind: input, shape index: {}]
  %s10 = inlined_call_operand.vmem [shape: f32[1,96], index: 10, kind: input, shape index: {}]
  %s11 = inlined_call_operand.vmem [shape: f32[32,32], index: 11, kind: input, shape index: {}]
  %s12 = inlined_call_operand.vmem [shape: f32[1,32], index: 12, kind: input, shape index: {}]
  %s13 = inlined_call_operand.vmem [shape: f32[1,32], index: 13, kind: input, shape index: {}]
  %s14 = inlined_call_operand.vmem [shape: f32[1,32], index: 14, kind: input, shape index: {}]
  %s15 = inlined_call_operand.vmem [shape: f32[32,32], index: 15, kind: input, shape index: {}]
  %s16 = inlined_call_operand.vmem [shape: f32[1,32], index: 16, kind: input, shape index: {}]
  %s17 = inlined_call_operand.vmem [shape: f32[32,32], index: 17, kind: input, shape index: {}]
  %s18 = inlined_call_operand.vmem [shape: f32[1,32], index: 18, kind: input, shape index: {}]
  %s19 = inlined_call_operand.vmem [shape: f32[2,16,32], index: 19, kind: output, shape index: {}]
  %s20 = sld [smem:[#allocation0]]
  $region117: #{_lambda_.2} parent=0
    _
  %s22 = ssub.s32 1, %s20
  %s23 = scalar_select 0, %s22, %s20
  $region1: #{_lambda_.2} parent=0
    #allocation2 [shape = 'u8[8192]{0}', space=vmem, size = 0x2000, scoped, tag = 'input window, operand 1, single buffered']
    #allocation3 [shape = 's32[2]{0}', space=sflag, size = 0x8, scoped, tag = 'scoped memory for _lambda_.2']
    #allocation4 [shape = 'u8[8192]{0}', space=vmem, size = 0x2000, scoped, tag = 'input window, operand 6, single buffered']
    #allocation5 [shape = 's32[1]{0}', space=sflag, size = 0x4, scoped, tag = 'scoped memory for _lambda_.2']
    %24 = vsyncpa [#allocation3], 0
    %25 = vsyncpa [#allocation5], 0
    loop: start=0, step=1, limit=4
    $region2: #{_lambda_.2} parent=1 // loop_pre_header
      _
    $region3: #{_lambda_.2} parent=1 // loop_header
      %s27 = sphi 0, %s31
      %p28 = scmp.ge.s32.totalorder %s27, 4
      %s37 = sphi 0, %s39
      %s40 = sphi 0, %s37
      %s41 = sphi 0, %s40
      %s57 = sphi 0, %s41
      %s61 = sphi 0, %s61
      %s63 = sphi 0, %s61
      %s64 = sphi 0, %s63
      %s78 = sphi 0, %s64
      %s82 = sphi 0, %s82
      %s84 = sphi 0, %s82
      %s85 = sphi 0, %s84
      %s99 = sphi 0, %s85
      %s103 = sphi 0, %s103
      %s105 = sphi 0, %s103
      %s106 = sphi 0, %s105
      %s120 = sphi 0, %s106
      %s124 = sphi 0, %s124
      %s126 = sphi 0, %s124
      %s127 = sphi 0, %s126
      %s141 = sphi 0, %s127
      %s145 = sphi 0, %s145
      %s147 = sphi 0, %s145
      %s148 = sphi 0, %s147
      %s162 = sphi 0, %s148
      %s166 = sphi 0, %s166
      %s168 = sphi 0, %s166
      %s169 = sphi 0, %s168
      %s183 = sphi 0, %s169
      %s187 = sphi 0, %s187
      %s189 = sphi 0, %s187
      %s190 = sphi 0, %s189
      %s204 = sphi 0, %s190
      %s208 = sphi 0, %s208
      %s210 = sphi 0, %s208
      %s211 = sphi 0, %s210
      %s225 = sphi 0, %s211
      %s229 = sphi 0, %s229
      %s231 = sphi 0, %s229
      %s232 = sphi 0, %s231
      %s246 = sphi 0, %s232
      %s250 = sphi 0, %s250
      %s252 = sphi 0, %s250
      %s253 = sphi 0, %s252
      %s267 = sphi 0, %s253
      %s271 = sphi 0, %s271
      %s273 = sphi 0, %s271
      %s274 = sphi 0, %s273
      %s288 = sphi 0, %s274
      %s292 = sphi 0, %s292
      %s294 = sphi 0, %s292
      %s295 = sphi 0, %s294
      %s309 = sphi 0, %s295
      %s313 = sphi 0, %s313
      %s315 = sphi 0, %s313
      %s316 = sphi 0, %s315
      %s330 = sphi 0, %s316
      %s334 = sphi 0, %s334
      %s336 = sphi 0, %s334
      %s337 = sphi 0, %s336
      %s351 = sphi 0, %s337
      %s355 = sphi 0, %s355
      %s357 = sphi 0, %s355
      %s358 = sphi 0, %s357
      %s372 = sphi 0, %s358
      %s376 = sphi 0, %s376
      %s378 = sphi 0, %s376
      %s379 = sphi 0, %s378
      %s393 = sphi 0, %s379
      %s397 = sphi 0, %s397
      %s399 = sphi 0, %s397
      %s400 = sphi 0, %s399
      %s414 = sphi 0, %s400
      %s418 = sphi 0, %s418
      %s420 = sphi 0, %s418
      %s421 = sphi 0, %s420
      %s435 = sphi 0, %s421
      %s441 = sphi 0, %s443
      %s444 = sphi 0, %s441
      %s445 = sphi 0, %s444
      %s461 = sphi 0, %s445
    $region4: #{_lambda_.2} parent=1 // loop_header_branch
      %30 = sbr.rel (%p28) target = $region8
    $region5: #{_lambda_.2} parent=1 // loop_body
      %s32 = ssub.s32 %s27, 1
      %s33 = ssub.s32 %s27, 2
      %s34 = sadd.s32 %s27, 1
      %s35 = ssub.s32 %s27, %s34
      %p36 = scmp.eq.s32.totalorder %s35, 0
      %s38 = sadd.s32 %s37, 1
      %s39 = scalar_select %p36, %s37, %s38
      %p42 = pneg %p36
      %p43 = scmp.eq.s32.totalorder %s27, 1
      %p44 = por %p42, %p43
      %p45 = scmp.ne.s32.totalorder %s37, %s40
      %p46 = scmp.eq.s32.totalorder %s27, 0
      %p47 = por %p45, %p46
      %p48 = scmp.ne.s32.totalorder %s37, %s40
      %p49 = scmp.eq.s32.totalorder %s32, 1
      %p50 = por %p48, %p49
      %p51 = scmp.ne.s32.totalorder %s40, %s41
      %p52 = scmp.eq.s32.totalorder %s32, 0
      %p53 = por %p51, %p52
      %p54 = scmp.ne.s32.totalorder %s40, %s41
      %p55 = scmp.eq.s32.totalorder %s33, 1
      %p56 = por %p54, %p55
      %p58 = scmp.ne.s32.totalorder %s41, %s57
      %p59 = scmp.eq.s32.totalorder %s33, 0
      %p60 = por %p58, %p59
      %s62 = sadd.s32 %s61, 1
      %p65 = scmp.eq.s32.totalorder %s27, 1
      %p66 = scmp.ne.s32.totalorder %s61, %s63
      %p67 = scmp.eq.s32.totalorder %s27, 0
      %p68 = por %p66, %p67
      %p69 = scmp.ne.s32.totalorder %s61, %s63
      %p70 = scmp.eq.s32.totalorder %s32, 1
      %p71 = por %p69, %p70
      %p72 = scmp.ne.s32.totalorder %s63, %s64
      %p73 = scmp.eq.s32.totalorder %s32, 0
      %p74 = por %p72, %p73
      %p75 = scmp.ne.s32.totalorder %s63, %s64
      %p76 = scmp.eq.s32.totalorder %s33, 1
      %p77 = por %p75, %p76
      %p79 = scmp.ne.s32.totalorder %s64, %s78
      %p80 = scmp.eq.s32.totalorder %s33, 0
      %p81 = por %p79, %p80
      %s83 = sadd.s32 %s82, 1
      %p86 = scmp.eq.s32.totalorder %s27, 1
      %p87 = scmp.ne.s32.totalorder %s82, %s84
      %p88 = scmp.eq.s32.totalorder %s27, 0
      %p89 = por %p87, %p88
      %p90 = scmp.ne.s32.totalorder %s82, %s84
      %p91 = scmp.eq.s32.totalorder %s32, 1
      %p92 = por %p90, %p91
      %p93 = scmp.ne.s32.totalorder %s84, %s85
      %p94 = scmp.eq.s32.totalorder %s32, 0
      %p95 = por %p93, %p94
      %p96 = scmp.ne.s32.totalorder %s84, %s85
      %p97 = scmp.eq.s32.totalorder %s33, 1
      %p98 = por %p96, %p97
      %p100 = scmp.ne.s32.totalorder %s85, %s99
      %p101 = scmp.eq.s32.totalorder %s33, 0
      %p102 = por %p100, %p101
      %s104 = sadd.s32 %s103, 1
      %p107 = scmp.eq.s32.totalorder %s27, 1
      %p108 = scmp.ne.s32.totalorder %s103, %s105
      %p109 = scmp.eq.s32.totalorder %s27, 0
      %p110 = por %p108, %p109
      %p111 = scmp.ne.s32.totalorder %s103, %s105
      %p112 = scmp.eq.s32.totalorder %s32, 1
      %p113 = por %p111, %p112
      %p114 = scmp.ne.s32.totalorder %s105, %s106
      %p115 = scmp.eq.s32.totalorder %s32, 0
      %p116 = por %p114, %p115
      %p117 = scmp.ne.s32.totalorder %s105, %s106
      %p118 = scmp.eq.s32.totalorder %s33, 1
      %p119 = por %p117, %p118
      %p121 = scmp.ne.s32.totalorder %s106, %s120
      %p122 = scmp.eq.s32.totalorder %s33, 0
      %p123 = por %p121, %p122
      %s125 = sadd.s32 %s124, 1
      %p128 = scmp.eq.s32.totalorder %s27, 1
      %p129 = scmp.ne.s32.totalorder %s124, %s126
      %p130 = scmp.eq.s32.totalorder %s27, 0
      %p131 = por %p129, %p130
      %p132 = scmp.ne.s32.totalorder %s124, %s126
      %p133 = scmp.eq.s32.totalorder %s32, 1
      %p134 = por %p132, %p133
      %p135 = scmp.ne.s32.totalorder %s126, %s127
      %p136 = scmp.eq.s32.totalorder %s32, 0
      %p137 = por %p135, %p136
      %p138 = scmp.ne.s32.totalorder %s126, %s127
      %p139 = scmp.eq.s32.totalorder %s33, 1
      %p140 = por %p138, %p139
      %p142 = scmp.ne.s32.totalorder %s127, %s141
      %p143 = scmp.eq.s32.totalorder %s33, 0
      %p144 = por %p142, %p143
      %s146 = sadd.s32 %s145, 1
      %p149 = scmp.eq.s32.totalorder %s27, 1
      %p150 = scmp.ne.s32.totalorder %s145, %s147
      %p151 = scmp.eq.s32.totalorder %s27, 0
      %p152 = por %p150, %p151
      %p153 = scmp.ne.s32.totalorder %s145, %s147
      %p154 = scmp.eq.s32.totalorder %s32, 1
      %p155 = por %p153, %p154
      %p156 = scmp.ne.s32.totalorder %s147, %s148
      %p157 = scmp.eq.s32.totalorder %s32, 0
      %p158 = por %p156, %p157
      %p159 = scmp.ne.s32.totalorder %s147, %s148
      %p160 = scmp.eq.s32.totalorder %s33, 1
      %p161 = por %p159, %p160
      %p163 = scmp.ne.s32.totalorder %s148, %s162
      %p164 = scmp.eq.s32.totalorder %s33, 0
      %p165 = por %p163, %p164
      %s167 = sadd.s32 %s166, 1
      %p170 = scmp.eq.s32.totalorder %s27, 1
      %p171 = scmp.ne.s32.totalorder %s166, %s168
      %p172 = scmp.eq.s32.totalorder %s27, 0
      %p173 = por %p171, %p172
      %p174 = scmp.ne.s32.totalorder %s166, %s168
      %p175 = scmp.eq.s32.totalorder %s32, 1
      %p176 = por %p174, %p175
      %p177 = scmp.ne.s32.totalorder %s168, %s169
      %p178 = scmp.eq.s32.totalorder %s32, 0
      %p179 = por %p177, %p178
      %p180 = scmp.ne.s32.totalorder %s168, %s169
      %p181 = scmp.eq.s32.totalorder %s33, 1
      %p182 = por %p180, %p181
      %p184 = scmp.ne.s32.totalorder %s169, %s183
      %p185 = scmp.eq.s32.totalorder %s33, 0
      %p186 = por %p184, %p185
      %s188 = sadd.s32 %s187, 1
      %p191 = scmp.eq.s32.totalorder %s27, 1
      %p192 = scmp.ne.s32.totalorder %s187, %s189
      %p193 = scmp.eq.s32.totalorder %s27, 0
      %p194 = por %p192, %p193
      %p195 = scmp.ne.s32.totalorder %s187, %s189
      %p196 = scmp.eq.s32.totalorder %s32, 1
      %p197 = por %p195, %p196
      %p198 = scmp.ne.s32.totalorder %s189, %s190
      %p199 = scmp.eq.s32.totalorder %s32, 0
      %p200 = por %p198, %p199
      %p201 = scmp.ne.s32.totalorder %s189, %s190
      %p202 = scmp.eq.s32.totalorder %s33, 1
      %p203 = por %p201, %p202
      %p205 = scmp.ne.s32.totalorder %s190, %s204
      %p206 = scmp.eq.s32.totalorder %s33, 0
      %p207 = por %p205, %p206
      %s209 = sadd.s32 %s208, 1
      %p212 = scmp.eq.s32.totalorder %s27, 1
      %p213 = scmp.ne.s32.totalorder %s208, %s210
      %p214 = scmp.eq.s32.totalorder %s27, 0
      %p215 = por %p213, %p214
      %p216 = scmp.ne.s32.totalorder %s208, %s210
      %p217 = scmp.eq.s32.totalorder %s32, 1
      %p218 = por %p216, %p217
      %p219 = scmp.ne.s32.totalorder %s210, %s211
      %p220 = scmp.eq.s32.totalorder %s32, 0
      %p221 = por %p219, %p220
      %p222 = scmp.ne.s32.totalorder %s210, %s211
      %p223 = scmp.eq.s32.totalorder %s33, 1
      %p224 = por %p222, %p223
      %p226 = scmp.ne.s32.totalorder %s211, %s225
      %p227 = scmp.eq.s32.totalorder %s33, 0
      %p228 = por %p226, %p227
      %s230 = sadd.s32 %s229, 1
      %p233 = scmp.eq.s32.totalorder %s27, 1
      %p234 = scmp.ne.s32.totalorder %s229, %s231
      %p235 = scmp.eq.s32.totalorder %s27, 0
      %p236 = por %p234, %p235
      %p237 = scmp.ne.s32.totalorder %s229, %s231
      %p238 = scmp.eq.s32.totalorder %s32, 1
      %p239 = por %p237, %p238
      %p240 = scmp.ne.s32.totalorder %s231, %s232
      %p241 = scmp.eq.s32.totalorder %s32, 0
      %p242 = por %p240, %p241
      %p243 = scmp.ne.s32.totalorder %s231, %s232
      %p244 = scmp.eq.s32.totalorder %s33, 1
      %p245 = por %p243, %p244
      %p247 = scmp.ne.s32.totalorder %s232, %s246
      %p248 = scmp.eq.s32.totalorder %s33, 0
      %p249 = por %p247, %p248
      %s251 = sadd.s32 %s250, 1
      %p254 = scmp.eq.s32.totalorder %s27, 1
      %p255 = scmp.ne.s32.totalorder %s250, %s252
      %p256 = scmp.eq.s32.totalorder %s27, 0
      %p257 = por %p255, %p256
      %p258 = scmp.ne.s32.totalorder %s250, %s252
      %p259 = scmp.eq.s32.totalorder %s32, 1
      %p260 = por %p258, %p259
      %p261 = scmp.ne.s32.totalorder %s252, %s253
      %p262 = scmp.eq.s32.totalorder %s32, 0
      %p263 = por %p261, %p262
      %p264 = scmp.ne.s32.totalorder %s252, %s253
      %p265 = scmp.eq.s32.totalorder %s33, 1
      %p266 = por %p264, %p265
      %p268 = scmp.ne.s32.totalorder %s253, %s267
      %p269 = scmp.eq.s32.totalorder %s33, 0
      %p270 = por %p268, %p269
      %s272 = sadd.s32 %s271, 1
      %p275 = scmp.eq.s32.totalorder %s27, 1
      %p276 = scmp.ne.s32.totalorder %s271, %s273
      %p277 = scmp.eq.s32.totalorder %s27, 0
      %p278 = por %p276, %p277
      %p279 = scmp.ne.s32.totalorder %s271, %s273
      %p280 = scmp.eq.s32.totalorder %s32, 1
      %p281 = por %p279, %p280
      %p282 = scmp.ne.s32.totalorder %s273, %s274
      %p283 = scmp.eq.s32.totalorder %s32, 0
      %p284 = por %p282, %p283
      %p285 = scmp.ne.s32.totalorder %s273, %s274
      %p286 = scmp.eq.s32.totalorder %s33, 1
      %p287 = por %p285, %p286
      %p289 = scmp.ne.s32.totalorder %s274, %s288
      %p290 = scmp.eq.s32.totalorder %s33, 0
      %p291 = por %p289, %p290
      %s293 = sadd.s32 %s292, 1
      %p296 = scmp.eq.s32.totalorder %s27, 1
      %p297 = scmp.ne.s32.totalorder %s292, %s294
      %p298 = scmp.eq.s32.totalorder %s27, 0
      %p299 = por %p297, %p298
      %p300 = scmp.ne.s32.totalorder %s292, %s294
      %p301 = scmp.eq.s32.totalorder %s32, 1
      %p302 = por %p300, %p301
      %p303 = scmp.ne.s32.totalorder %s294, %s295
      %p304 = scmp.eq.s32.totalorder %s32, 0
      %p305 = por %p303, %p304
      %p306 = scmp.ne.s32.totalorder %s294, %s295
      %p307 = scmp.eq.s32.totalorder %s33, 1
      %p308 = por %p306, %p307
      %p310 = scmp.ne.s32.totalorder %s295, %s309
      %p311 = scmp.eq.s32.totalorder %s33, 0
      %p312 = por %p310, %p311
      %s314 = sadd.s32 %s313, 1
      %p317 = scmp.eq.s32.totalorder %s27, 1
      %p318 = scmp.ne.s32.totalorder %s313, %s315
      %p319 = scmp.eq.s32.totalorder %s27, 0
      %p320 = por %p318, %p319
      %p321 = scmp.ne.s32.totalorder %s313, %s315
      %p322 = scmp.eq.s32.totalorder %s32, 1
      %p323 = por %p321, %p322
      %p324 = scmp.ne.s32.totalorder %s315, %s316
      %p325 = scmp.eq.s32.totalorder %s32, 0
      %p326 = por %p324, %p325
      %p327 = scmp.ne.s32.totalorder %s315, %s316
      %p328 = scmp.eq.s32.totalorder %s33, 1
      %p329 = por %p327, %p328
      %p331 = scmp.ne.s32.totalorder %s316, %s330
      %p332 = scmp.eq.s32.totalorder %s33, 0
      %p333 = por %p331, %p332
      %s335 = sadd.s32 %s334, 1
      %p338 = scmp.eq.s32.totalorder %s27, 1
      %p339 = scmp.ne.s32.totalorder %s334, %s336
      %p340 = scmp.eq.s32.totalorder %s27, 0
      %p341 = por %p339, %p340
      %p342 = scmp.ne.s32.totalorder %s334, %s336
      %p343 = scmp.eq.s32.totalorder %s32, 1
      %p344 = por %p342, %p343
      %p345 = scmp.ne.s32.totalorder %s336, %s337
      %p346 = scmp.eq.s32.totalorder %s32, 0
      %p347 = por %p345, %p346
      %p348 = scmp.ne.s32.totalorder %s336, %s337
      %p349 = scmp.eq.s32.totalorder %s33, 1
      %p350 = por %p348, %p349
      %p352 = scmp.ne.s32.totalorder %s337, %s351
      %p353 = scmp.eq.s32.totalorder %s33, 0
      %p354 = por %p352, %p353
      %s356 = sadd.s32 %s355, 1
      %p359 = scmp.eq.s32.totalorder %s27, 1
      %p360 = scmp.ne.s32.totalorder %s355, %s357
      %p361 = scmp.eq.s32.totalorder %s27, 0
      %p362 = por %p360, %p361
      %p363 = scmp.ne.s32.totalorder %s355, %s357
      %p364 = scmp.eq.s32.totalorder %s32, 1
      %p365 = por %p363, %p364
      %p366 = scmp.ne.s32.totalorder %s357, %s358
      %p367 = scmp.eq.s32.totalorder %s32, 0
      %p368 = por %p366, %p367
      %p369 = scmp.ne.s32.totalorder %s357, %s358
      %p370 = scmp.eq.s32.totalorder %s33, 1
      %p371 = por %p369, %p370
      %p373 = scmp.ne.s32.totalorder %s358, %s372
      %p374 = scmp.eq.s32.totalorder %s33, 0
      %p375 = por %p373, %p374
      %s377 = sadd.s32 %s376, 1
      %p380 = scmp.eq.s32.totalorder %s27, 1
      %p381 = scmp.ne.s32.totalorder %s376, %s378
      %p382 = scmp.eq.s32.totalorder %s27, 0
      %p383 = por %p381, %p382
      %p384 = scmp.ne.s32.totalorder %s376, %s378
      %p385 = scmp.eq.s32.totalorder %s32, 1
      %p386 = por %p384, %p385
      %p387 = scmp.ne.s32.totalorder %s378, %s379
      %p388 = scmp.eq.s32.totalorder %s32, 0
      %p389 = por %p387, %p388
      %p390 = scmp.ne.s32.totalorder %s378, %s379
      %p391 = scmp.eq.s32.totalorder %s33, 1
      %p392 = por %p390, %p391
      %p394 = scmp.ne.s32.totalorder %s379, %s393
      %p395 = scmp.eq.s32.totalorder %s33, 0
      %p396 = por %p394, %p395
      %s398 = sadd.s32 %s397, 1
      %p401 = scmp.eq.s32.totalorder %s27, 1
      %p402 = scmp.ne.s32.totalorder %s397, %s399
      %p403 = scmp.eq.s32.totalorder %s27, 0
      %p404 = por %p402, %p403
      %p405 = scmp.ne.s32.totalorder %s397, %s399
      %p406 = scmp.eq.s32.totalorder %s32, 1
      %p407 = por %p405, %p406
      %p408 = scmp.ne.s32.totalorder %s399, %s400
      %p409 = scmp.eq.s32.totalorder %s32, 0
      %p410 = por %p408, %p409
      %p411 = scmp.ne.s32.totalorder %s399, %s400
      %p412 = scmp.eq.s32.totalorder %s33, 1
      %p413 = por %p411, %p412
      %p415 = scmp.ne.s32.totalorder %s400, %s414
      %p416 = scmp.eq.s32.totalorder %s33, 0
      %p417 = por %p415, %p416
      %s419 = sadd.s32 %s418, 1
      %p422 = scmp.eq.s32.totalorder %s27, 1
      %p423 = scmp.ne.s32.totalorder %s418, %s420
      %p424 = scmp.eq.s32.totalorder %s27, 0
      %p425 = por %p423, %p424
      %p426 = scmp.ne.s32.totalorder %s418, %s420
      %p427 = scmp.eq.s32.totalorder %s32, 1
      %p428 = por %p426, %p427
      %p429 = scmp.ne.s32.totalorder %s420, %s421
      %p430 = scmp.eq.s32.totalorder %s32, 0
      %p431 = por %p429, %p430
      %p432 = scmp.ne.s32.totalorder %s420, %s421
      %p433 = scmp.eq.s32.totalorder %s33, 1
      %p434 = por %p432, %p433
      %p436 = scmp.ne.s32.totalorder %s421, %s435
      %p437 = scmp.eq.s32.totalorder %s33, 0
      %p438 = por %p436, %p437
      %s439 = ssub.s32 %s27, %s34
      %p440 = scmp.eq.s32.totalorder %s439, 0
      %s442 = sadd.s32 %s441, 1
      %s443 = scalar_select %p440, %s441, %s442
      %p446 = pneg %p440
      %p447 = scmp.eq.s32.totalorder %s27, 1
      %p448 = por %p446, %p447
      %p449 = scmp.ne.s32.totalorder %s441, %s444
      %p450 = scmp.eq.s32.totalorder %s27, 0
      %p451 = por %p449, %p450
      %p452 = scmp.ne.s32.totalorder %s441, %s444
      %p453 = scmp.eq.s32.totalorder %s32, 1
      %p454 = por %p452, %p453
      %p455 = scmp.ne.s32.totalorder %s444, %s445
      %p456 = scmp.eq.s32.totalorder %s32, 0
      %p457 = por %p455, %p456
      %p458 = scmp.ne.s32.totalorder %s444, %s445
      %p459 = scmp.eq.s32.totalorder %s33, 1
      %p460 = por %p458, %p459
      %p462 = scmp.ne.s32.totalorder %s445, %s461
      %p463 = scmp.eq.s32.totalorder %s33, 0
      %p464 = por %p462, %p463
      %p465 = scmp.le.s32.totalorder 1, %s27
      %p466 = scmp.lt.s32.totalorder %s27, 3
      %p467 = pnand %p465, %p466
      %p468 = pneg %p467
      // Predicated region
      $region9: #{_lambda_.2} parent=5 // pred_check
        _
      $region10: #{_lambda_.2} parent=5 // pred_check_branch
        %470 = sbr.rel (%p467) target = $region12
      $region11: #{_lambda_.2} parent=5 // pred_region
        %s471 = ssub.s32 %s27, 1
        // Predicated region
        $region13: #{_lambda_.2} parent=11 // pred_check
          %p472 = pneg %p74
        $region14: #{_lambda_.2} parent=11 // pred_check_branch
          %474 = sbr.rel (%p472) target = $region16
        $region15: #{_lambda_.2} parent=11 // pred_region
          %476 = vsyncadd [#allocation3], 0
          %s477 = sshll.u32 %s1, 4
          %s478 = int_to_ptr.hbm [resolvable:$true] %s477
          %s479 = sshll.u32 [#allocation2], 4
          %s480 = int_to_ptr.vmem [resolvable:$true] %s479
          %485 = dma.hbm_to_vmem [thread:$0]  %s478, 256, %s480, [#allocation3], 128, 128, 8
        $region16: #{_lambda_.2} parent=11 // pred_fallthru
          _
        // Predicated region
        $region17: #{_lambda_.2} parent=11 // pred_check
          %p486 = pneg %p95
        $region18: #{_lambda_.2} parent=11 // pred_check_branch
          %488 = sbr.rel (%p486) target = $region20
        $region19: #{_lambda_.2} parent=11 // pred_region
          _
        $region20: #{_lambda_.2} parent=11 // pred_fallthru
          _
        // Predicated region
        $region21: #{_lambda_.2} parent=11 // pred_check
          %p489 = pneg %p116
        $region22: #{_lambda_.2} parent=11 // pred_check_branch
          %491 = sbr.rel (%p489) target = $region24
        $region23: #{_lambda_.2} parent=11 // pred_region
          _
        $region24: #{_lambda_.2} parent=11 // pred_fallthru
          _
        // Predicated region
        $region25: #{_lambda_.2} parent=11 // pred_check
          %p492 = pneg %p137
        $region26: #{_lambda_.2} parent=11 // pred_check_branch
          %494 = sbr.rel (%p492) target = $region28
        $region27: #{_lambda_.2} parent=11 // pred_region
          _
        $region28: #{_lambda_.2} parent=11 // pred_fallthru
          _
        // Predicated region
        $region29: #{_lambda_.2} parent=11 // pred_check
          %p495 = pneg %p158
        $region30: #{_lambda_.2} parent=11 // pred_check_branch
          %497 = sbr.rel (%p495) target = $region32
        $region31: #{_lambda_.2} parent=11 // pred_region
          _
        $region32: #{_lambda_.2} parent=11 // pred_fallthru
          _
        // Predicated region
        $region33: #{_lambda_.2} parent=11 // pred_check
          %p498 = pneg %p179
        $region34: #{_lambda_.2} parent=11 // pred_check_branch
          %500 = sbr.rel (%p498) target = $region36
        $region35: #{_lambda_.2} parent=11 // pred_region
          %502 = vsyncadd [#allocation5], 0
          %s503 = sshll.u32 %s6, 4
          %s504 = int_to_ptr.hbm [resolvable:$true] %s503
          %s505 = sshll.u32 [#allocation4], 4
          %s506 = int_to_ptr.vmem [resolvable:$true] %s505
          %511 = dma.hbm_to_vmem [thread:$0]  %s504, 256, %s506, [#allocation5], 128, 128, 8
        $region36: #{_lambda_.2} parent=11 // pred_fallthru
          _
        // Predicated region
        $region37: #{_lambda_.2} parent=11 // pred_check
          %p512 = pneg %p200
        $region38: #{_lambda_.2} parent=11 // pred_check_branch
          %514 = sbr.rel (%p512) target = $region40
        $region39: #{_lambda_.2} parent=11 // pred_region
          _
        $region40: #{_lambda_.2} parent=11 // pred_fallthru
          _
        // Predicated region
        $region41: #{_lambda_.2} parent=11 // pred_check
          %p515 = pneg %p221
        $region42: #{_lambda_.2} parent=11 // pred_check_branch
          %517 = sbr.rel (%p515) target = $region44
        $region43: #{_lambda_.2} parent=11 // pred_region
          _
        $region44: #{_lambda_.2} parent=11 // pred_fallthru
          _
        // Predicated region
        $region45: #{_lambda_.2} parent=11 // pred_check
          %p518 = pneg %p242
        $region46: #{_lambda_.2} parent=11 // pred_check_branch
          %520 = sbr.rel (%p518) target = $region48
        $region47: #{_lambda_.2} parent=11 // pred_region
          _
        $region48: #{_lambda_.2} parent=11 // pred_fallthru
          _
        // Predicated region
        $region49: #{_lambda_.2} parent=11 // pred_check
          %p521 = pneg %p263
        $region50: #{_lambda_.2} parent=11 // pred_check_branch
          %523 = sbr.rel (%p521) target = $region52
        $region51: #{_lambda_.2} parent=11 // pred_region
          _
        $region52: #{_lambda_.2} parent=11 // pred_fallthru
          _
        // Predicated region
        $region53: #{_lambda_.2} parent=11 // pred_check
          %p524 = pneg %p284
        $region54: #{_lambda_.2} parent=11 // pred_check_branch
          %526 = sbr.rel (%p524) target = $region56
        $region55: #{_lambda_.2} parent=11 // pred_region
          _
        $region56: #{_lambda_.2} parent=11 // pred_fallthru
          _
        // Predicated region
        $region57: #{_lambda_.2} parent=11 // pred_check
          %p527 = pneg %p305
        $region58: #{_lambda_.2} parent=11 // pred_check_branch
          %529 = sbr.rel (%p527) target = $region60
        $region59: #{_lambda_.2} parent=11 // pred_region
          _
        $region60: #{_lambda_.2} parent=11 // pred_fallthru
          _
        // Predicated region
        $region61: #{_lambda_.2} parent=11 // pred_check
          %p530 = pneg %p326
        $region62: #{_lambda_.2} parent=11 // pred_check_branch
          %532 = sbr.rel (%p530) target = $region64
        $region63: #{_lambda_.2} parent=11 // pred_region
          _
        $region64: #{_lambda_.2} parent=11 // pred_fallthru
          _
        // Predicated region
        $region65: #{_lambda_.2} parent=11 // pred_check
          %p533 = pneg %p347
        $region66: #{_lambda_.2} parent=11 // pred_check_branch
          %535 = sbr.rel (%p533) target = $region68
        $region67: #{_lambda_.2} parent=11 // pred_region
          _
        $region68: #{_lambda_.2} parent=11 // pred_fallthru
          _
        // Predicated region
        $region69: #{_lambda_.2} parent=11 // pred_check
          %p536 = pneg %p368
        $region70: #{_lambda_.2} parent=11 // pred_check_branch
          %538 = sbr.rel (%p536) target = $region72
        $region71: #{_lambda_.2} parent=11 // pred_region
          _
        $region72: #{_lambda_.2} parent=11 // pred_fallthru
          _
        // Predicated region
        $region73: #{_lambda_.2} parent=11 // pred_check
          %p539 = pneg %p389
        $region74: #{_lambda_.2} parent=11 // pred_check_branch
          %541 = sbr.rel (%p539) target = $region76
        $region75: #{_lambda_.2} parent=11 // pred_region
          _
        $region76: #{_lambda_.2} parent=11 // pred_fallthru
          _
        // Predicated region
        $region77: #{_lambda_.2} parent=11 // pred_check
          %p542 = pneg %p410
        $region78: #{_lambda_.2} parent=11 // pred_check_branch
          %544 = sbr.rel (%p542) target = $region80
        $region79: #{_lambda_.2} parent=11 // pred_region
          _
        $region80: #{_lambda_.2} parent=11 // pred_fallthru
          _
        // Predicated region
        $region81: #{_lambda_.2} parent=11 // pred_check
          %p545 = pneg %p431
        $region82: #{_lambda_.2} parent=11 // pred_check_branch
          %547 = sbr.rel (%p545) target = $region84
        $region83: #{_lambda_.2} parent=11 // pred_region
          _
        $region84: #{_lambda_.2} parent=11 // pred_fallthru
          _
      $region12: #{_lambda_.2} parent=5 // pred_fallthru
        _
      %p548 = scmp.lt.s32.totalorder %s27, 2
      // Predicated region
      $region85: #{_lambda_.2} parent=5 // pred_check
        %p549 = pneg %p548
      $region86: #{_lambda_.2} parent=5 // pred_check_branch
        %551 = sbr.rel (%p549) target = $region88
      $region87: #{_lambda_.2} parent=5 // pred_region
        // Predicated region
        $region89: #{_lambda_.2} parent=87 // pred_check
          %p552 = pneg %p47
        $region90: #{_lambda_.2} parent=87 // pred_check_branch
          %554 = sbr.rel (%p552) target = $region92
        $region91: #{_lambda_.2} parent=87 // pred_region
          %p555 = scmp.lt.s32.totalorder %s27, 1
          %s556 = scalar_select %p555, %s27, 1
          %s557 = smul.addr %s556, 8
          %s558 = smul.addr %s557, 8
          %s559 = scalar_lea.vmem %s0, %s558
        $region92: #{_lambda_.2} parent=87 // pred_fallthru
          _
      $region88: #{_lambda_.2} parent=5 // pred_fallthru
        _
      %p560 = scmp.le.s32.totalorder 1, %s27
      %p561 = scmp.lt.s32.totalorder %s27, 3
      %p562 = pnand %p560, %p561
      %p563 = pneg %p562
      // Predicated region
      $region93: #{_lambda_.2} parent=5 // pred_check
        _
      $region94: #{_lambda_.2} parent=5 // pred_check_branch
        %565 = sbr.rel (%p562) target = $region96
      $region95: #{_lambda_.2} parent=5 // pred_region
        %s566 = ssub.s32 %s27, 1
        // Predicated region
        $region97: #{_lambda_.2} parent=95 // pred_check
          %p567 = pneg %p74
        $region98: #{_lambda_.2} parent=95 // pred_check_branch
          %569 = sbr.rel (%p567) target = $region100
        $region99: #{_lambda_.2} parent=95 // pred_region
          %571 = dma.done [#allocation3], 256
        $region100: #{_lambda_.2} parent=95 // pred_fallthru
          _
        // Predicated region
        $region101: #{_lambda_.2} parent=95 // pred_check
          %p572 = pneg %p179
        $region102: #{_lambda_.2} parent=95 // pred_check_branch
          %574 = sbr.rel (%p572) target = $region104
        $region103: #{_lambda_.2} parent=95 // pred_region
          %576 = dma.done [#allocation5], 256
        $region104: #{_lambda_.2} parent=95 // pred_fallthru
          _
        %p577 = scmp.lt.s32.totalorder %s32, 1
        %s578 = scalar_select %p577, %s32, 1
        %s579 = smul.addr %s578, 8
        %s580 = smul.addr %s579, 8
        %s581 = scalar_lea.vmem %s0, %s580
        %p582 = pneg %p53
        %p583 = pneg %p50
        %p584 = pneg %p74
        %p585 = pneg %p71
        %p586 = pneg %p95
        %p587 = pneg %p92
        %p588 = pneg %p116
        %p589 = pneg %p113
        %p590 = pneg %p137
        %p591 = pneg %p134
        %p592 = pneg %p158
        %p593 = pneg %p155
        %p594 = pneg %p179
        %p595 = pneg %p176
        %p596 = pneg %p200
        %p597 = pneg %p197
        %p598 = pneg %p221
        %p599 = pneg %p218
        %p600 = pneg %p242
        %p601 = pneg %p239
        %p602 = pneg %p263
        %p603 = pneg %p260
        %p604 = pneg %p284
        %p605 = pneg %p281
        %p606 = pneg %p305
        %p607 = pneg %p302
        %p608 = pneg %p326
        %p609 = pneg %p323
        %p610 = pneg %p347
        %p611 = pneg %p344
        %p612 = pneg %p368
        %p613 = pneg %p365
        %p614 = pneg %p389
        %p615 = pneg %p386
        %p616 = pneg %p410
        %p617 = pneg %p407
        %p618 = pneg %p431
        %p619 = pneg %p428
        %p620 = pneg %p457
        %p621 = pneg %p454
        %p622 = scmp.lt.s32.totalorder %s32, 1
        %s623 = scalar_select %p622, %s32, 1
        %s624 = smul.addr %s623, 2
        %s625 = smul.addr %s624, 8
        %s626 = scalar_lea.vmem %s19, %s625
        %p627 = scmp.lt.s32.totalorder %s32, 1
        %s628 = scalar_select %p627, %s32, 1
        %s629 = smul.addr %s628, 8
        %s630 = smul.addr %s629, 8
        %s631 = scalar_lea.vmem %s0, %s630
        %p632 = scmp.lt.s32.totalorder %s32, 1
        %s633 = scalar_select %p632, %s32, 1
        %s634 = smul.addr %s633, 2
        %s635 = smul.addr %s634, 8
        %s636 = scalar_lea.vmem %s19, %s635
        %v638 = vld [vmem:[%s631] sm:$0xff]
        %v639 = vld [vmem:[%s631 + $0x8] sm:$0xff]
        %v640 = vld [vmem:[%s631 + $0x10] sm:$0xff]
        %v641 = vld [vmem:[%s631 + $0x18] sm:$0xff]
        %v642 = vld [vmem:[%s631 + $0x20] sm:$0xff]
        %v643 = vld [vmem:[%s631 + $0x28] sm:$0xff]
        %v644 = vld [vmem:[%s631 + $0x30] sm:$0xff]
        %v645 = vld [vmem:[%s631 + $0x38] sm:$0xff]
        %v646 = vld [vmem:[#allocation2] sm:$0xff]
        %v647 = vld [vmem:[#allocation2 + $0x8] sm:$0xff]
        %v648 = vpack.c.bf16 %v639, %v638
        %v649 = vpack.c.bf16 %v641, %v640
        %v650 = vpack.c.bf16 %v643, %v642
        %v651 = vpack.c.bf16 %v645, %v644
        %v652 = vpack.c.bf16 %v647, %v646
        %v653 = vld [vmem:[%s2] sm:$0x1]
        %v655 = vperm.slane %v653, 0
        %vm657 = vcmask 130048
        %v659 = vsel %vm657, %v648, 0
        %v662 = vsel %vm657, %v649, 0
        %v665 = vsel %vm657, %v650, 0
        %v668 = vsel %vm657, %v651, 0
        %670 = vmatpush.bf16.msra.mxu0 0
        %671 = vmatpush.bf16.msra.mxu0 0
        %672 = vmatpush.bf16.msra.mxu0 0
        %673 = vmatpush.bf16.msra.mxu0 0
        %674 = vmatpush.bf16.msra.mxu0 0
        %675 = vmatpush.bf16.msra.mxu0 0
        %676 = vmatpush.bf16.msra.mxu0 0
        %677 = vmatpush.bf16.msra.mxu0 %v652
        %678 = vmatmul.bf16.gmra.mxu0 %v659
        %v679 = vpop.f32.mrf.mxu0
        %v680 = vadd.f32 %v655, %v679
        %v681 = vpop.f32.mrf.mxu0
        %v682 = vadd.f32 %v655, %v681
        %683 = vmatmul.bf16.gmra.mxu0 %v662
        %v684 = vpop.f32.mrf.mxu0
        %v685 = vadd.f32 %v655, %v684
        %v686 = vpop.f32.mrf.mxu0
        %v687 = vadd.f32 %v655, %v686
        %688 = vmatmul.bf16.gmra.mxu0 %v665
        %v689 = vpop.f32.mrf.mxu0
        %v690 = vadd.f32 %v655, %v689
        %v691 = vpop.f32.mrf.mxu0
        %v692 = vadd.f32 %v655, %v691
        %693 = vmatmul.bf16.gmra.mxu0 %v668
        %v694 = vpop.f32.mrf.mxu0
        %v695 = vadd.f32 %v655, %v694
        %v696 = vpop.f32.mrf.mxu0
        %v697 = vadd.f32 %v655, %v696
        %698 = vdwg.mxu0
        %v699 = vld [vmem:[%s3] sm:$0xff]
        %v700 = vld [vmem:[%s3 + $0x8] sm:$0xff]
        %v701 = vld [vmem:[%s3 + $0x10] sm:$0xff]
        %v702 = vld [vmem:[%s3 + $0x18] sm:$0xff]
        %v703 = vpack.c.bf16 %v682, %v680
        %v704 = vpack.c.bf16 %v687, %v685
        %v705 = vpack.c.bf16 %v692, %v690
        %v706 = vpack.c.bf16 %v697, %v695
        %v707 = vpack.c.bf16 %v700, %v699
        %v708 = vpack.c.bf16 %v702, %v701
        %v709 = vld [vmem:[%s4] sm:$0x1]
        %v711 = vperm.slane %v709, 0
        %vm713 = vcmask 261120
        %v715 = vsel %vm713, %v703, 0
        %v718 = vsel %vm713, %v704, 0
        %v721 = vsel %vm713, %v705, 0
        %v724 = vsel %vm713, %v706, 0
        %726 = vmatpush.bf16.msra.mxu0 0
        %727 = vmatpush.bf16.msra.mxu0 0
        %728 = vmatpush.bf16.msra.mxu0 0
        %729 = vmatpush.bf16.msra.mxu0 0
        %730 = vmatpush.bf16.msra.mxu0 0
        %731 = vmatpush.bf16.msra.mxu0 0
        %732 = vmatpush.bf16.msra.mxu0 %v708
        %733 = vmatpush.bf16.msra.mxu0 %v707
        %734 = vmatmul.bf16.gmra.mxu0 %v715
        %v735 = vpop.f32.mrf.mxu0
        %v736 = vadd.f32 %v711, %v735
        %v737 = vpop.f32.mrf.mxu0
        %v738 = vadd.f32 %v711, %v737
        %739 = vmatmul.bf16.gmra.mxu0 %v718
        %v740 = vpop.f32.mrf.mxu0
        %v741 = vadd.f32 %v711, %v740
        %v742 = vpop.f32.mrf.mxu0
        %v743 = vadd.f32 %v711, %v742
        %744 = vmatmul.bf16.gmra.mxu0 %v721
        %v745 = vpop.f32.mrf.mxu0
        %v746 = vadd.f32 %v711, %v745
        %v747 = vpop.f32.mrf.mxu0
        %v748 = vadd.f32 %v711, %v747
        %749 = vmatmul.bf16.gmra.mxu0 %v724
        %v750 = vpop.f32.mrf.mxu0
        %v751 = vadd.f32 %v711, %v750
        %v752 = vpop.f32.mrf.mxu0
        %v753 = vadd.f32 %v711, %v752
        %754 = vdwg.mxu0
        %v755 = vld [vmem:[%s5] sm:$0xff]
        %v756 = vld [vmem:[%s5 + $0x8] sm:$0xff]
        %v757 = vld [vmem:[%s5 + $0x10] sm:$0xff]
        %v758 = vld [vmem:[%s5 + $0x18] sm:$0xff]
        %v759 = vld [vmem:[%s5 + $0x20] sm:$0xff]
        %v760 = vld [vmem:[%s5 + $0x28] sm:$0xff]
        %v761 = vld [vmem:[%s5 + $0x30] sm:$0xff]
        %v762 = vld [vmem:[%s5 + $0x38] sm:$0xff]
        %v763 = vadd.f32 %v736, %v755
        %v764 = vadd.f32 %v738, %v756
        %v765 = vadd.f32 %v741, %v757
        %v766 = vadd.f32 %v743, %v758
        %v767 = vadd.f32 %v746, %v759
        %v768 = vadd.f32 %v748, %v760
        %v769 = vadd.f32 %v751, %v761
        %v770 = vadd.f32 %v753, %v762
        %v771 = vld [vmem:[#allocation4] sm:$0xff]
        %v772 = vld [vmem:[#allocation4 + $0x8] sm:$0xff]
        %v773 = vld [vmem:[%s7] sm:$0x1]
        %v774 = vld [vmem:[%s8] sm:$0x1]
        %v775 = vsel %vm713, %v763, 0.0
        %776 = vadd.xlane.f32.xlu0 %v775
        %v777 = vpop.xlane.xlu0 %776
        %v778 = vsel %vm713, %v764, 0.0
        %779 = vadd.xlane.f32.xlu0 %v778
        %v780 = vpop.xlane.xlu0 %779
        %v781 = vsel %vm713, %v765, 0.0
        %782 = vadd.xlane.f32.xlu0 %v781
        %v783 = vpop.xlane.xlu0 %782
        %v784 = vsel %vm713, %v766, 0.0
        %785 = vadd.xlane.f32.xlu0 %v784
        %v786 = vpop.xlane.xlu0 %785
        %v787 = vsel %vm713, %v767, 0.0
        %788 = vadd.xlane.f32.xlu0 %v787
        %v789 = vpop.xlane.xlu0 %788
        %v790 = vsel %vm713, %v768, 0.0
        %791 = vadd.xlane.f32.xlu0 %v790
        %v792 = vpop.xlane.xlu0 %791
        %v793 = vsel %vm713, %v769, 0.0
        %794 = vadd.xlane.f32.xlu0 %v793
        %v795 = vpop.xlane.xlu0 %794
        %v796 = vsel %vm713, %v770, 0.0
        %797 = vadd.xlane.f32.xlu0 %v796
        %v798 = vpop.xlane.xlu0 %797
        %v799 = vsel %vm713, %v771, 0.0
        %800 = vadd.xlane.f32.xlu0 %v799
        %v801 = vpop.xlane.xlu0 %800
        %v802 = vsel %vm713, %v772, 0.0
        %803 = vadd.xlane.f32.xlu0 %v802
        %v804 = vpop.xlane.xlu0 %803
        %v805 = vrcp.pop 32.0
        %v806 = vmul.f32 32.0, %v805
        %v807 = vsub.f32 1.0, %v806
        %v808 = vmul.f32 %v805, %v807
        %v809 = vadd.f32 %v805, %v808
        %vm810 = vweird.f32 %v805
        %v811 = vsel %vm810, %v805, %v809
        %v812 = vmul.f32 %v777, %v811
        %v813 = vmul.f32 %v780, %v811
        %v814 = vmul.f32 %v783, %v811
        %v815 = vmul.f32 %v786, %v811
        %v816 = vmul.f32 %v789, %v811
        %v817 = vmul.f32 %v792, %v811
        %v818 = vmul.f32 %v795, %v811
        %v819 = vmul.f32 %v798, %v811
        %v820 = vmul.f32 %v801, %v811
        %v821 = vmul.f32 %v804, %v811
        %v822 = vsub.f32 %v763, %v812
        %v823 = vsub.f32 %v764, %v813
        %v824 = vsub.f32 %v765, %v814
        %v825 = vsub.f32 %v766, %v815
        %v826 = vsub.f32 %v767, %v816
        %v827 = vsub.f32 %v768, %v817
        %v828 = vsub.f32 %v769, %v818
        %v829 = vsub.f32 %v770, %v819
        %v830 = vsub.f32 %v771, %v820
        %v831 = vsub.f32 %v772, %v821
        %v832 = vmul.f32 %v822, %v822
        %v833 = vmul.f32 %v823, %v823
        %v834 = vmul.f32 %v824, %v824
        %v835 = vmul.f32 %v825, %v825
        %v836 = vmul.f32 %v826, %v826
        %v837 = vmul.f32 %v827, %v827
        %v838 = vmul.f32 %v828, %v828
        %v839 = vmul.f32 %v829, %v829
        %v840 = vmul.f32 %v830, %v830
        %v841 = vmul.f32 %v831, %v831
        %v842 = vsel %vm713, %v832, 0.0
        %843 = vadd.xlane.f32.xlu0 %v842
        %v844 = vpop.xlane.xlu0 %843
        %v845 = vsel %vm713, %v833, 0.0
        %846 = vadd.xlane.f32.xlu0 %v845
        %v847 = vpop.xlane.xlu0 %846
        %v848 = vsel %vm713, %v834, 0.0
        %849 = vadd.xlane.f32.xlu0 %v848
        %v850 = vpop.xlane.xlu0 %849
        %v851 = vsel %vm713, %v835, 0.0
        %852 = vadd.xlane.f32.xlu0 %v851
        %v853 = vpop.xlane.xlu0 %852
        %v854 = vsel %vm713, %v836, 0.0
        %855 = vadd.xlane.f32.xlu0 %v854
        %v856 = vpop.xlane.xlu0 %855
        %v857 = vsel %vm713, %v837, 0.0
        %858 = vadd.xlane.f32.xlu0 %v857
        %v859 = vpop.xlane.xlu0 %858
        %v860 = vsel %vm713, %v838, 0.0
        %861 = vadd.xlane.f32.xlu0 %v860
        %v862 = vpop.xlane.xlu0 %861
        %v863 = vsel %vm713, %v839, 0.0
        %864 = vadd.xlane.f32.xlu0 %v863
        %v865 = vpop.xlane.xlu0 %864
        %v866 = vsel %vm713, %v840, 0.0
        %867 = vadd.xlane.f32.xlu0 %v866
        %v868 = vpop.xlane.xlu0 %867
        %v869 = vsel %vm713, %v841, 0.0
        %870 = vadd.xlane.f32.xlu0 %v869
        %v871 = vpop.xlane.xlu0 %870
        %v872 = vmul.f32 %v844, %v811
        %v873 = vmul.f32 %v847, %v811
        %v874 = vmul.f32 %v850, %v811
        %v875 = vmul.f32 %v853, %v811
        %v876 = vmul.f32 %v856, %v811
        %v877 = vmul.f32 %v859, %v811
        %v878 = vmul.f32 %v862, %v811
        %v879 = vmul.f32 %v865, %v811
        %v880 = vmul.f32 %v868, %v811
        %v881 = vmul.f32 %v871, %v811
        %v882 = vadd.f32 %v872, 1e-05
        %v883 = vadd.f32 %v873, 1e-05
        %v884 = vadd.f32 %v874, 1e-05
        %v885 = vadd.f32 %v875, 1e-05
        %v886 = vadd.f32 %v876, 1e-05
        %v887 = vadd.f32 %v877, 1e-05
        %v888 = vadd.f32 %v878, 1e-05
        %v889 = vadd.f32 %v879, 1e-05
        %v890 = vadd.f32 %v880, 1e-05
        %v891 = vadd.f32 %v881, 1e-05
        %v892 = vrsqrt.pop %v882
        %v893 = vmul.f32 %v892, %v882
        %v894 = vmul.f32 %v893, %v892
        %v895 = vmul.f32 0.5, %v894
        %v896 = vsub.f32 1.5, %v895
        %v897 = vmul.f32 %v892, %v896
        %vm898 = vweird.f32 %v882
        %vm899 = vweird.f32 %v892
        %vm900 = vmor %vm898, %vm899
        %v901 = vsel %vm900, %v892, %v897
        %v902 = vrsqrt.pop %v883
        %v903 = vmul.f32 %v902, %v883
        %v904 = vmul.f32 %v903, %v902
        %v905 = vmul.f32 0.5, %v904
        %v906 = vsub.f32 1.5, %v905
        %v907 = vmul.f32 %v902, %v906
        %vm908 = vweird.f32 %v883
        %vm909 = vweird.f32 %v902
        %vm910 = vmor %vm908, %vm909
        %v911 = vsel %vm910, %v902, %v907
        %v912 = vrsqrt.pop %v884
        %v913 = vmul.f32 %v912, %v884
        %v914 = vmul.f32 %v913, %v912
        %v915 = vmul.f32 0.5, %v914
        %v916 = vsub.f32 1.5, %v915
        %v917 = vmul.f32 %v912, %v916
        %vm918 = vweird.f32 %v884
        %vm919 = vweird.f32 %v912
        %vm920 = vmor %vm918, %vm919
        %v921 = vsel %vm920, %v912, %v917
        %v922 = vrsqrt.pop %v885
        %v923 = vmul.f32 %v922, %v885
        %v924 = vmul.f32 %v923, %v922
        %v925 = vmul.f32 0.5, %v924
        %v926 = vsub.f32 1.5, %v925
        %v927 = vmul.f32 %v922, %v926
        %vm928 = vweird.f32 %v885
        %vm929 = vweird.f32 %v922
        %vm930 = vmor %vm928, %vm929
        %v931 = vsel %vm930, %v922, %v927
        %v932 = vrsqrt.pop %v886
        %v933 = vmul.f32 %v932, %v886
        %v934 = vmul.f32 %v933, %v932
        %v935 = vmul.f32 0.5, %v934
        %v936 = vsub.f32 1.5, %v935
        %v937 = vmul.f32 %v932, %v936
        %vm938 = vweird.f32 %v886
        %vm939 = vweird.f32 %v932
        %vm940 = vmor %vm938, %vm939
        %v941 = vsel %vm940, %v932, %v937
        %v942 = vrsqrt.pop %v887
        %v943 = vmul.f32 %v942, %v887
        %v944 = vmul.f32 %v943, %v942
        %v945 = vmul.f32 0.5, %v944
        %v946 = vsub.f32 1.5, %v945
        %v947 = vmul.f32 %v942, %v946
        %vm948 = vweird.f32 %v887
        %vm949 = vweird.f32 %v942
        %vm950 = vmor %vm948, %vm949
        %v951 = vsel %vm950, %v942, %v947
        %v952 = vrsqrt.pop %v888
        %v953 = vmul.f32 %v952, %v888
        %v954 = vmul.f32 %v953, %v952
        %v955 = vmul.f32 0.5, %v954
        %v956 = vsub.f32 1.5, %v955
        %v957 = vmul.f32 %v952, %v956
        %vm958 = vweird.f32 %v888
        %vm959 = vweird.f32 %v952
        %vm960 = vmor %vm958, %vm959
        %v961 = vsel %vm960, %v952, %v957
        %v962 = vrsqrt.pop %v889
        %v963 = vmul.f32 %v962, %v889
        %v964 = vmul.f32 %v963, %v962
        %v965 = vmul.f32 0.5, %v964
        %v966 = vsub.f32 1.5, %v965
        %v967 = vmul.f32 %v962, %v966
        %vm968 = vweird.f32 %v889
        %vm969 = vweird.f32 %v962
        %vm970 = vmor %vm968, %vm969
        %v971 = vsel %vm970, %v962, %v967
        %v972 = vrsqrt.pop %v890
        %v973 = vmul.f32 %v972, %v890
        %v974 = vmul.f32 %v973, %v972
        %v975 = vmul.f32 0.5, %v974
        %v976 = vsub.f32 1.5, %v975
        %v977 = vmul.f32 %v972, %v976
        %vm978 = vweird.f32 %v890
        %vm979 = vweird.f32 %v972
        %vm980 = vmor %vm978, %vm979
        %v981 = vsel %vm980, %v972, %v977
        %v982 = vrsqrt.pop %v891
        %v983 = vmul.f32 %v982, %v891
        %v984 = vmul.f32 %v983, %v982
        %v985 = vmul.f32 0.5, %v984
        %v986 = vsub.f32 1.5, %v985
        %v987 = vmul.f32 %v982, %v986
        %vm988 = vweird.f32 %v891
        %vm989 = vweird.f32 %v982
        %vm990 = vmor %vm988, %vm989
        %v991 = vsel %vm990, %v982, %v987
        %v992 = vmul.f32 %v822, %v901
        %v993 = vmul.f32 %v823, %v911
        %v994 = vmul.f32 %v824, %v921
        %v995 = vmul.f32 %v825, %v931
        %v996 = vmul.f32 %v826, %v941
        %v997 = vmul.f32 %v827, %v951
        %v998 = vmul.f32 %v828, %v961
        %v999 = vmul.f32 %v829, %v971
        %v1000 = vmul.f32 %v830, %v981
        %v1001 = vmul.f32 %v831, %v991
        %v1003 = vperm.slane %v773, 0
        %v1005 = vmul.f32 %v992, %v1003
        %v1006 = vmul.f32 %v993, %v1003
        %v1007 = vmul.f32 %v994, %v1003
        %v1008 = vmul.f32 %v995, %v1003
        %v1009 = vmul.f32 %v996, %v1003
        %v1010 = vmul.f32 %v997, %v1003
        %v1011 = vmul.f32 %v998, %v1003
        %v1012 = vmul.f32 %v999, %v1003
        %v1013 = vmul.f32 %v1000, %v1003
        %v1014 = vmul.f32 %v1001, %v1003
        %v1016 = vperm.slane %v774, 0
        %v1018 = vadd.f32 %v1005, %v1016
        %v1019 = vadd.f32 %v1006, %v1016
        %v1020 = vadd.f32 %v1007, %v1016
        %v1021 = vadd.f32 %v1008, %v1016
        %v1022 = vadd.f32 %v1009, %v1016
        %v1023 = vadd.f32 %v1010, %v1016
        %v1024 = vadd.f32 %v1011, %v1016
        %v1025 = vadd.f32 %v1012, %v1016
        %v1026 = vadd.f32 %v1013, %v1016
        %v1027 = vadd.f32 %v1014, %v1016
        %v1028 = vld [vmem:[%s9] sm:$0xff]
        %v1029 = vld [vmem:[%s9 + $0x8] sm:$0xff]
        %v1030 = vld [vmem:[%s9 + $0x10] sm:$0xff]
        %v1031 = vld [vmem:[%s9 + $0x18] sm:$0xff]
        %v1032 = vpack.c.bf16 %v1019, %v1018
        %v1033 = vpack.c.bf16 %v1021, %v1020
        %v1034 = vpack.c.bf16 %v1023, %v1022
        %v1035 = vpack.c.bf16 %v1025, %v1024
        %v1036 = vpack.c.bf16 %v1027, %v1026
        %v1037 = vpack.c.bf16 %v1029, %v1028
        %v1038 = vpack.c.bf16 %v1031, %v1030
        %v1039 = vld [vmem:[%s10] sm:$0x1]
        %v1041 = vperm.slane %v1039, 0
        %v1044 = vsel %vm713, %v1032, 0
        %v1047 = vsel %vm713, %v1033, 0
        %v1050 = vsel %vm713, %v1034, 0
        %v1053 = vsel %vm713, %v1035, 0
        %v1056 = vsel %vm713, %v1036, 0
        %1058 = vmatpush.bf16.msra.mxu0 0
        %1059 = vmatpush.bf16.msra.mxu0 0
        %1060 = vmatpush.bf16.msra.mxu0 0
        %1061 = vmatpush.bf16.msra.mxu0 0
        %1062 = vmatpush.bf16.msra.mxu0 0
        %1063 = vmatpush.bf16.msra.mxu0 0
        %1064 = vmatpush.bf16.msra.mxu0 %v1038
        %1065 = vmatpush.bf16.msra.mxu0 %v1037
        %1066 = vmatmul.bf16.gmra.mxu0 %v1044
        %v1067 = vpop.f32.mrf.mxu0
        %v1068 = vadd.f32 %v1041, %v1067
        %v1069 = vpop.f32.mrf.mxu0
        %v1070 = vadd.f32 %v1041, %v1069
        %1071 = vmatmul.bf16.gmra.mxu0 %v1047
        %v1072 = vpop.f32.mrf.mxu0
        %v1073 = vadd.f32 %v1041, %v1072
        %v1074 = vpop.f32.mrf.mxu0
        %v1075 = vadd.f32 %v1041, %v1074
        %1076 = vmatmul.bf16.gmra.mxu0 %v1050
        %v1077 = vpop.f32.mrf.mxu0
        %v1078 = vadd.f32 %v1041, %v1077
        %v1079 = vpop.f32.mrf.mxu0
        %v1080 = vadd.f32 %v1041, %v1079
        %1081 = vmatmul.bf16.gmra.mxu0 %v1053
        %v1082 = vpop.f32.mrf.mxu0
        %v1083 = vadd.f32 %v1041, %v1082
        %v1084 = vpop.f32.mrf.mxu0
        %v1085 = vadd.f32 %v1041, %v1084
        %1086 = vmatmul.bf16.gmra.mxu0 %v1056
        %v1087 = vpop.f32.mrf.mxu0
        %v1088 = vadd.f32 %v1041, %v1087
        %v1089 = vpop.f32.mrf.mxu0
        %v1090 = vadd.f32 %v1041, %v1089
        %1091 = vdwg.mxu0
        %v1092 = vpack.c.bf16 %v1070, %v1068
        %v1093 = vpack.c.bf16 %v1075, %v1073
        %v1094 = vpack.c.bf16 %v1080, %v1078
        %v1095 = vpack.c.bf16 %v1085, %v1083
        %v1096 = vpack.c.bf16 %v1090, %v1088
        %1102 = vrot.lane.b32.xlu0 %v1092, 96
        %v1103 = vpop.permute.xlu0 %1102
        %1104 = vrot.lane.b32.xlu0 %v1093, 96
        %v1105 = vpop.permute.xlu0 %1104
        %1106 = vrot.lane.b32.xlu0 %v1094, 96
        %v1107 = vpop.permute.xlu0 %1106
        %1108 = vrot.lane.b32.xlu0 %v1095, 96
        %v1109 = vpop.permute.xlu0 %1108
        %1110 = vrot.lane.b32.xlu0 %v1096, 96
        %v1111 = vpop.permute.xlu0 %1110
        %vm1112 = vcmask 64512
        %v1114 = vsel %vm1112, %v1092, 0
        %v1117 = vsel %vm1112, %v1093, 0
        %v1120 = vsel %vm1112, %v1094, 0
        %v1123 = vsel %vm1112, %v1095, 0
        %v1126 = vsel %vm1112, %v1096, 0
        %v1129 = vsel %vm1112, %v1103, 0
        %v1132 = vsel %vm1112, %v1105, 0
        %v1135 = vsel %vm1112, %v1107, 0
        %v1138 = vsel %vm1112, %v1109, 0
        %v1141 = vsel %vm1112, %v1111, 0
        %1143 = vmatpush.bf16.xpose.msra.mxu0 0
        %1144 = vmatpush.bf16.xpose.msra.mxu0 0
        %1145 = vmatpush.bf16.xpose.msra.mxu0 0
        %1146 = vmatpush.bf16.xpose.msra.mxu0 %v1141
        %1147 = vmatpush.bf16.xpose.msra.mxu0 %v1138
        %1148 = vmatpush.bf16.xpose.msra.mxu0 %v1135
        %1149 = vmatpush.bf16.xpose.msra.mxu0 %v1132
        %1150 = vmatpush.bf16.xpose.msra.mxu0 %v1129
        %1151 = vmatmul.bf16.gmra.mxu0 %v1114
        %v1152 = vpop.f32.mrf.mxu0
        %v1153 = vadd.f32 0.0, %v1152
        %v1154 = vpop.f32.mrf.mxu0
        %v1155 = vadd.f32 0.0, %v1154
        %1156 = vmatmul.bf16.gmra.mxu0 %v1117
        %v1157 = vpop.f32.mrf.mxu0
        %v1158 = vadd.f32 0.0, %v1157
        %v1159 = vpop.f32.mrf.mxu0
        %v1160 = vadd.f32 0.0, %v1159
        %1161 = vmatmul.bf16.gmra.mxu0 %v1120
        %v1162 = vpop.f32.mrf.mxu0
        %v1163 = vadd.f32 0.0, %v1162
        %v1164 = vpop.f32.mrf.mxu0
        %v1165 = vadd.f32 0.0, %v1164
        %1166 = vmatmul.bf16.gmra.mxu0 %v1123
        %v1167 = vpop.f32.mrf.mxu0
        %v1168 = vadd.f32 0.0, %v1167
        %v1169 = vpop.f32.mrf.mxu0
        %v1170 = vadd.f32 0.0, %v1169
        %1171 = vmatmul.bf16.gmra.mxu0 %v1126
        %v1172 = vpop.f32.mrf.mxu0
        %v1173 = vadd.f32 0.0, %v1172
        %v1174 = vpop.f32.mrf.mxu0
        %v1175 = vadd.f32 0.0, %v1174
        %1176 = vdwg.mxu0
        %vm1177 = vcmask 654336
        %v1178 = vsel %vm1177, %v1153, -inf
        %1179 = vmax.xlane.f32.xlu0 %v1178
        %v1180 = vpop.xlane.xlu0 %1179
        %v1181 = vsel %vm1177, %v1155, -inf
        %1182 = vmax.xlane.f32.xlu0 %v1181
        %v1183 = vpop.xlane.xlu0 %1182
        %v1184 = vsel %vm1177, %v1158, -inf
        %1185 = vmax.xlane.f32.xlu0 %v1184
        %v1186 = vpop.xlane.xlu0 %1185
        %v1187 = vsel %vm1177, %v1160, -inf
        %1188 = vmax.xlane.f32.xlu0 %v1187
        %v1189 = vpop.xlane.xlu0 %1188
        %v1190 = vsel %vm1177, %v1163, -inf
        %1191 = vmax.xlane.f32.xlu0 %v1190
        %v1192 = vpop.xlane.xlu0 %1191
        %v1193 = vsel %vm1177, %v1165, -inf
        %1194 = vmax.xlane.f32.xlu0 %v1193
        %v1195 = vpop.xlane.xlu0 %1194
        %v1196 = vsel %vm1177, %v1168, -inf
        %1197 = vmax.xlane.f32.xlu0 %v1196
        %v1198 = vpop.xlane.xlu0 %1197
        %v1199 = vsel %vm1177, %v1170, -inf
        %1200 = vmax.xlane.f32.xlu0 %v1199
        %v1201 = vpop.xlane.xlu0 %1200
        %v1202 = vsel %vm1177, %v1173, -inf
        %1203 = vmax.xlane.f32.xlu0 %v1202
        %v1204 = vpop.xlane.xlu0 %1203
        %v1205 = vsel %vm1177, %v1175, -inf
        %1206 = vmax.xlane.f32.xlu0 %v1205
        %v1207 = vpop.xlane.xlu0 %1206
        %v1208 = vsub.f32 %v1153, %v1180
        %v1209 = vsub.f32 %v1155, %v1183
        %v1210 = vsub.f32 %v1158, %v1186
        %v1211 = vsub.f32 %v1160, %v1189
        %v1212 = vsub.f32 %v1163, %v1192
        %v1213 = vsub.f32 %v1165, %v1195
        %v1214 = vsub.f32 %v1168, %v1198
        %v1215 = vsub.f32 %v1170, %v1201
        %v1216 = vsub.f32 %v1173, %v1204
        %v1217 = vsub.f32 %v1175, %v1207
        %v1218 = vmul.f32 %v1208, 1.442695
        %v1219 = vpow.pop %v1218
        %v1220 = vmul.f32 %v1209, 1.442695
        %v1221 = vpow.pop %v1220
        %v1222 = vmul.f32 %v1210, 1.442695
        %v1223 = vpow.pop %v1222
        %v1224 = vmul.f32 %v1211, 1.442695
        %v1225 = vpow.pop %v1224
        %v1226 = vmul.f32 %v1212, 1.442695
        %v1227 = vpow.pop %v1226
        %v1228 = vmul.f32 %v1213, 1.442695
        %v1229 = vpow.pop %v1228
        %v1230 = vmul.f32 %v1214, 1.442695
        %v1231 = vpow.pop %v1230
        %v1232 = vmul.f32 %v1215, 1.442695
        %v1233 = vpow.pop %v1232
        %v1234 = vmul.f32 %v1216, 1.442695
        %v1235 = vpow.pop %v1234
        %v1236 = vmul.f32 %v1217, 1.442695
        %v1237 = vpow.pop %v1236
        %v1238 = vsel %vm1177, %v1219, 0.0
        %1239 = vadd.xlane.f32.xlu0 %v1238
        %v1240 = vpop.xlane.xlu0 %1239
        %v1241 = vsel %vm1177, %v1221, 0.0
        %1242 = vadd.xlane.f32.xlu0 %v1241
        %v1243 = vpop.xlane.xlu0 %1242
        %v1244 = vsel %vm1177, %v1223, 0.0
        %1245 = vadd.xlane.f32.xlu0 %v1244
        %v1246 = vpop.xlane.xlu0 %1245
        %v1247 = vsel %vm1177, %v1225, 0.0
        %1248 = vadd.xlane.f32.xlu0 %v1247
        %v1249 = vpop.xlane.xlu0 %1248
        %v1250 = vsel %vm1177, %v1227, 0.0
        %1251 = vadd.xlane.f32.xlu0 %v1250
        %v1252 = vpop.xlane.xlu0 %1251
        %v1253 = vsel %vm1177, %v1229, 0.0
        %1254 = vadd.xlane.f32.xlu0 %v1253
        %v1255 = vpop.xlane.xlu0 %1254
        %v1256 = vsel %vm1177, %v1231, 0.0
        %1257 = vadd.xlane.f32.xlu0 %v1256
        %v1258 = vpop.xlane.xlu0 %1257
        %v1259 = vsel %vm1177, %v1233, 0.0
        %1260 = vadd.xlane.f32.xlu0 %v1259
        %v1261 = vpop.xlane.xlu0 %1260
        %v1262 = vsel %vm1177, %v1235, 0.0
        %1263 = vadd.xlane.f32.xlu0 %v1262
        %v1264 = vpop.xlane.xlu0 %1263
        %v1265 = vsel %vm1177, %v1237, 0.0
        %1266 = vadd.xlane.f32.xlu0 %v1265
        %v1267 = vpop.xlane.xlu0 %1266
        %v1268 = vrcp.pop %v1240
        %v1269 = vmul.f32 %v1240, %v1268
        %v1270 = vsub.f32 1.0, %v1269
        %v1271 = vmul.f32 %v1268, %v1270
        %v1272 = vadd.f32 %v1268, %v1271
        %vm1273 = vweird.f32 %v1240
        %vm1274 = vweird.f32 %v1268
        %vm1275 = vmor %vm1273, %vm1274
        %v1276 = vsel %vm1275, %v1268, %v1272
        %v1277 = vand.u32 2147483647, %v1240
        %vm1278 = vcmp.eq.f32.partialorder %v1277, 8.507059e+37
        %v1279 = vand.u32 %v1240, 2147483648
        %v1280 = vor.u32 1.1754944e-38, %v1279
        %v1281 = vsel %vm1278, %v1280, %v1276
        %v1282 = vmul.f32 %v1219, %v1281
        %v1283 = vrcp.pop %v1243
        %v1284 = vmul.f32 %v1243, %v1283
        %v1285 = vsub.f32 1.0, %v1284
        %v1286 = vmul.f32 %v1283, %v1285
        %v1287 = vadd.f32 %v1283, %v1286
        %vm1288 = vweird.f32 %v1243
        %vm1289 = vweird.f32 %v1283
        %vm1290 = vmor %vm1288, %vm1289
        %v1291 = vsel %vm1290, %v1283, %v1287
        %v1292 = vand.u32 2147483647, %v1243
        %vm1293 = vcmp.eq.f32.partialorder %v1292, 8.507059e+37
        %v1294 = vand.u32 %v1243, 2147483648
        %v1295 = vor.u32 1.1754944e-38, %v1294
        %v1296 = vsel %vm1293, %v1295, %v1291
        %v1297 = vmul.f32 %v1221, %v1296
        %v1298 = vrcp.pop %v1246
        %v1299 = vmul.f32 %v1246, %v1298
        %v1300 = vsub.f32 1.0, %v1299
        %v1301 = vmul.f32 %v1298, %v1300
        %v1302 = vadd.f32 %v1298, %v1301
        %vm1303 = vweird.f32 %v1246
        %vm1304 = vweird.f32 %v1298
        %vm1305 = vmor %vm1303, %vm1304
        %v1306 = vsel %vm1305, %v1298, %v1302
        %v1307 = vand.u32 2147483647, %v1246
        %vm1308 = vcmp.eq.f32.partialorder %v1307, 8.507059e+37
        %v1309 = vand.u32 %v1246, 2147483648
        %v1310 = vor.u32 1.1754944e-38, %v1309
        %v1311 = vsel %vm1308, %v1310, %v1306
        %v1312 = vmul.f32 %v1223, %v1311
        %v1313 = vrcp.pop %v1249
        %v1314 = vmul.f32 %v1249, %v1313
        %v1315 = vsub.f32 1.0, %v1314
        %v1316 = vmul.f32 %v1313, %v1315
        %v1317 = vadd.f32 %v1313, %v1316
        %vm1318 = vweird.f32 %v1249
        %vm1319 = vweird.f32 %v1313
        %vm1320 = vmor %vm1318, %vm1319
        %v1321 = vsel %vm1320, %v1313, %v1317
        %v1322 = vand.u32 2147483647, %v1249
        %vm1323 = vcmp.eq.f32.partialorder %v1322, 8.507059e+37
        %v1324 = vand.u32 %v1249, 2147483648
        %v1325 = vor.u32 1.1754944e-38, %v1324
        %v1326 = vsel %vm1323, %v1325, %v1321
        %v1327 = vmul.f32 %v1225, %v1326
        %v1328 = vrcp.pop %v1252
        %v1329 = vmul.f32 %v1252, %v1328
        %v1330 = vsub.f32 1.0, %v1329
        %v1331 = vmul.f32 %v1328, %v1330
        %v1332 = vadd.f32 %v1328, %v1331
        %vm1333 = vweird.f32 %v1252
        %vm1334 = vweird.f32 %v1328
        %vm1335 = vmor %vm1333, %vm1334
        %v1336 = vsel %vm1335, %v1328, %v1332
        %v1337 = vand.u32 2147483647, %v1252
        %vm1338 = vcmp.eq.f32.partialorder %v1337, 8.507059e+37
        %v1339 = vand.u32 %v1252, 2147483648
        %v1340 = vor.u32 1.1754944e-38, %v1339
        %v1341 = vsel %vm1338, %v1340, %v1336
        %v1342 = vmul.f32 %v1227, %v1341
        %v1343 = vrcp.pop %v1255
        %v1344 = vmul.f32 %v1255, %v1343
        %v1345 = vsub.f32 1.0, %v1344
        %v1346 = vmul.f32 %v1343, %v1345
        %v1347 = vadd.f32 %v1343, %v1346
        %vm1348 = vweird.f32 %v1255
        %vm1349 = vweird.f32 %v1343
        %vm1350 = vmor %vm1348, %vm1349
        %v1351 = vsel %vm1350, %v1343, %v1347
        %v1352 = vand.u32 2147483647, %v1255
        %vm1353 = vcmp.eq.f32.partialorder %v1352, 8.507059e+37
        %v1354 = vand.u32 %v1255, 2147483648
        %v1355 = vor.u32 1.1754944e-38, %v1354
        %v1356 = vsel %vm1353, %v1355, %v1351
        %v1357 = vmul.f32 %v1229, %v1356
        %v1358 = vrcp.pop %v1258
        %v1359 = vmul.f32 %v1258, %v1358
        %v1360 = vsub.f32 1.0, %v1359
        %v1361 = vmul.f32 %v1358, %v1360
        %v1362 = vadd.f32 %v1358, %v1361
        %vm1363 = vweird.f32 %v1258
        %vm1364 = vweird.f32 %v1358
        %vm1365 = vmor %vm1363, %vm1364
        %v1366 = vsel %vm1365, %v1358, %v1362
        %v1367 = vand.u32 2147483647, %v1258
        %vm1368 = vcmp.eq.f32.partialorder %v1367, 8.507059e+37
        %v1369 = vand.u32 %v1258, 2147483648
        %v1370 = vor.u32 1.1754944e-38, %v1369
        %v1371 = vsel %vm1368, %v1370, %v1366
        %v1372 = vmul.f32 %v1231, %v1371
        %v1373 = vrcp.pop %v1261
        %v1374 = vmul.f32 %v1261, %v1373
        %v1375 = vsub.f32 1.0, %v1374
        %v1376 = vmul.f32 %v1373, %v1375
        %v1377 = vadd.f32 %v1373, %v1376
        %vm1378 = vweird.f32 %v1261
        %vm1379 = vweird.f32 %v1373
        %vm1380 = vmor %vm1378, %vm1379
        %v1381 = vsel %vm1380, %v1373, %v1377
        %v1382 = vand.u32 2147483647, %v1261
        %vm1383 = vcmp.eq.f32.partialorder %v1382, 8.507059e+37
        %v1384 = vand.u32 %v1261, 2147483648
        %v1385 = vor.u32 1.1754944e-38, %v1384
        %v1386 = vsel %vm1383, %v1385, %v1381
        %v1387 = vmul.f32 %v1233, %v1386
        %v1388 = vrcp.pop %v1264
        %v1389 = vmul.f32 %v1264, %v1388
        %v1390 = vsub.f32 1.0, %v1389
        %v1391 = vmul.f32 %v1388, %v1390
        %v1392 = vadd.f32 %v1388, %v1391
        %vm1393 = vweird.f32 %v1264
        %vm1394 = vweird.f32 %v1388
        %vm1395 = vmor %vm1393, %vm1394
        %v1396 = vsel %vm1395, %v1388, %v1392
        %v1397 = vand.u32 2147483647, %v1264
        %vm1398 = vcmp.eq.f32.partialorder %v1397, 8.507059e+37
        %v1399 = vand.u32 %v1264, 2147483648
        %v1400 = vor.u32 1.1754944e-38, %v1399
        %v1401 = vsel %vm1398, %v1400, %v1396
        %v1402 = vmul.f32 %v1235, %v1401
        %v1403 = vrcp.pop %v1267
        %v1404 = vmul.f32 %v1267, %v1403
        %v1405 = vsub.f32 1.0, %v1404
        %v1406 = vmul.f32 %v1403, %v1405
        %v1407 = vadd.f32 %v1403, %v1406
        %vm1408 = vweird.f32 %v1267
        %vm1409 = vweird.f32 %v1403
        %vm1410 = vmor %vm1408, %vm1409
        %v1411 = vsel %vm1410, %v1403, %v1407
        %v1412 = vand.u32 2147483647, %v1267
        %vm1413 = vcmp.eq.f32.partialorder %v1412, 8.507059e+37
        %v1414 = vand.u32 %v1267, 2147483648
        %v1415 = vor.u32 1.1754944e-38, %v1414
        %v1416 = vsel %vm1413, %v1415, %v1411
        %v1417 = vmul.f32 %v1237, %v1416
        %v1418 = vpack.c.bf16 %v1297, %v1282
        %v1419 = vpack.c.bf16 %v1327, %v1312
        %v1420 = vpack.c.bf16 %v1357, %v1342
        %v1421 = vpack.c.bf16 %v1387, %v1372
        %v1422 = vpack.c.bf16 %v1417, %v1402
        %1423 = vrot.lane.b32.xlu0 %v1092, 64
        %v1424 = vpop.permute.xlu0 %1423
        %1425 = vrot.lane.b32.xlu0 %v1093, 64
        %v1426 = vpop.permute.xlu0 %1425
        %1427 = vrot.lane.b32.xlu0 %v1094, 64
        %v1428 = vpop.permute.xlu0 %1427
        %1429 = vrot.lane.b32.xlu0 %v1095, 64
        %v1430 = vpop.permute.xlu0 %1429
        %1431 = vrot.lane.b32.xlu0 %v1096, 64
        %v1432 = vpop.permute.xlu0 %1431
        %v1439 = vsel %vm1177, %v1418, 0
        %v1442 = vsel %vm1177, %v1419, 0
        %v1445 = vsel %vm1177, %v1420, 0
        %v1448 = vsel %vm1177, %v1421, 0
        %v1451 = vsel %vm1177, %v1422, 0
        %1453 = vmatpush.bf16.msra.mxu0 0
        %1454 = vmatpush.bf16.msra.mxu0 0
        %1455 = vmatpush.bf16.msra.mxu0 0
        %1456 = vmatpush.bf16.msra.mxu0 %v1432
        %1457 = vmatpush.bf16.msra.mxu0 %v1430
        %1458 = vmatpush.bf16.msra.mxu0 %v1428
        %1459 = vmatpush.bf16.msra.mxu0 %v1426
        %1460 = vmatpush.bf16.msra.mxu0 %v1424
        %1461 = vmatmul.bf16.gmra.mxu0 %v1439
        %v1462 = vpop.f32.mrf.mxu0
        %v1463 = vadd.f32 0.0, %v1462
        %v1464 = vpop.f32.mrf.mxu0
        %v1465 = vadd.f32 0.0, %v1464
        %1466 = vmatmul.bf16.gmra.mxu0 %v1442
        %v1467 = vpop.f32.mrf.mxu0
        %v1468 = vadd.f32 0.0, %v1467
        %v1469 = vpop.f32.mrf.mxu0
        %v1470 = vadd.f32 0.0, %v1469
        %1471 = vmatmul.bf16.gmra.mxu0 %v1445
        %v1472 = vpop.f32.mrf.mxu0
        %v1473 = vadd.f32 0.0, %v1472
        %v1474 = vpop.f32.mrf.mxu0
        %v1475 = vadd.f32 0.0, %v1474
        %1476 = vmatmul.bf16.gmra.mxu0 %v1448
        %v1477 = vpop.f32.mrf.mxu0
        %v1478 = vadd.f32 0.0, %v1477
        %v1479 = vpop.f32.mrf.mxu0
        %v1480 = vadd.f32 0.0, %v1479
        %1481 = vmatmul.bf16.gmra.mxu0 %v1451
        %v1482 = vpop.f32.mrf.mxu0
        %v1483 = vadd.f32 0.0, %v1482
        %v1484 = vpop.f32.mrf.mxu0
        %v1485 = vadd.f32 0.0, %v1484
        %1486 = vdwg.mxu0
        %1487 = vrot.lane.b32.xlu0 %v1092, 120
        %v1488 = vpop.permute.xlu0 %1487
        %1489 = vrot.lane.b32.xlu0 %v1093, 120
        %v1490 = vpop.permute.xlu0 %1489
        %1491 = vrot.lane.b32.xlu0 %v1094, 120
        %v1492 = vpop.permute.xlu0 %1491
        %1493 = vrot.lane.b32.xlu0 %v1095, 120
        %v1494 = vpop.permute.xlu0 %1493
        %1495 = vrot.lane.b32.xlu0 %v1096, 120
        %v1496 = vpop.permute.xlu0 %1495
        %1497 = vrot.lane.b32.xlu0 %v1092, 88
        %v1498 = vpop.permute.xlu0 %1497
        %1499 = vrot.lane.b32.xlu0 %v1093, 88
        %v1500 = vpop.permute.xlu0 %1499
        %1501 = vrot.lane.b32.xlu0 %v1094, 88
        %v1502 = vpop.permute.xlu0 %1501
        %1503 = vrot.lane.b32.xlu0 %v1095, 88
        %v1504 = vpop.permute.xlu0 %1503
        %1505 = vrot.lane.b32.xlu0 %v1096, 88
        %v1506 = vpop.permute.xlu0 %1505
        %v1508 = vsel %vm1112, %v1488, 0
        %v1511 = vsel %vm1112, %v1490, 0
        %v1514 = vsel %vm1112, %v1492, 0
        %v1517 = vsel %vm1112, %v1494, 0
        %v1520 = vsel %vm1112, %v1496, 0
        %v1523 = vsel %vm1112, %v1498, 0
        %v1526 = vsel %vm1112, %v1500, 0
        %v1529 = vsel %vm1112, %v1502, 0
        %v1532 = vsel %vm1112, %v1504, 0
        %v1535 = vsel %vm1112, %v1506, 0
        %1537 = vmatpush.bf16.xpose.msra.mxu0 0
        %1538 = vmatpush.bf16.xpose.msra.mxu0 0
        %1539 = vmatpush.bf16.xpose.msra.mxu0 0
        %1540 = vmatpush.bf16.xpose.msra.mxu0 %v1535
        %1541 = vmatpush.bf16.xpose.msra.mxu0 %v1532
        %1542 = vmatpush.bf16.xpose.msra.mxu0 %v1529
        %1543 = vmatpush.bf16.xpose.msra.mxu0 %v1526
        %1544 = vmatpush.bf16.xpose.msra.mxu0 %v1523
        %1545 = vmatmul.bf16.gmra.mxu0 %v1508
        %v1546 = vpop.f32.mrf.mxu0
        %v1547 = vadd.f32 0.0, %v1546
        %v1548 = vpop.f32.mrf.mxu0
        %v1549 = vadd.f32 0.0, %v1548
        %1550 = vmatmul.bf16.gmra.mxu0 %v1511
        %v1551 = vpop.f32.mrf.mxu0
        %v1552 = vadd.f32 0.0, %v1551
        %v1553 = vpop.f32.mrf.mxu0
        %v1554 = vadd.f32 0.0, %v1553
        %1555 = vmatmul.bf16.gmra.mxu0 %v1514
        %v1556 = vpop.f32.mrf.mxu0
        %v1557 = vadd.f32 0.0, %v1556
        %v1558 = vpop.f32.mrf.mxu0
        %v1559 = vadd.f32 0.0, %v1558
        %1560 = vmatmul.bf16.gmra.mxu0 %v1517
        %v1561 = vpop.f32.mrf.mxu0
        %v1562 = vadd.f32 0.0, %v1561
        %v1563 = vpop.f32.mrf.mxu0
        %v1564 = vadd.f32 0.0, %v1563
        %1565 = vmatmul.bf16.gmra.mxu0 %v1520
        %v1566 = vpop.f32.mrf.mxu0
        %v1567 = vadd.f32 0.0, %v1566
        %v1568 = vpop.f32.mrf.mxu0
        %v1569 = vadd.f32 0.0, %v1568
        %1570 = vdwg.mxu0
        %v1571 = vsel %vm1177, %v1547, -inf
        %1572 = vmax.xlane.f32.xlu0 %v1571
        %v1573 = vpop.xlane.xlu0 %1572
        %v1574 = vsel %vm1177, %v1549, -inf
        %1575 = vmax.xlane.f32.xlu0 %v1574
        %v1576 = vpop.xlane.xlu0 %1575
        %v1577 = vsel %vm1177, %v1552, -inf
        %1578 = vmax.xlane.f32.xlu0 %v1577
        %v1579 = vpop.xlane.xlu0 %1578
        %v1580 = vsel %vm1177, %v1554, -inf
        %1581 = vmax.xlane.f32.xlu0 %v1580
        %v1582 = vpop.xlane.xlu0 %1581
        %v1583 = vsel %vm1177, %v1557, -inf
        %1584 = vmax.xlane.f32.xlu0 %v1583
        %v1585 = vpop.xlane.xlu0 %1584
        %v1586 = vsel %vm1177, %v1559, -inf
        %1587 = vmax.xlane.f32.xlu0 %v1586
        %v1588 = vpop.xlane.xlu0 %1587
        %v1589 = vsel %vm1177, %v1562, -inf
        %1590 = vmax.xlane.f32.xlu0 %v1589
        %v1591 = vpop.xlane.xlu0 %1590
        %v1592 = vsel %vm1177, %v1564, -inf
        %1593 = vmax.xlane.f32.xlu0 %v1592
        %v1594 = vpop.xlane.xlu0 %1593
        %v1595 = vsel %vm1177, %v1567, -inf
        %1596 = vmax.xlane.f32.xlu0 %v1595
        %v1597 = vpop.xlane.xlu0 %1596
        %v1598 = vsel %vm1177, %v1569, -inf
        %1599 = vmax.xlane.f32.xlu0 %v1598
        %v1600 = vpop.xlane.xlu0 %1599
        %v1601 = vsub.f32 %v1547, %v1573
        %v1602 = vsub.f32 %v1549, %v1576
        %v1603 = vsub.f32 %v1552, %v1579
        %v1604 = vsub.f32 %v1554, %v1582
        %v1605 = vsub.f32 %v1557, %v1585
        %v1606 = vsub.f32 %v1559, %v1588
        %v1607 = vsub.f32 %v1562, %v1591
        %v1608 = vsub.f32 %v1564, %v1594
        %v1609 = vsub.f32 %v1567, %v1597
        %v1610 = vsub.f32 %v1569, %v1600
        %v1611 = vmul.f32 %v1601, 1.442695
        %v1612 = vpow.pop %v1611
        %v1613 = vmul.f32 %v1602, 1.442695
        %v1614 = vpow.pop %v1613
        %v1615 = vmul.f32 %v1603, 1.442695
        %v1616 = vpow.pop %v1615
        %v1617 = vmul.f32 %v1604, 1.442695
        %v1618 = vpow.pop %v1617
        %v1619 = vmul.f32 %v1605, 1.442695
        %v1620 = vpow.pop %v1619
        %v1621 = vmul.f32 %v1606, 1.442695
        %v1622 = vpow.pop %v1621
        %v1623 = vmul.f32 %v1607, 1.442695
        %v1624 = vpow.pop %v1623
        %v1625 = vmul.f32 %v1608, 1.442695
        %v1626 = vpow.pop %v1625
        %v1627 = vmul.f32 %v1609, 1.442695
        %v1628 = vpow.pop %v1627
        %v1629 = vmul.f32 %v1610, 1.442695
        %v1630 = vpow.pop %v1629
        %v1631 = vsel %vm1177, %v1612, 0.0
        %1632 = vadd.xlane.f32.xlu0 %v1631
        %v1633 = vpop.xlane.xlu0 %1632
        %v1634 = vsel %vm1177, %v1614, 0.0
        %1635 = vadd.xlane.f32.xlu0 %v1634
        %v1636 = vpop.xlane.xlu0 %1635
        %v1637 = vsel %vm1177, %v1616, 0.0
        %1638 = vadd.xlane.f32.xlu0 %v1637
        %v1639 = vpop.xlane.xlu0 %1638
        %v1640 = vsel %vm1177, %v1618, 0.0
        %1641 = vadd.xlane.f32.xlu0 %v1640
        %v1642 = vpop.xlane.xlu0 %1641
        %v1643 = vsel %vm1177, %v1620, 0.0
        %1644 = vadd.xlane.f32.xlu0 %v1643
        %v1645 = vpop.xlane.xlu0 %1644
        %v1646 = vsel %vm1177, %v1622, 0.0
        %1647 = vadd.xlane.f32.xlu0 %v1646
        %v1648 = vpop.xlane.xlu0 %1647
        %v1649 = vsel %vm1177, %v1624, 0.0
        %1650 = vadd.xlane.f32.xlu0 %v1649
        %v1651 = vpop.xlane.xlu0 %1650
        %v1652 = vsel %vm1177, %v1626, 0.0
        %1653 = vadd.xlane.f32.xlu0 %v1652
        %v1654 = vpop.xlane.xlu0 %1653
        %v1655 = vsel %vm1177, %v1628, 0.0
        %1656 = vadd.xlane.f32.xlu0 %v1655
        %v1657 = vpop.xlane.xlu0 %1656
        %v1658 = vsel %vm1177, %v1630, 0.0
        %1659 = vadd.xlane.f32.xlu0 %v1658
        %v1660 = vpop.xlane.xlu0 %1659
        %v1661 = vrcp.pop %v1633
        %v1662 = vmul.f32 %v1633, %v1661
        %v1663 = vsub.f32 1.0, %v1662
        %v1664 = vmul.f32 %v1661, %v1663
        %v1665 = vadd.f32 %v1661, %v1664
        %vm1666 = vweird.f32 %v1633
        %vm1667 = vweird.f32 %v1661
        %vm1668 = vmor %vm1666, %vm1667
        %v1669 = vsel %vm1668, %v1661, %v1665
        %v1670 = vand.u32 2147483647, %v1633
        %vm1671 = vcmp.eq.f32.partialorder %v1670, 8.507059e+37
        %v1672 = vand.u32 %v1633, 2147483648
        %v1673 = vor.u32 1.1754944e-38, %v1672
        %v1674 = vsel %vm1671, %v1673, %v1669
        %v1675 = vmul.f32 %v1612, %v1674
        %v1676 = vrcp.pop %v1636
        %v1677 = vmul.f32 %v1636, %v1676
        %v1678 = vsub.f32 1.0, %v1677
        %v1679 = vmul.f32 %v1676, %v1678
        %v1680 = vadd.f32 %v1676, %v1679
        %vm1681 = vweird.f32 %v1636
        %vm1682 = vweird.f32 %v1676
        %vm1683 = vmor %vm1681, %vm1682
        %v1684 = vsel %vm1683, %v1676, %v1680
        %v1685 = vand.u32 2147483647, %v1636
        %vm1686 = vcmp.eq.f32.partialorder %v1685, 8.507059e+37
        %v1687 = vand.u32 %v1636, 2147483648
        %v1688 = vor.u32 1.1754944e-38, %v1687
        %v1689 = vsel %vm1686, %v1688, %v1684
        %v1690 = vmul.f32 %v1614, %v1689
        %v1691 = vrcp.pop %v1639
        %v1692 = vmul.f32 %v1639, %v1691
        %v1693 = vsub.f32 1.0, %v1692
        %v1694 = vmul.f32 %v1691, %v1693
        %v1695 = vadd.f32 %v1691, %v1694
        %vm1696 = vweird.f32 %v1639
        %vm1697 = vweird.f32 %v1691
        %vm1698 = vmor %vm1696, %vm1697
        %v1699 = vsel %vm1698, %v1691, %v1695
        %v1700 = vand.u32 2147483647, %v1639
        %vm1701 = vcmp.eq.f32.partialorder %v1700, 8.507059e+37
        %v1702 = vand.u32 %v1639, 2147483648
        %v1703 = vor.u32 1.1754944e-38, %v1702
        %v1704 = vsel %vm1701, %v1703, %v1699
        %v1705 = vmul.f32 %v1616, %v1704
        %v1706 = vrcp.pop %v1642
        %v1707 = vmul.f32 %v1642, %v1706
        %v1708 = vsub.f32 1.0, %v1707
        %v1709 = vmul.f32 %v1706, %v1708
        %v1710 = vadd.f32 %v1706, %v1709
        %vm1711 = vweird.f32 %v1642
        %vm1712 = vweird.f32 %v1706
        %vm1713 = vmor %vm1711, %vm1712
        %v1714 = vsel %vm1713, %v1706, %v1710
        %v1715 = vand.u32 2147483647, %v1642
        %vm1716 = vcmp.eq.f32.partialorder %v1715, 8.507059e+37
        %v1717 = vand.u32 %v1642, 2147483648
        %v1718 = vor.u32 1.1754944e-38, %v1717
        %v1719 = vsel %vm1716, %v1718, %v1714
        %v1720 = vmul.f32 %v1618, %v1719
        %v1721 = vrcp.pop %v1645
        %v1722 = vmul.f32 %v1645, %v1721
        %v1723 = vsub.f32 1.0, %v1722
        %v1724 = vmul.f32 %v1721, %v1723
        %v1725 = vadd.f32 %v1721, %v1724
        %vm1726 = vweird.f32 %v1645
        %vm1727 = vweird.f32 %v1721
        %vm1728 = vmor %vm1726, %vm1727
        %v1729 = vsel %vm1728, %v1721, %v1725
        %v1730 = vand.u32 2147483647, %v1645
        %vm1731 = vcmp.eq.f32.partialorder %v1730, 8.507059e+37
        %v1732 = vand.u32 %v1645, 2147483648
        %v1733 = vor.u32 1.1754944e-38, %v1732
        %v1734 = vsel %vm1731, %v1733, %v1729
        %v1735 = vmul.f32 %v1620, %v1734
        %v1736 = vrcp.pop %v1648
        %v1737 = vmul.f32 %v1648, %v1736
        %v1738 = vsub.f32 1.0, %v1737
        %v1739 = vmul.f32 %v1736, %v1738
        %v1740 = vadd.f32 %v1736, %v1739
        %vm1741 = vweird.f32 %v1648
        %vm1742 = vweird.f32 %v1736
        %vm1743 = vmor %vm1741, %vm1742
        %v1744 = vsel %vm1743, %v1736, %v1740
        %v1745 = vand.u32 2147483647, %v1648
        %vm1746 = vcmp.eq.f32.partialorder %v1745, 8.507059e+37
        %v1747 = vand.u32 %v1648, 2147483648
        %v1748 = vor.u32 1.1754944e-38, %v1747
        %v1749 = vsel %vm1746, %v1748, %v1744
        %v1750 = vmul.f32 %v1622, %v1749
        %v1751 = vrcp.pop %v1651
        %v1752 = vmul.f32 %v1651, %v1751
        %v1753 = vsub.f32 1.0, %v1752
        %v1754 = vmul.f32 %v1751, %v1753
        %v1755 = vadd.f32 %v1751, %v1754
        %vm1756 = vweird.f32 %v1651
        %vm1757 = vweird.f32 %v1751
        %vm1758 = vmor %vm1756, %vm1757
        %v1759 = vsel %vm1758, %v1751, %v1755
        %v1760 = vand.u32 2147483647, %v1651
        %vm1761 = vcmp.eq.f32.partialorder %v1760, 8.507059e+37
        %v1762 = vand.u32 %v1651, 2147483648
        %v1763 = vor.u32 1.1754944e-38, %v1762
        %v1764 = vsel %vm1761, %v1763, %v1759
        %v1765 = vmul.f32 %v1624, %v1764
        %v1766 = vrcp.pop %v1654
        %v1767 = vmul.f32 %v1654, %v1766
        %v1768 = vsub.f32 1.0, %v1767
        %v1769 = vmul.f32 %v1766, %v1768
        %v1770 = vadd.f32 %v1766, %v1769
        %vm1771 = vweird.f32 %v1654
        %vm1772 = vweird.f32 %v1766
        %vm1773 = vmor %vm1771, %vm1772
        %v1774 = vsel %vm1773, %v1766, %v1770
        %v1775 = vand.u32 2147483647, %v1654
        %vm1776 = vcmp.eq.f32.partialorder %v1775, 8.507059e+37
        %v1777 = vand.u32 %v1654, 2147483648
        %v1778 = vor.u32 1.1754944e-38, %v1777
        %v1779 = vsel %vm1776, %v1778, %v1774
        %v1780 = vmul.f32 %v1626, %v1779
        %v1781 = vrcp.pop %v1657
        %v1782 = vmul.f32 %v1657, %v1781
        %v1783 = vsub.f32 1.0, %v1782
        %v1784 = vmul.f32 %v1781, %v1783
        %v1785 = vadd.f32 %v1781, %v1784
        %vm1786 = vweird.f32 %v1657
        %vm1787 = vweird.f32 %v1781
        %vm1788 = vmor %vm1786, %vm1787
        %v1789 = vsel %vm1788, %v1781, %v1785
        %v1790 = vand.u32 2147483647, %v1657
        %vm1791 = vcmp.eq.f32.partialorder %v1790, 8.507059e+37
        %v1792 = vand.u32 %v1657, 2147483648
        %v1793 = vor.u32 1.1754944e-38, %v1792
        %v1794 = vsel %vm1791, %v1793, %v1789
        %v1795 = vmul.f32 %v1628, %v1794
        %v1796 = vrcp.pop %v1660
        %v1797 = vmul.f32 %v1660, %v1796
        %v1798 = vsub.f32 1.0, %v1797
        %v1799 = vmul.f32 %v1796, %v1798
        %v1800 = vadd.f32 %v1796, %v1799
        %vm1801 = vweird.f32 %v1660
        %vm1802 = vweird.f32 %v1796
        %vm1803 = vmor %vm1801, %vm1802
        %v1804 = vsel %vm1803, %v1796, %v1800
        %v1805 = vand.u32 2147483647, %v1660
        %vm1806 = vcmp.eq.f32.partialorder %v1805, 8.507059e+37
        %v1807 = vand.u32 %v1660, 2147483648
        %v1808 = vor.u32 1.1754944e-38, %v1807
        %v1809 = vsel %vm1806, %v1808, %v1804
        %v1810 = vmul.f32 %v1630, %v1809
        %v1811 = vpack.c.bf16 %v1690, %v1675
        %v1812 = vpack.c.bf16 %v1720, %v1705
        %v1813 = vpack.c.bf16 %v1750, %v1735
        %v1814 = vpack.c.bf16 %v1780, %v1765
        %v1815 = vpack.c.bf16 %v1810, %v1795
        %1816 = vrot.lane.b32.xlu0 %v1092, 56
        %v1817 = vpop.permute.xlu0 %1816
        %1818 = vrot.lane.b32.xlu0 %v1093, 56
        %v1819 = vpop.permute.xlu0 %1818
        %1820 = vrot.lane.b32.xlu0 %v1094, 56
        %v1821 = vpop.permute.xlu0 %1820
        %1822 = vrot.lane.b32.xlu0 %v1095, 56
        %v1823 = vpop.permute.xlu0 %1822
        %1824 = vrot.lane.b32.xlu0 %v1096, 56
        %v1825 = vpop.permute.xlu0 %1824
        %v1832 = vsel %vm1177, %v1811, 0
        %v1835 = vsel %vm1177, %v1812, 0
        %v1838 = vsel %vm1177, %v1813, 0
        %v1841 = vsel %vm1177, %v1814, 0
        %v1844 = vsel %vm1177, %v1815, 0
        %1846 = vmatpush.bf16.msra.mxu0 0
        %1847 = vmatpush.bf16.msra.mxu0 0
        %1848 = vmatpush.bf16.msra.mxu0 0
        %1849 = vmatpush.bf16.msra.mxu0 %v1825
        %1850 = vmatpush.bf16.msra.mxu0 %v1823
        %1851 = vmatpush.bf16.msra.mxu0 %v1821
        %1852 = vmatpush.bf16.msra.mxu0 %v1819
        %1853 = vmatpush.bf16.msra.mxu0 %v1817
        %1854 = vmatmul.bf16.gmra.mxu0 %v1832
        %v1855 = vpop.f32.mrf.mxu0
        %v1856 = vadd.f32 0.0, %v1855
        %v1857 = vpop.f32.mrf.mxu0
        %v1858 = vadd.f32 0.0, %v1857
        %1859 = vmatmul.bf16.gmra.mxu0 %v1835
        %v1860 = vpop.f32.mrf.mxu0
        %v1861 = vadd.f32 0.0, %v1860
        %v1862 = vpop.f32.mrf.mxu0
        %v1863 = vadd.f32 0.0, %v1862
        %1864 = vmatmul.bf16.gmra.mxu0 %v1838
        %v1865 = vpop.f32.mrf.mxu0
        %v1866 = vadd.f32 0.0, %v1865
        %v1867 = vpop.f32.mrf.mxu0
        %v1868 = vadd.f32 0.0, %v1867
        %1869 = vmatmul.bf16.gmra.mxu0 %v1841
        %v1870 = vpop.f32.mrf.mxu0
        %v1871 = vadd.f32 0.0, %v1870
        %v1872 = vpop.f32.mrf.mxu0
        %v1873 = vadd.f32 0.0, %v1872
        %1874 = vmatmul.bf16.gmra.mxu0 %v1844
        %v1875 = vpop.f32.mrf.mxu0
        %v1876 = vadd.f32 0.0, %v1875
        %v1877 = vpop.f32.mrf.mxu0
        %v1878 = vadd.f32 0.0, %v1877
        %1879 = vdwg.mxu0
        %1880 = vrot.lane.b32.xlu0 %v1092, 112
        %v1881 = vpop.permute.xlu0 %1880
        %1882 = vrot.lane.b32.xlu0 %v1093, 112
        %v1883 = vpop.permute.xlu0 %1882
        %1884 = vrot.lane.b32.xlu0 %v1094, 112
        %v1885 = vpop.permute.xlu0 %1884
        %1886 = vrot.lane.b32.xlu0 %v1095, 112
        %v1887 = vpop.permute.xlu0 %1886
        %1888 = vrot.lane.b32.xlu0 %v1096, 112
        %v1889 = vpop.permute.xlu0 %1888
        %1890 = vrot.lane.b32.xlu0 %v1092, 80
        %v1891 = vpop.permute.xlu0 %1890
        %1892 = vrot.lane.b32.xlu0 %v1093, 80
        %v1893 = vpop.permute.xlu0 %1892
        %1894 = vrot.lane.b32.xlu0 %v1094, 80
        %v1895 = vpop.permute.xlu0 %1894
        %1896 = vrot.lane.b32.xlu0 %v1095, 80
        %v1897 = vpop.permute.xlu0 %1896
        %1898 = vrot.lane.b32.xlu0 %v1096, 80
        %v1899 = vpop.permute.xlu0 %1898
        %v1901 = vsel %vm1112, %v1881, 0
        %v1904 = vsel %vm1112, %v1883, 0
        %v1907 = vsel %vm1112, %v1885, 0
        %v1910 = vsel %vm1112, %v1887, 0
        %v1913 = vsel %vm1112, %v1889, 0
        %v1916 = vsel %vm1112, %v1891, 0
        %v1919 = vsel %vm1112, %v1893, 0
        %v1922 = vsel %vm1112, %v1895, 0
        %v1925 = vsel %vm1112, %v1897, 0
        %v1928 = vsel %vm1112, %v1899, 0
        %1930 = vmatpush.bf16.xpose.msra.mxu0 0
        %1931 = vmatpush.bf16.xpose.msra.mxu0 0
        %1932 = vmatpush.bf16.xpose.msra.mxu0 0
        %1933 = vmatpush.bf16.xpose.msra.mxu0 %v1928
        %1934 = vmatpush.bf16.xpose.msra.mxu0 %v1925
        %1935 = vmatpush.bf16.xpose.msra.mxu0 %v1922
        %1936 = vmatpush.bf16.xpose.msra.mxu0 %v1919
        %1937 = vmatpush.bf16.xpose.msra.mxu0 %v1916
        %1938 = vmatmul.bf16.gmra.mxu0 %v1901
        %v1939 = vpop.f32.mrf.mxu0
        %v1940 = vadd.f32 0.0, %v1939
        %v1941 = vpop.f32.mrf.mxu0
        %v1942 = vadd.f32 0.0, %v1941
        %1943 = vmatmul.bf16.gmra.mxu0 %v1904
        %v1944 = vpop.f32.mrf.mxu0
        %v1945 = vadd.f32 0.0, %v1944
        %v1946 = vpop.f32.mrf.mxu0
        %v1947 = vadd.f32 0.0, %v1946
        %1948 = vmatmul.bf16.gmra.mxu0 %v1907
        %v1949 = vpop.f32.mrf.mxu0
        %v1950 = vadd.f32 0.0, %v1949
        %v1951 = vpop.f32.mrf.mxu0
        %v1952 = vadd.f32 0.0, %v1951
        %1953 = vmatmul.bf16.gmra.mxu0 %v1910
        %v1954 = vpop.f32.mrf.mxu0
        %v1955 = vadd.f32 0.0, %v1954
        %v1956 = vpop.f32.mrf.mxu0
        %v1957 = vadd.f32 0.0, %v1956
        %1958 = vmatmul.bf16.gmra.mxu0 %v1913
        %v1959 = vpop.f32.mrf.mxu0
        %v1960 = vadd.f32 0.0, %v1959
        %v1961 = vpop.f32.mrf.mxu0
        %v1962 = vadd.f32 0.0, %v1961
        %1963 = vdwg.mxu0
        %v1964 = vsel %vm1177, %v1940, -inf
        %1965 = vmax.xlane.f32.xlu0 %v1964
        %v1966 = vpop.xlane.xlu0 %1965
        %v1967 = vsel %vm1177, %v1942, -inf
        %1968 = vmax.xlane.f32.xlu0 %v1967
        %v1969 = vpop.xlane.xlu0 %1968
        %v1970 = vsel %vm1177, %v1945, -inf
        %1971 = vmax.xlane.f32.xlu0 %v1970
        %v1972 = vpop.xlane.xlu0 %1971
        %v1973 = vsel %vm1177, %v1947, -inf
        %1974 = vmax.xlane.f32.xlu0 %v1973
        %v1975 = vpop.xlane.xlu0 %1974
        %v1976 = vsel %vm1177, %v1950, -inf
        %1977 = vmax.xlane.f32.xlu0 %v1976
        %v1978 = vpop.xlane.xlu0 %1977
        %v1979 = vsel %vm1177, %v1952, -inf
        %1980 = vmax.xlane.f32.xlu0 %v1979
        %v1981 = vpop.xlane.xlu0 %1980
        %v1982 = vsel %vm1177, %v1955, -inf
        %1983 = vmax.xlane.f32.xlu0 %v1982
        %v1984 = vpop.xlane.xlu0 %1983
        %v1985 = vsel %vm1177, %v1957, -inf
        %1986 = vmax.xlane.f32.xlu0 %v1985
        %v1987 = vpop.xlane.xlu0 %1986
        %v1988 = vsel %vm1177, %v1960, -inf
        %1989 = vmax.xlane.f32.xlu0 %v1988
        %v1990 = vpop.xlane.xlu0 %1989
        %v1991 = vsel %vm1177, %v1962, -inf
        %1992 = vmax.xlane.f32.xlu0 %v1991
        %v1993 = vpop.xlane.xlu0 %1992
        %v1994 = vsub.f32 %v1940, %v1966
        %v1995 = vsub.f32 %v1942, %v1969
        %v1996 = vsub.f32 %v1945, %v1972
        %v1997 = vsub.f32 %v1947, %v1975
        %v1998 = vsub.f32 %v1950, %v1978
        %v1999 = vsub.f32 %v1952, %v1981
        %v2000 = vsub.f32 %v1955, %v1984
        %v2001 = vsub.f32 %v1957, %v1987
        %v2002 = vsub.f32 %v1960, %v1990
        %v2003 = vsub.f32 %v1962, %v1993
        %v2004 = vmul.f32 %v1994, 1.442695
        %v2005 = vpow.pop %v2004
        %v2006 = vmul.f32 %v1995, 1.442695
        %v2007 = vpow.pop %v2006
        %v2008 = vmul.f32 %v1996, 1.442695
        %v2009 = vpow.pop %v2008
        %v2010 = vmul.f32 %v1997, 1.442695
        %v2011 = vpow.pop %v2010
        %v2012 = vmul.f32 %v1998, 1.442695
        %v2013 = vpow.pop %v2012
        %v2014 = vmul.f32 %v1999, 1.442695
        %v2015 = vpow.pop %v2014
        %v2016 = vmul.f32 %v2000, 1.442695
        %v2017 = vpow.pop %v2016
        %v2018 = vmul.f32 %v2001, 1.442695
        %v2019 = vpow.pop %v2018
        %v2020 = vmul.f32 %v2002, 1.442695
        %v2021 = vpow.pop %v2020
        %v2022 = vmul.f32 %v2003, 1.442695
        %v2023 = vpow.pop %v2022
        %v2024 = vsel %vm1177, %v2005, 0.0
        %2025 = vadd.xlane.f32.xlu0 %v2024
        %v2026 = vpop.xlane.xlu0 %2025
        %v2027 = vsel %vm1177, %v2007, 0.0
        %2028 = vadd.xlane.f32.xlu0 %v2027
        %v2029 = vpop.xlane.xlu0 %2028
        %v2030 = vsel %vm1177, %v2009, 0.0
        %2031 = vadd.xlane.f32.xlu0 %v2030
        %v2032 = vpop.xlane.xlu0 %2031
        %v2033 = vsel %vm1177, %v2011, 0.0
        %2034 = vadd.xlane.f32.xlu0 %v2033
        %v2035 = vpop.xlane.xlu0 %2034
        %v2036 = vsel %vm1177, %v2013, 0.0
        %2037 = vadd.xlane.f32.xlu0 %v2036
        %v2038 = vpop.xlane.xlu0 %2037
        %v2039 = vsel %vm1177, %v2015, 0.0
        %2040 = vadd.xlane.f32.xlu0 %v2039
        %v2041 = vpop.xlane.xlu0 %2040
        %v2042 = vsel %vm1177, %v2017, 0.0
        %2043 = vadd.xlane.f32.xlu0 %v2042
        %v2044 = vpop.xlane.xlu0 %2043
        %v2045 = vsel %vm1177, %v2019, 0.0
        %2046 = vadd.xlane.f32.xlu0 %v2045
        %v2047 = vpop.xlane.xlu0 %2046
        %v2048 = vsel %vm1177, %v2021, 0.0
        %2049 = vadd.xlane.f32.xlu0 %v2048
        %v2050 = vpop.xlane.xlu0 %2049
        %v2051 = vsel %vm1177, %v2023, 0.0
        %2052 = vadd.xlane.f32.xlu0 %v2051
        %v2053 = vpop.xlane.xlu0 %2052
        %v2054 = vrcp.pop %v2026
        %v2055 = vmul.f32 %v2026, %v2054
        %v2056 = vsub.f32 1.0, %v2055
        %v2057 = vmul.f32 %v2054, %v2056
        %v2058 = vadd.f32 %v2054, %v2057
        %vm2059 = vweird.f32 %v2026
        %vm2060 = vweird.f32 %v2054
        %vm2061 = vmor %vm2059, %vm2060
        %v2062 = vsel %vm2061, %v2054, %v2058
        %v2063 = vand.u32 2147483647, %v2026
        %vm2064 = vcmp.eq.f32.partialorder %v2063, 8.507059e+37
        %v2065 = vand.u32 %v2026, 2147483648
        %v2066 = vor.u32 1.1754944e-38, %v2065
        %v2067 = vsel %vm2064, %v2066, %v2062
        %v2068 = vmul.f32 %v2005, %v2067
        %v2069 = vrcp.pop %v2029
        %v2070 = vmul.f32 %v2029, %v2069
        %v2071 = vsub.f32 1.0, %v2070
        %v2072 = vmul.f32 %v2069, %v2071
        %v2073 = vadd.f32 %v2069, %v2072
        %vm2074 = vweird.f32 %v2029
        %vm2075 = vweird.f32 %v2069
        %vm2076 = vmor %vm2074, %vm2075
        %v2077 = vsel %vm2076, %v2069, %v2073
        %v2078 = vand.u32 2147483647, %v2029
        %vm2079 = vcmp.eq.f32.partialorder %v2078, 8.507059e+37
        %v2080 = vand.u32 %v2029, 2147483648
        %v2081 = vor.u32 1.1754944e-38, %v2080
        %v2082 = vsel %vm2079, %v2081, %v2077
        %v2083 = vmul.f32 %v2007, %v2082
        %v2084 = vrcp.pop %v2032
        %v2085 = vmul.f32 %v2032, %v2084
        %v2086 = vsub.f32 1.0, %v2085
        %v2087 = vmul.f32 %v2084, %v2086
        %v2088 = vadd.f32 %v2084, %v2087
        %vm2089 = vweird.f32 %v2032
        %vm2090 = vweird.f32 %v2084
        %vm2091 = vmor %vm2089, %vm2090
        %v2092 = vsel %vm2091, %v2084, %v2088
        %v2093 = vand.u32 2147483647, %v2032
        %vm2094 = vcmp.eq.f32.partialorder %v2093, 8.507059e+37
        %v2095 = vand.u32 %v2032, 2147483648
        %v2096 = vor.u32 1.1754944e-38, %v2095
        %v2097 = vsel %vm2094, %v2096, %v2092
        %v2098 = vmul.f32 %v2009, %v2097
        %v2099 = vrcp.pop %v2035
        %v2100 = vmul.f32 %v2035, %v2099
        %v2101 = vsub.f32 1.0, %v2100
        %v2102 = vmul.f32 %v2099, %v2101
        %v2103 = vadd.f32 %v2099, %v2102
        %vm2104 = vweird.f32 %v2035
        %vm2105 = vweird.f32 %v2099
        %vm2106 = vmor %vm2104, %vm2105
        %v2107 = vsel %vm2106, %v2099, %v2103
        %v2108 = vand.u32 2147483647, %v2035
        %vm2109 = vcmp.eq.f32.partialorder %v2108, 8.507059e+37
        %v2110 = vand.u32 %v2035, 2147483648
        %v2111 = vor.u32 1.1754944e-38, %v2110
        %v2112 = vsel %vm2109, %v2111, %v2107
        %v2113 = vmul.f32 %v2011, %v2112
        %v2114 = vrcp.pop %v2038
        %v2115 = vmul.f32 %v2038, %v2114
        %v2116 = vsub.f32 1.0, %v2115
        %v2117 = vmul.f32 %v2114, %v2116
        %v2118 = vadd.f32 %v2114, %v2117
        %vm2119 = vweird.f32 %v2038
        %vm2120 = vweird.f32 %v2114
        %vm2121 = vmor %vm2119, %vm2120
        %v2122 = vsel %vm2121, %v2114, %v2118
        %v2123 = vand.u32 2147483647, %v2038
        %vm2124 = vcmp.eq.f32.partialorder %v2123, 8.507059e+37
        %v2125 = vand.u32 %v2038, 2147483648
        %v2126 = vor.u32 1.1754944e-38, %v2125
        %v2127 = vsel %vm2124, %v2126, %v2122
        %v2128 = vmul.f32 %v2013, %v2127
        %v2129 = vrcp.pop %v2041
        %v2130 = vmul.f32 %v2041, %v2129
        %v2131 = vsub.f32 1.0, %v2130
        %v2132 = vmul.f32 %v2129, %v2131
        %v2133 = vadd.f32 %v2129, %v2132
        %vm2134 = vweird.f32 %v2041
        %vm2135 = vweird.f32 %v2129
        %vm2136 = vmor %vm2134, %vm2135
        %v2137 = vsel %vm2136, %v2129, %v2133
        %v2138 = vand.u32 2147483647, %v2041
        %vm2139 = vcmp.eq.f32.partialorder %v2138, 8.507059e+37
        %v2140 = vand.u32 %v2041, 2147483648
        %v2141 = vor.u32 1.1754944e-38, %v2140
        %v2142 = vsel %vm2139, %v2141, %v2137
        %v2143 = vmul.f32 %v2015, %v2142
        %v2144 = vrcp.pop %v2044
        %v2145 = vmul.f32 %v2044, %v2144
        %v2146 = vsub.f32 1.0, %v2145
        %v2147 = vmul.f32 %v2144, %v2146
        %v2148 = vadd.f32 %v2144, %v2147
        %vm2149 = vweird.f32 %v2044
        %vm2150 = vweird.f32 %v2144
        %vm2151 = vmor %vm2149, %vm2150
        %v2152 = vsel %vm2151, %v2144, %v2148
        %v2153 = vand.u32 2147483647, %v2044
        %vm2154 = vcmp.eq.f32.partialorder %v2153, 8.507059e+37
        %v2155 = vand.u32 %v2044, 2147483648
        %v2156 = vor.u32 1.1754944e-38, %v2155
        %v2157 = vsel %vm2154, %v2156, %v2152
        %v2158 = vmul.f32 %v2017, %v2157
        %v2159 = vrcp.pop %v2047
        %v2160 = vmul.f32 %v2047, %v2159
        %v2161 = vsub.f32 1.0, %v2160
        %v2162 = vmul.f32 %v2159, %v2161
        %v2163 = vadd.f32 %v2159, %v2162
        %vm2164 = vweird.f32 %v2047
        %vm2165 = vweird.f32 %v2159
        %vm2166 = vmor %vm2164, %vm2165
        %v2167 = vsel %vm2166, %v2159, %v2163
        %v2168 = vand.u32 2147483647, %v2047
        %vm2169 = vcmp.eq.f32.partialorder %v2168, 8.507059e+37
        %v2170 = vand.u32 %v2047, 2147483648
        %v2171 = vor.u32 1.1754944e-38, %v2170
        %v2172 = vsel %vm2169, %v2171, %v2167
        %v2173 = vmul.f32 %v2019, %v2172
        %v2174 = vrcp.pop %v2050
        %v2175 = vmul.f32 %v2050, %v2174
        %v2176 = vsub.f32 1.0, %v2175
        %v2177 = vmul.f32 %v2174, %v2176
        %v2178 = vadd.f32 %v2174, %v2177
        %vm2179 = vweird.f32 %v2050
        %vm2180 = vweird.f32 %v2174
        %vm2181 = vmor %vm2179, %vm2180
        %v2182 = vsel %vm2181, %v2174, %v2178
        %v2183 = vand.u32 2147483647, %v2050
        %vm2184 = vcmp.eq.f32.partialorder %v2183, 8.507059e+37
        %v2185 = vand.u32 %v2050, 2147483648
        %v2186 = vor.u32 1.1754944e-38, %v2185
        %v2187 = vsel %vm2184, %v2186, %v2182
        %v2188 = vmul.f32 %v2021, %v2187
        %v2189 = vrcp.pop %v2053
        %v2190 = vmul.f32 %v2053, %v2189
        %v2191 = vsub.f32 1.0, %v2190
        %v2192 = vmul.f32 %v2189, %v2191
        %v2193 = vadd.f32 %v2189, %v2192
        %vm2194 = vweird.f32 %v2053
        %vm2195 = vweird.f32 %v2189
        %vm2196 = vmor %vm2194, %vm2195
        %v2197 = vsel %vm2196, %v2189, %v2193
        %v2198 = vand.u32 2147483647, %v2053
        %vm2199 = vcmp.eq.f32.partialorder %v2198, 8.507059e+37
        %v2200 = vand.u32 %v2053, 2147483648
        %v2201 = vor.u32 1.1754944e-38, %v2200
        %v2202 = vsel %vm2199, %v2201, %v2197
        %v2203 = vmul.f32 %v2023, %v2202
        %v2204 = vpack.c.bf16 %v2083, %v2068
        %v2205 = vpack.c.bf16 %v2113, %v2098
        %v2206 = vpack.c.bf16 %v2143, %v2128
        %v2207 = vpack.c.bf16 %v2173, %v2158
        %v2208 = vpack.c.bf16 %v2203, %v2188
        %2209 = vrot.lane.b32.xlu0 %v1092, 48
        %v2210 = vpop.permute.xlu0 %2209
        %2211 = vrot.lane.b32.xlu0 %v1093, 48
        %v2212 = vpop.permute.xlu0 %2211
        %2213 = vrot.lane.b32.xlu0 %v1094, 48
        %v2214 = vpop.permute.xlu0 %2213
        %2215 = vrot.lane.b32.xlu0 %v1095, 48
        %v2216 = vpop.permute.xlu0 %2215
        %2217 = vrot.lane.b32.xlu0 %v1096, 48
        %v2218 = vpop.permute.xlu0 %2217
        %v2225 = vsel %vm1177, %v2204, 0
        %v2228 = vsel %vm1177, %v2205, 0
        %v2231 = vsel %vm1177, %v2206, 0
        %v2234 = vsel %vm1177, %v2207, 0
        %v2237 = vsel %vm1177, %v2208, 0
        %2239 = vmatpush.bf16.msra.mxu0 0
        %2240 = vmatpush.bf16.msra.mxu0 0
        %2241 = vmatpush.bf16.msra.mxu0 0
        %2242 = vmatpush.bf16.msra.mxu0 %v2218
        %2243 = vmatpush.bf16.msra.mxu0 %v2216
        %2244 = vmatpush.bf16.msra.mxu0 %v2214
        %2245 = vmatpush.bf16.msra.mxu0 %v2212
        %2246 = vmatpush.bf16.msra.mxu0 %v2210
        %2247 = vmatmul.bf16.gmra.mxu0 %v2225
        %v2248 = vpop.f32.mrf.mxu0
        %v2249 = vadd.f32 0.0, %v2248
        %v2250 = vpop.f32.mrf.mxu0
        %v2251 = vadd.f32 0.0, %v2250
        %2252 = vmatmul.bf16.gmra.mxu0 %v2228
        %v2253 = vpop.f32.mrf.mxu0
        %v2254 = vadd.f32 0.0, %v2253
        %v2255 = vpop.f32.mrf.mxu0
        %v2256 = vadd.f32 0.0, %v2255
        %2257 = vmatmul.bf16.gmra.mxu0 %v2231
        %v2258 = vpop.f32.mrf.mxu0
        %v2259 = vadd.f32 0.0, %v2258
        %v2260 = vpop.f32.mrf.mxu0
        %v2261 = vadd.f32 0.0, %v2260
        %2262 = vmatmul.bf16.gmra.mxu0 %v2234
        %v2263 = vpop.f32.mrf.mxu0
        %v2264 = vadd.f32 0.0, %v2263
        %v2265 = vpop.f32.mrf.mxu0
        %v2266 = vadd.f32 0.0, %v2265
        %2267 = vmatmul.bf16.gmra.mxu0 %v2237
        %v2268 = vpop.f32.mrf.mxu0
        %v2269 = vadd.f32 0.0, %v2268
        %v2270 = vpop.f32.mrf.mxu0
        %v2271 = vadd.f32 0.0, %v2270
        %2272 = vdwg.mxu0
        %2273 = vrot.lane.b32.xlu0 %v1092, 104
        %v2274 = vpop.permute.xlu0 %2273
        %2275 = vrot.lane.b32.xlu0 %v1093, 104
        %v2276 = vpop.permute.xlu0 %2275
        %2277 = vrot.lane.b32.xlu0 %v1094, 104
        %v2278 = vpop.permute.xlu0 %2277
        %2279 = vrot.lane.b32.xlu0 %v1095, 104
        %v2280 = vpop.permute.xlu0 %2279
        %2281 = vrot.lane.b32.xlu0 %v1096, 104
        %v2282 = vpop.permute.xlu0 %2281
        %2283 = vrot.lane.b32.xlu0 %v1092, 72
        %v2284 = vpop.permute.xlu0 %2283
        %2285 = vrot.lane.b32.xlu0 %v1093, 72
        %v2286 = vpop.permute.xlu0 %2285
        %2287 = vrot.lane.b32.xlu0 %v1094, 72
        %v2288 = vpop.permute.xlu0 %2287
        %2289 = vrot.lane.b32.xlu0 %v1095, 72
        %v2290 = vpop.permute.xlu0 %2289
        %2291 = vrot.lane.b32.xlu0 %v1096, 72
        %v2292 = vpop.permute.xlu0 %2291
        %v2294 = vsel %vm1112, %v2274, 0
        %v2297 = vsel %vm1112, %v2276, 0
        %v2300 = vsel %vm1112, %v2278, 0
        %v2303 = vsel %vm1112, %v2280, 0
        %v2306 = vsel %vm1112, %v2282, 0
        %v2309 = vsel %vm1112, %v2284, 0
        %v2312 = vsel %vm1112, %v2286, 0
        %v2315 = vsel %vm1112, %v2288, 0
        %v2318 = vsel %vm1112, %v2290, 0
        %v2321 = vsel %vm1112, %v2292, 0
        %2323 = vmatpush.bf16.xpose.msra.mxu0 0
        %2324 = vmatpush.bf16.xpose.msra.mxu0 0
        %2325 = vmatpush.bf16.xpose.msra.mxu0 0
        %2326 = vmatpush.bf16.xpose.msra.mxu0 %v2321
        %2327 = vmatpush.bf16.xpose.msra.mxu0 %v2318
        %2328 = vmatpush.bf16.xpose.msra.mxu0 %v2315
        %2329 = vmatpush.bf16.xpose.msra.mxu0 %v2312
        %2330 = vmatpush.bf16.xpose.msra.mxu0 %v2309
        %2331 = vmatmul.bf16.gmra.mxu0 %v2294
        %v2332 = vpop.f32.mrf.mxu0
        %v2333 = vadd.f32 0.0, %v2332
        %v2334 = vpop.f32.mrf.mxu0
        %v2335 = vadd.f32 0.0, %v2334
        %2336 = vmatmul.bf16.gmra.mxu0 %v2297
        %v2337 = vpop.f32.mrf.mxu0
        %v2338 = vadd.f32 0.0, %v2337
        %v2339 = vpop.f32.mrf.mxu0
        %v2340 = vadd.f32 0.0, %v2339
        %2341 = vmatmul.bf16.gmra.mxu0 %v2300
        %v2342 = vpop.f32.mrf.mxu0
        %v2343 = vadd.f32 0.0, %v2342
        %v2344 = vpop.f32.mrf.mxu0
        %v2345 = vadd.f32 0.0, %v2344
        %2346 = vmatmul.bf16.gmra.mxu0 %v2303
        %v2347 = vpop.f32.mrf.mxu0
        %v2348 = vadd.f32 0.0, %v2347
        %v2349 = vpop.f32.mrf.mxu0
        %v2350 = vadd.f32 0.0, %v2349
        %2351 = vmatmul.bf16.gmra.mxu0 %v2306
        %v2352 = vpop.f32.mrf.mxu0
        %v2353 = vadd.f32 0.0, %v2352
        %v2354 = vpop.f32.mrf.mxu0
        %v2355 = vadd.f32 0.0, %v2354
        %2356 = vdwg.mxu0
        %v2357 = vsel %vm1177, %v2333, -inf
        %2358 = vmax.xlane.f32.xlu0 %v2357
        %v2359 = vpop.xlane.xlu0 %2358
        %v2360 = vsel %vm1177, %v2335, -inf
        %2361 = vmax.xlane.f32.xlu0 %v2360
        %v2362 = vpop.xlane.xlu0 %2361
        %v2363 = vsel %vm1177, %v2338, -inf
        %2364 = vmax.xlane.f32.xlu0 %v2363
        %v2365 = vpop.xlane.xlu0 %2364
        %v2366 = vsel %vm1177, %v2340, -inf
        %2367 = vmax.xlane.f32.xlu0 %v2366
        %v2368 = vpop.xlane.xlu0 %2367
        %v2369 = vsel %vm1177, %v2343, -inf
        %2370 = vmax.xlane.f32.xlu0 %v2369
        %v2371 = vpop.xlane.xlu0 %2370
        %v2372 = vsel %vm1177, %v2345, -inf
        %2373 = vmax.xlane.f32.xlu0 %v2372
        %v2374 = vpop.xlane.xlu0 %2373
        %v2375 = vsel %vm1177, %v2348, -inf
        %2376 = vmax.xlane.f32.xlu0 %v2375
        %v2377 = vpop.xlane.xlu0 %2376
        %v2378 = vsel %vm1177, %v2350, -inf
        %2379 = vmax.xlane.f32.xlu0 %v2378
        %v2380 = vpop.xlane.xlu0 %2379
        %v2381 = vsel %vm1177, %v2353, -inf
        %2382 = vmax.xlane.f32.xlu0 %v2381
        %v2383 = vpop.xlane.xlu0 %2382
        %v2384 = vsel %vm1177, %v2355, -inf
        %2385 = vmax.xlane.f32.xlu0 %v2384
        %v2386 = vpop.xlane.xlu0 %2385
        %v2387 = vsub.f32 %v2333, %v2359
        %v2388 = vsub.f32 %v2335, %v2362
        %v2389 = vsub.f32 %v2338, %v2365
        %v2390 = vsub.f32 %v2340, %v2368
        %v2391 = vsub.f32 %v2343, %v2371
        %v2392 = vsub.f32 %v2345, %v2374
        %v2393 = vsub.f32 %v2348, %v2377
        %v2394 = vsub.f32 %v2350, %v2380
        %v2395 = vsub.f32 %v2353, %v2383
        %v2396 = vsub.f32 %v2355, %v2386
        %v2397 = vmul.f32 %v2387, 1.442695
        %v2398 = vpow.pop %v2397
        %v2399 = vmul.f32 %v2388, 1.442695
        %v2400 = vpow.pop %v2399
        %v2401 = vmul.f32 %v2389, 1.442695
        %v2402 = vpow.pop %v2401
        %v2403 = vmul.f32 %v2390, 1.442695
        %v2404 = vpow.pop %v2403
        %v2405 = vmul.f32 %v2391, 1.442695
        %v2406 = vpow.pop %v2405
        %v2407 = vmul.f32 %v2392, 1.442695
        %v2408 = vpow.pop %v2407
        %v2409 = vmul.f32 %v2393, 1.442695
        %v2410 = vpow.pop %v2409
        %v2411 = vmul.f32 %v2394, 1.442695
        %v2412 = vpow.pop %v2411
        %v2413 = vmul.f32 %v2395, 1.442695
        %v2414 = vpow.pop %v2413
        %v2415 = vmul.f32 %v2396, 1.442695
        %v2416 = vpow.pop %v2415
        %v2417 = vsel %vm1177, %v2398, 0.0
        %2418 = vadd.xlane.f32.xlu0 %v2417
        %v2419 = vpop.xlane.xlu0 %2418
        %v2420 = vsel %vm1177, %v2400, 0.0
        %2421 = vadd.xlane.f32.xlu0 %v2420
        %v2422 = vpop.xlane.xlu0 %2421
        %v2423 = vsel %vm1177, %v2402, 0.0
        %2424 = vadd.xlane.f32.xlu0 %v2423
        %v2425 = vpop.xlane.xlu0 %2424
        %v2426 = vsel %vm1177, %v2404, 0.0
        %2427 = vadd.xlane.f32.xlu0 %v2426
        %v2428 = vpop.xlane.xlu0 %2427
        %v2429 = vsel %vm1177, %v2406, 0.0
        %2430 = vadd.xlane.f32.xlu0 %v2429
        %v2431 = vpop.xlane.xlu0 %2430
        %v2432 = vsel %vm1177, %v2408, 0.0
        %2433 = vadd.xlane.f32.xlu0 %v2432
        %v2434 = vpop.xlane.xlu0 %2433
        %v2435 = vsel %vm1177, %v2410, 0.0
        %2436 = vadd.xlane.f32.xlu0 %v2435
        %v2437 = vpop.xlane.xlu0 %2436
        %v2438 = vsel %vm1177, %v2412, 0.0
        %2439 = vadd.xlane.f32.xlu0 %v2438
        %v2440 = vpop.xlane.xlu0 %2439
        %v2441 = vsel %vm1177, %v2414, 0.0
        %2442 = vadd.xlane.f32.xlu0 %v2441
        %v2443 = vpop.xlane.xlu0 %2442
        %v2444 = vsel %vm1177, %v2416, 0.0
        %2445 = vadd.xlane.f32.xlu0 %v2444
        %v2446 = vpop.xlane.xlu0 %2445
        %v2447 = vrcp.pop %v2419
        %v2448 = vmul.f32 %v2419, %v2447
        %v2449 = vsub.f32 1.0, %v2448
        %v2450 = vmul.f32 %v2447, %v2449
        %v2451 = vadd.f32 %v2447, %v2450
        %vm2452 = vweird.f32 %v2419
        %vm2453 = vweird.f32 %v2447
        %vm2454 = vmor %vm2452, %vm2453
        %v2455 = vsel %vm2454, %v2447, %v2451
        %v2456 = vand.u32 2147483647, %v2419
        %vm2457 = vcmp.eq.f32.partialorder %v2456, 8.507059e+37
        %v2458 = vand.u32 %v2419, 2147483648
        %v2459 = vor.u32 1.1754944e-38, %v2458
        %v2460 = vsel %vm2457, %v2459, %v2455
        %v2461 = vmul.f32 %v2398, %v2460
        %v2462 = vrcp.pop %v2422
        %v2463 = vmul.f32 %v2422, %v2462
        %v2464 = vsub.f32 1.0, %v2463
        %v2465 = vmul.f32 %v2462, %v2464
        %v2466 = vadd.f32 %v2462, %v2465
        %vm2467 = vweird.f32 %v2422
        %vm2468 = vweird.f32 %v2462
        %vm2469 = vmor %vm2467, %vm2468
        %v2470 = vsel %vm2469, %v2462, %v2466
        %v2471 = vand.u32 2147483647, %v2422
        %vm2472 = vcmp.eq.f32.partialorder %v2471, 8.507059e+37
        %v2473 = vand.u32 %v2422, 2147483648
        %v2474 = vor.u32 1.1754944e-38, %v2473
        %v2475 = vsel %vm2472, %v2474, %v2470
        %v2476 = vmul.f32 %v2400, %v2475
        %v2477 = vrcp.pop %v2425
        %v2478 = vmul.f32 %v2425, %v2477
        %v2479 = vsub.f32 1.0, %v2478
        %v2480 = vmul.f32 %v2477, %v2479
        %v2481 = vadd.f32 %v2477, %v2480
        %vm2482 = vweird.f32 %v2425
        %vm2483 = vweird.f32 %v2477
        %vm2484 = vmor %vm2482, %vm2483
        %v2485 = vsel %vm2484, %v2477, %v2481
        %v2486 = vand.u32 2147483647, %v2425
        %vm2487 = vcmp.eq.f32.partialorder %v2486, 8.507059e+37
        %v2488 = vand.u32 %v2425, 2147483648
        %v2489 = vor.u32 1.1754944e-38, %v2488
        %v2490 = vsel %vm2487, %v2489, %v2485
        %v2491 = vmul.f32 %v2402, %v2490
        %v2492 = vrcp.pop %v2428
        %v2493 = vmul.f32 %v2428, %v2492
        %v2494 = vsub.f32 1.0, %v2493
        %v2495 = vmul.f32 %v2492, %v2494
        %v2496 = vadd.f32 %v2492, %v2495
        %vm2497 = vweird.f32 %v2428
        %vm2498 = vweird.f32 %v2492
        %vm2499 = vmor %vm2497, %vm2498
        %v2500 = vsel %vm2499, %v2492, %v2496
        %v2501 = vand.u32 2147483647, %v2428
        %vm2502 = vcmp.eq.f32.partialorder %v2501, 8.507059e+37
        %v2503 = vand.u32 %v2428, 2147483648
        %v2504 = vor.u32 1.1754944e-38, %v2503
        %v2505 = vsel %vm2502, %v2504, %v2500
        %v2506 = vmul.f32 %v2404, %v2505
        %v2507 = vrcp.pop %v2431
        %v2508 = vmul.f32 %v2431, %v2507
        %v2509 = vsub.f32 1.0, %v2508
        %v2510 = vmul.f32 %v2507, %v2509
        %v2511 = vadd.f32 %v2507, %v2510
        %vm2512 = vweird.f32 %v2431
        %vm2513 = vweird.f32 %v2507
        %vm2514 = vmor %vm2512, %vm2513
        %v2515 = vsel %vm2514, %v2507, %v2511
        %v2516 = vand.u32 2147483647, %v2431
        %vm2517 = vcmp.eq.f32.partialorder %v2516, 8.507059e+37
        %v2518 = vand.u32 %v2431, 2147483648
        %v2519 = vor.u32 1.1754944e-38, %v2518
        %v2520 = vsel %vm2517, %v2519, %v2515
        %v2521 = vmul.f32 %v2406, %v2520
        %v2522 = vrcp.pop %v2434
        %v2523 = vmul.f32 %v2434, %v2522
        %v2524 = vsub.f32 1.0, %v2523
        %v2525 = vmul.f32 %v2522, %v2524
        %v2526 = vadd.f32 %v2522, %v2525
        %vm2527 = vweird.f32 %v2434
        %vm2528 = vweird.f32 %v2522
        %vm2529 = vmor %vm2527, %vm2528
        %v2530 = vsel %vm2529, %v2522, %v2526
        %v2531 = vand.u32 2147483647, %v2434
        %vm2532 = vcmp.eq.f32.partialorder %v2531, 8.507059e+37
        %v2533 = vand.u32 %v2434, 2147483648
        %v2534 = vor.u32 1.1754944e-38, %v2533
        %v2535 = vsel %vm2532, %v2534, %v2530
        %v2536 = vmul.f32 %v2408, %v2535
        %v2537 = vrcp.pop %v2437
        %v2538 = vmul.f32 %v2437, %v2537
        %v2539 = vsub.f32 1.0, %v2538
        %v2540 = vmul.f32 %v2537, %v2539
        %v2541 = vadd.f32 %v2537, %v2540
        %vm2542 = vweird.f32 %v2437
        %vm2543 = vweird.f32 %v2537
        %vm2544 = vmor %vm2542, %vm2543
        %v2545 = vsel %vm2544, %v2537, %v2541
        %v2546 = vand.u32 2147483647, %v2437
        %vm2547 = vcmp.eq.f32.partialorder %v2546, 8.507059e+37
        %v2548 = vand.u32 %v2437, 2147483648
        %v2549 = vor.u32 1.1754944e-38, %v2548
        %v2550 = vsel %vm2547, %v2549, %v2545
        %v2551 = vmul.f32 %v2410, %v2550
        %v2552 = vrcp.pop %v2440
        %v2553 = vmul.f32 %v2440, %v2552
        %v2554 = vsub.f32 1.0, %v2553
        %v2555 = vmul.f32 %v2552, %v2554
        %v2556 = vadd.f32 %v2552, %v2555
        %vm2557 = vweird.f32 %v2440
        %vm2558 = vweird.f32 %v2552
        %vm2559 = vmor %vm2557, %vm2558
        %v2560 = vsel %vm2559, %v2552, %v2556
        %v2561 = vand.u32 2147483647, %v2440
        %vm2562 = vcmp.eq.f32.partialorder %v2561, 8.507059e+37
        %v2563 = vand.u32 %v2440, 2147483648
        %v2564 = vor.u32 1.1754944e-38, %v2563
        %v2565 = vsel %vm2562, %v2564, %v2560
        %v2566 = vmul.f32 %v2412, %v2565
        %v2567 = vrcp.pop %v2443
        %v2568 = vmul.f32 %v2443, %v2567
        %v2569 = vsub.f32 1.0, %v2568
        %v2570 = vmul.f32 %v2567, %v2569
        %v2571 = vadd.f32 %v2567, %v2570
        %vm2572 = vweird.f32 %v2443
        %vm2573 = vweird.f32 %v2567
        %vm2574 = vmor %vm2572, %vm2573
        %v2575 = vsel %vm2574, %v2567, %v2571
        %v2576 = vand.u32 2147483647, %v2443
        %vm2577 = vcmp.eq.f32.partialorder %v2576, 8.507059e+37
        %v2578 = vand.u32 %v2443, 2147483648
        %v2579 = vor.u32 1.1754944e-38, %v2578
        %v2580 = vsel %vm2577, %v2579, %v2575
        %v2581 = vmul.f32 %v2414, %v2580
        %v2582 = vrcp.pop %v2446
        %v2583 = vmul.f32 %v2446, %v2582
        %v2584 = vsub.f32 1.0, %v2583
        %v2585 = vmul.f32 %v2582, %v2584
        %v2586 = vadd.f32 %v2582, %v2585
        %vm2587 = vweird.f32 %v2446
        %vm2588 = vweird.f32 %v2582
        %vm2589 = vmor %vm2587, %vm2588
        %v2590 = vsel %vm2589, %v2582, %v2586
        %v2591 = vand.u32 2147483647, %v2446
        %vm2592 = vcmp.eq.f32.partialorder %v2591, 8.507059e+37
        %v2593 = vand.u32 %v2446, 2147483648
        %v2594 = vor.u32 1.1754944e-38, %v2593
        %v2595 = vsel %vm2592, %v2594, %v2590
        %v2596 = vmul.f32 %v2416, %v2595
        %v2597 = vpack.c.bf16 %v2476, %v2461
        %v2598 = vpack.c.bf16 %v2506, %v2491
        %v2599 = vpack.c.bf16 %v2536, %v2521
        %v2600 = vpack.c.bf16 %v2566, %v2551
        %v2601 = vpack.c.bf16 %v2596, %v2581
        %2602 = vrot.lane.b32.xlu0 %v1092, 40
        %v2603 = vpop.permute.xlu0 %2602
        %2604 = vrot.lane.b32.xlu0 %v1093, 40
        %v2605 = vpop.permute.xlu0 %2604
        %2606 = vrot.lane.b32.xlu0 %v1094, 40
        %v2607 = vpop.permute.xlu0 %2606
        %2608 = vrot.lane.b32.xlu0 %v1095, 40
        %v2609 = vpop.permute.xlu0 %2608
        %2610 = vrot.lane.b32.xlu0 %v1096, 40
        %v2611 = vpop.permute.xlu0 %2610
        %v2618 = vsel %vm1177, %v2597, 0
        %v2621 = vsel %vm1177, %v2598, 0
        %v2624 = vsel %vm1177, %v2599, 0
        %v2627 = vsel %vm1177, %v2600, 0
        %v2630 = vsel %vm1177, %v2601, 0
        %2632 = vmatpush.bf16.msra.mxu0 0
        %2633 = vmatpush.bf16.msra.mxu0 0
        %2634 = vmatpush.bf16.msra.mxu0 0
        %2635 = vmatpush.bf16.msra.mxu0 %v2611
        %2636 = vmatpush.bf16.msra.mxu0 %v2609
        %2637 = vmatpush.bf16.msra.mxu0 %v2607
        %2638 = vmatpush.bf16.msra.mxu0 %v2605
        %2639 = vmatpush.bf16.msra.mxu0 %v2603
        %2640 = vmatmul.bf16.gmra.mxu0 %v2618
        %v2641 = vpop.f32.mrf.mxu0
        %v2642 = vadd.f32 0.0, %v2641
        %v2643 = vpop.f32.mrf.mxu0
        %v2644 = vadd.f32 0.0, %v2643
        %2645 = vmatmul.bf16.gmra.mxu0 %v2621
        %v2646 = vpop.f32.mrf.mxu0
        %v2647 = vadd.f32 0.0, %v2646
        %v2648 = vpop.f32.mrf.mxu0
        %v2649 = vadd.f32 0.0, %v2648
        %2650 = vmatmul.bf16.gmra.mxu0 %v2624
        %v2651 = vpop.f32.mrf.mxu0
        %v2652 = vadd.f32 0.0, %v2651
        %v2653 = vpop.f32.mrf.mxu0
        %v2654 = vadd.f32 0.0, %v2653
        %2655 = vmatmul.bf16.gmra.mxu0 %v2627
        %v2656 = vpop.f32.mrf.mxu0
        %v2657 = vadd.f32 0.0, %v2656
        %v2658 = vpop.f32.mrf.mxu0
        %v2659 = vadd.f32 0.0, %v2658
        %2660 = vmatmul.bf16.gmra.mxu0 %v2630
        %v2661 = vpop.f32.mrf.mxu0
        %v2662 = vadd.f32 0.0, %v2661
        %v2663 = vpop.f32.mrf.mxu0
        %v2664 = vadd.f32 0.0, %v2663
        %2665 = vdwg.mxu0
        %2676 = vrot.lane.b32.xlu0 %v1856, 8
        %v2677 = vpop.permute.xlu0 %2676
        %2678 = vrot.lane.b32.xlu0 %v1858, 8
        %v2679 = vpop.permute.xlu0 %2678
        %2680 = vrot.lane.b32.xlu0 %v1861, 8
        %v2681 = vpop.permute.xlu0 %2680
        %2682 = vrot.lane.b32.xlu0 %v1863, 8
        %v2683 = vpop.permute.xlu0 %2682
        %2684 = vrot.lane.b32.xlu0 %v1866, 8
        %v2685 = vpop.permute.xlu0 %2684
        %2686 = vrot.lane.b32.xlu0 %v1868, 8
        %v2687 = vpop.permute.xlu0 %2686
        %2688 = vrot.lane.b32.xlu0 %v1871, 8
        %v2689 = vpop.permute.xlu0 %2688
        %2690 = vrot.lane.b32.xlu0 %v1873, 8
        %v2691 = vpop.permute.xlu0 %2690
        %2692 = vrot.lane.b32.xlu0 %v1876, 8
        %v2693 = vpop.permute.xlu0 %2692
        %2694 = vrot.lane.b32.xlu0 %v1878, 8
        %v2695 = vpop.permute.xlu0 %2694
        %2716 = vrot.lane.b32.xlu0 %v2249, 16
        %v2717 = vpop.permute.xlu0 %2716
        %2718 = vrot.lane.b32.xlu0 %v2251, 16
        %v2719 = vpop.permute.xlu0 %2718
        %2720 = vrot.lane.b32.xlu0 %v2254, 16
        %v2721 = vpop.permute.xlu0 %2720
        %2722 = vrot.lane.b32.xlu0 %v2256, 16
        %v2723 = vpop.permute.xlu0 %2722
        %2724 = vrot.lane.b32.xlu0 %v2259, 16
        %v2725 = vpop.permute.xlu0 %2724
        %2726 = vrot.lane.b32.xlu0 %v2261, 16
        %v2727 = vpop.permute.xlu0 %2726
        %2728 = vrot.lane.b32.xlu0 %v2264, 16
        %v2729 = vpop.permute.xlu0 %2728
        %2730 = vrot.lane.b32.xlu0 %v2266, 16
        %v2731 = vpop.permute.xlu0 %2730
        %2732 = vrot.lane.b32.xlu0 %v2269, 16
        %v2733 = vpop.permute.xlu0 %2732
        %2734 = vrot.lane.b32.xlu0 %v2271, 16
        %v2735 = vpop.permute.xlu0 %2734
        %2756 = vrot.lane.b32.xlu0 %v2642, 24
        %v2757 = vpop.permute.xlu0 %2756
        %2758 = vrot.lane.b32.xlu0 %v2644, 24
        %v2759 = vpop.permute.xlu0 %2758
        %2760 = vrot.lane.b32.xlu0 %v2647, 24
        %v2761 = vpop.permute.xlu0 %2760
        %2762 = vrot.lane.b32.xlu0 %v2649, 24
        %v2763 = vpop.permute.xlu0 %2762
        %2764 = vrot.lane.b32.xlu0 %v2652, 24
        %v2765 = vpop.permute.xlu0 %2764
        %2766 = vrot.lane.b32.xlu0 %v2654, 24
        %v2767 = vpop.permute.xlu0 %2766
        %2768 = vrot.lane.b32.xlu0 %v2657, 24
        %v2769 = vpop.permute.xlu0 %2768
        %2770 = vrot.lane.b32.xlu0 %v2659, 24
        %v2771 = vpop.permute.xlu0 %2770
        %2772 = vrot.lane.b32.xlu0 %v2662, 24
        %v2773 = vpop.permute.xlu0 %2772
        %2774 = vrot.lane.b32.xlu0 %v2664, 24
        %v2775 = vpop.permute.xlu0 %2774
        %v2786 = vsel %vm1112, %v1463, %v2677
        %v2787 = vsel %vm1112, %v1465, %v2679
        %v2788 = vsel %vm1112, %v1468, %v2681
        %v2789 = vsel %vm1112, %v1470, %v2683
        %v2790 = vsel %vm1112, %v1473, %v2685
        %v2791 = vsel %vm1112, %v1475, %v2687
        %v2792 = vsel %vm1112, %v1478, %v2689
        %v2793 = vsel %vm1112, %v1480, %v2691
        %v2794 = vsel %vm1112, %v1483, %v2693
        %v2795 = vsel %vm1112, %v1485, %v2695
        %v2796 = vsel %vm657, %v2786, %v2717
        %v2797 = vsel %vm657, %v2787, %v2719
        %v2798 = vsel %vm657, %v2788, %v2721
        %v2799 = vsel %vm657, %v2789, %v2723
        %v2800 = vsel %vm657, %v2790, %v2725
        %v2801 = vsel %vm657, %v2791, %v2727
        %v2802 = vsel %vm657, %v2792, %v2729
        %v2803 = vsel %vm657, %v2793, %v2731
        %v2804 = vsel %vm657, %v2794, %v2733
        %v2805 = vsel %vm657, %v2795, %v2735
        %vm2806 = vcmask 195584
        %v2807 = vsel %vm2806, %v2796, %v2757
        %v2808 = vsel %vm2806, %v2797, %v2759
        %v2809 = vsel %vm2806, %v2798, %v2761
        %v2810 = vsel %vm2806, %v2799, %v2763
        %v2811 = vsel %vm2806, %v2800, %v2765
        %v2812 = vsel %vm2806, %v2801, %v2767
        %v2813 = vsel %vm2806, %v2802, %v2769
        %v2814 = vsel %vm2806, %v2803, %v2771
        %v2815 = vsel %vm2806, %v2804, %v2773
        %v2816 = vsel %vm2806, %v2805, %v2775
        %v2817 = vld [vmem:[%s11] sm:$0xff]
        %v2818 = vld [vmem:[%s11 + $0x8] sm:$0xff]
        %v2819 = vld [vmem:[%s11 + $0x10] sm:$0xff]
        %v2820 = vld [vmem:[%s11 + $0x18] sm:$0xff]
        %v2821 = vpack.c.bf16 %v2808, %v2807
        %v2822 = vpack.c.bf16 %v2810, %v2809
        %v2823 = vpack.c.bf16 %v2812, %v2811
        %v2824 = vpack.c.bf16 %v2814, %v2813
        %v2825 = vpack.c.bf16 %v2816, %v2815
        %v2826 = vpack.c.bf16 %v2818, %v2817
        %v2827 = vpack.c.bf16 %v2820, %v2819
        %v2828 = vld [vmem:[%s12] sm:$0x1]
        %v2830 = vperm.slane %v2828, 0
        %v2833 = vsel %vm713, %v2821, 0
        %v2836 = vsel %vm713, %v2822, 0
        %v2839 = vsel %vm713, %v2823, 0
        %v2842 = vsel %vm713, %v2824, 0
        %v2845 = vsel %vm713, %v2825, 0
        %2847 = vmatpush.bf16.msra.mxu0 0
        %2848 = vmatpush.bf16.msra.mxu0 0
        %2849 = vmatpush.bf16.msra.mxu0 0
        %2850 = vmatpush.bf16.msra.mxu0 0
        %2851 = vmatpush.bf16.msra.mxu0 0
        %2852 = vmatpush.bf16.msra.mxu0 0
        %2853 = vmatpush.bf16.msra.mxu0 %v2827
        %2854 = vmatpush.bf16.msra.mxu0 %v2826
        %2855 = vmatmul.bf16.gmra.mxu0 %v2833
        %v2856 = vpop.f32.mrf.mxu0
        %v2857 = vadd.f32 %v2830, %v2856
        %v2858 = vpop.f32.mrf.mxu0
        %v2859 = vadd.f32 %v2830, %v2858
        %2860 = vmatmul.bf16.gmra.mxu0 %v2836
        %v2861 = vpop.f32.mrf.mxu0
        %v2862 = vadd.f32 %v2830, %v2861
        %v2863 = vpop.f32.mrf.mxu0
        %v2864 = vadd.f32 %v2830, %v2863
        %2865 = vmatmul.bf16.gmra.mxu0 %v2839
        %v2866 = vpop.f32.mrf.mxu0
        %v2867 = vadd.f32 %v2830, %v2866
        %v2868 = vpop.f32.mrf.mxu0
        %v2869 = vadd.f32 %v2830, %v2868
        %2870 = vmatmul.bf16.gmra.mxu0 %v2842
        %v2871 = vpop.f32.mrf.mxu0
        %v2872 = vadd.f32 %v2830, %v2871
        %v2873 = vpop.f32.mrf.mxu0
        %v2874 = vadd.f32 %v2830, %v2873
        %2875 = vmatmul.bf16.gmra.mxu0 %v2845
        %v2876 = vpop.f32.mrf.mxu0
        %v2877 = vadd.f32 %v2830, %v2876
        %v2878 = vpop.f32.mrf.mxu0
        %v2879 = vadd.f32 %v2830, %v2878
        %2880 = vdwg.mxu0
        %v2881 = vadd.f32 %v763, %v2857
        %v2882 = vadd.f32 %v764, %v2859
        %v2883 = vadd.f32 %v765, %v2862
        %v2884 = vadd.f32 %v766, %v2864
        %v2885 = vadd.f32 %v767, %v2867
        %v2886 = vadd.f32 %v768, %v2869
        %v2887 = vadd.f32 %v769, %v2872
        %v2888 = vadd.f32 %v770, %v2874
        %v2889 = vadd.f32 %v771, %v2877
        %v2890 = vadd.f32 %v772, %v2879
        %v2891 = vld [vmem:[%s13] sm:$0x1]
        %v2892 = vld [vmem:[%s14] sm:$0x1]
        %v2893 = vsel %vm713, %v2881, 0.0
        %2894 = vadd.xlane.f32.xlu0 %v2893
        %v2895 = vpop.xlane.xlu0 %2894
        %v2896 = vsel %vm713, %v2882, 0.0
        %2897 = vadd.xlane.f32.xlu0 %v2896
        %v2898 = vpop.xlane.xlu0 %2897
        %v2899 = vsel %vm713, %v2883, 0.0
        %2900 = vadd.xlane.f32.xlu0 %v2899
        %v2901 = vpop.xlane.xlu0 %2900
        %v2902 = vsel %vm713, %v2884, 0.0
        %2903 = vadd.xlane.f32.xlu0 %v2902
        %v2904 = vpop.xlane.xlu0 %2903
        %v2905 = vsel %vm713, %v2885, 0.0
        %2906 = vadd.xlane.f32.xlu0 %v2905
        %v2907 = vpop.xlane.xlu0 %2906
        %v2908 = vsel %vm713, %v2886, 0.0
        %2909 = vadd.xlane.f32.xlu0 %v2908
        %v2910 = vpop.xlane.xlu0 %2909
        %v2911 = vsel %vm713, %v2887, 0.0
        %2912 = vadd.xlane.f32.xlu0 %v2911
        %v2913 = vpop.xlane.xlu0 %2912
        %v2914 = vsel %vm713, %v2888, 0.0
        %2915 = vadd.xlane.f32.xlu0 %v2914
        %v2916 = vpop.xlane.xlu0 %2915
        %v2917 = vsel %vm713, %v2889, 0.0
        %2918 = vadd.xlane.f32.xlu0 %v2917
        %v2919 = vpop.xlane.xlu0 %2918
        %v2920 = vsel %vm713, %v2890, 0.0
        %2921 = vadd.xlane.f32.xlu0 %v2920
        %v2922 = vpop.xlane.xlu0 %2921
        %v2923 = vmul.f32 %v2895, %v811
        %v2924 = vmul.f32 %v2898, %v811
        %v2925 = vmul.f32 %v2901, %v811
        %v2926 = vmul.f32 %v2904, %v811
        %v2927 = vmul.f32 %v2907, %v811
        %v2928 = vmul.f32 %v2910, %v811
        %v2929 = vmul.f32 %v2913, %v811
        %v2930 = vmul.f32 %v2916, %v811
        %v2931 = vmul.f32 %v2919, %v811
        %v2932 = vmul.f32 %v2922, %v811
        %v2933 = vsub.f32 %v2881, %v2923
        %v2934 = vsub.f32 %v2882, %v2924
        %v2935 = vsub.f32 %v2883, %v2925
        %v2936 = vsub.f32 %v2884, %v2926
        %v2937 = vsub.f32 %v2885, %v2927
        %v2938 = vsub.f32 %v2886, %v2928
        %v2939 = vsub.f32 %v2887, %v2929
        %v2940 = vsub.f32 %v2888, %v2930
        %v2941 = vsub.f32 %v2889, %v2931
        %v2942 = vsub.f32 %v2890, %v2932
        %v2943 = vmul.f32 %v2933, %v2933
        %v2944 = vmul.f32 %v2934, %v2934
        %v2945 = vmul.f32 %v2935, %v2935
        %v2946 = vmul.f32 %v2936, %v2936
        %v2947 = vmul.f32 %v2937, %v2937
        %v2948 = vmul.f32 %v2938, %v2938
        %v2949 = vmul.f32 %v2939, %v2939
        %v2950 = vmul.f32 %v2940, %v2940
        %v2951 = vmul.f32 %v2941, %v2941
        %v2952 = vmul.f32 %v2942, %v2942
        %v2953 = vsel %vm713, %v2943, 0.0
        %2954 = vadd.xlane.f32.xlu0 %v2953
        %v2955 = vpop.xlane.xlu0 %2954
        %v2956 = vsel %vm713, %v2944, 0.0
        %2957 = vadd.xlane.f32.xlu0 %v2956
        %v2958 = vpop.xlane.xlu0 %2957
        %v2959 = vsel %vm713, %v2945, 0.0
        %2960 = vadd.xlane.f32.xlu0 %v2959
        %v2961 = vpop.xlane.xlu0 %2960
        %v2962 = vsel %vm713, %v2946, 0.0
        %2963 = vadd.xlane.f32.xlu0 %v2962
        %v2964 = vpop.xlane.xlu0 %2963
        %v2965 = vsel %vm713, %v2947, 0.0
        %2966 = vadd.xlane.f32.xlu0 %v2965
        %v2967 = vpop.xlane.xlu0 %2966
        %v2968 = vsel %vm713, %v2948, 0.0
        %2969 = vadd.xlane.f32.xlu0 %v2968
        %v2970 = vpop.xlane.xlu0 %2969
        %v2971 = vsel %vm713, %v2949, 0.0
        %2972 = vadd.xlane.f32.xlu0 %v2971
        %v2973 = vpop.xlane.xlu0 %2972
        %v2974 = vsel %vm713, %v2950, 0.0
        %2975 = vadd.xlane.f32.xlu0 %v2974
        %v2976 = vpop.xlane.xlu0 %2975
        %v2977 = vsel %vm713, %v2951, 0.0
        %2978 = vadd.xlane.f32.xlu0 %v2977
        %v2979 = vpop.xlane.xlu0 %2978
        %v2980 = vsel %vm713, %v2952, 0.0
        %2981 = vadd.xlane.f32.xlu0 %v2980
        %v2982 = vpop.xlane.xlu0 %2981
        %v2983 = vmul.f32 %v2955, %v811
        %v2984 = vmul.f32 %v2958, %v811
        %v2985 = vmul.f32 %v2961, %v811
        %v2986 = vmul.f32 %v2964, %v811
        %v2987 = vmul.f32 %v2967, %v811
        %v2988 = vmul.f32 %v2970, %v811
        %v2989 = vmul.f32 %v2973, %v811
        %v2990 = vmul.f32 %v2976, %v811
        %v2991 = vmul.f32 %v2979, %v811
        %v2992 = vmul.f32 %v2982, %v811
        %v2993 = vadd.f32 %v2983, 1e-05
        %v2994 = vadd.f32 %v2984, 1e-05
        %v2995 = vadd.f32 %v2985, 1e-05
        %v2996 = vadd.f32 %v2986, 1e-05
        %v2997 = vadd.f32 %v2987, 1e-05
        %v2998 = vadd.f32 %v2988, 1e-05
        %v2999 = vadd.f32 %v2989, 1e-05
        %v3000 = vadd.f32 %v2990, 1e-05
        %v3001 = vadd.f32 %v2991, 1e-05
        %v3002 = vadd.f32 %v2992, 1e-05
        %v3003 = vrsqrt.pop %v2993
        %v3004 = vmul.f32 %v3003, %v2993
        %v3005 = vmul.f32 %v3004, %v3003
        %v3006 = vmul.f32 0.5, %v3005
        %v3007 = vsub.f32 1.5, %v3006
        %v3008 = vmul.f32 %v3003, %v3007
        %vm3009 = vweird.f32 %v2993
        %vm3010 = vweird.f32 %v3003
        %vm3011 = vmor %vm3009, %vm3010
        %v3012 = vsel %vm3011, %v3003, %v3008
        %v3013 = vrsqrt.pop %v2994
        %v3014 = vmul.f32 %v3013, %v2994
        %v3015 = vmul.f32 %v3014, %v3013
        %v3016 = vmul.f32 0.5, %v3015
        %v3017 = vsub.f32 1.5, %v3016
        %v3018 = vmul.f32 %v3013, %v3017
        %vm3019 = vweird.f32 %v2994
        %vm3020 = vweird.f32 %v3013
        %vm3021 = vmor %vm3019, %vm3020
        %v3022 = vsel %vm3021, %v3013, %v3018
        %v3023 = vrsqrt.pop %v2995
        %v3024 = vmul.f32 %v3023, %v2995
        %v3025 = vmul.f32 %v3024, %v3023
        %v3026 = vmul.f32 0.5, %v3025
        %v3027 = vsub.f32 1.5, %v3026
        %v3028 = vmul.f32 %v3023, %v3027
        %vm3029 = vweird.f32 %v2995
        %vm3030 = vweird.f32 %v3023
        %vm3031 = vmor %vm3029, %vm3030
        %v3032 = vsel %vm3031, %v3023, %v3028
        %v3033 = vrsqrt.pop %v2996
        %v3034 = vmul.f32 %v3033, %v2996
        %v3035 = vmul.f32 %v3034, %v3033
        %v3036 = vmul.f32 0.5, %v3035
        %v3037 = vsub.f32 1.5, %v3036
        %v3038 = vmul.f32 %v3033, %v3037
        %vm3039 = vweird.f32 %v2996
        %vm3040 = vweird.f32 %v3033
        %vm3041 = vmor %vm3039, %vm3040
        %v3042 = vsel %vm3041, %v3033, %v3038
        %v3043 = vrsqrt.pop %v2997
        %v3044 = vmul.f32 %v3043, %v2997
        %v3045 = vmul.f32 %v3044, %v3043
        %v3046 = vmul.f32 0.5, %v3045
        %v3047 = vsub.f32 1.5, %v3046
        %v3048 = vmul.f32 %v3043, %v3047
        %vm3049 = vweird.f32 %v2997
        %vm3050 = vweird.f32 %v3043
        %vm3051 = vmor %vm3049, %vm3050
        %v3052 = vsel %vm3051, %v3043, %v3048
        %v3053 = vrsqrt.pop %v2998
        %v3054 = vmul.f32 %v3053, %v2998
        %v3055 = vmul.f32 %v3054, %v3053
        %v3056 = vmul.f32 0.5, %v3055
        %v3057 = vsub.f32 1.5, %v3056
        %v3058 = vmul.f32 %v3053, %v3057
        %vm3059 = vweird.f32 %v2998
        %vm3060 = vweird.f32 %v3053
        %vm3061 = vmor %vm3059, %vm3060
        %v3062 = vsel %vm3061, %v3053, %v3058
        %v3063 = vrsqrt.pop %v2999
        %v3064 = vmul.f32 %v3063, %v2999
        %v3065 = vmul.f32 %v3064, %v3063
        %v3066 = vmul.f32 0.5, %v3065
        %v3067 = vsub.f32 1.5, %v3066
        %v3068 = vmul.f32 %v3063, %v3067
        %vm3069 = vweird.f32 %v2999
        %vm3070 = vweird.f32 %v3063
        %vm3071 = vmor %vm3069, %vm3070
        %v3072 = vsel %vm3071, %v3063, %v3068
        %v3073 = vrsqrt.pop %v3000
        %v3074 = vmul.f32 %v3073, %v3000
        %v3075 = vmul.f32 %v3074, %v3073
        %v3076 = vmul.f32 0.5, %v3075
        %v3077 = vsub.f32 1.5, %v3076
        %v3078 = vmul.f32 %v3073, %v3077
        %vm3079 = vweird.f32 %v3000
        %vm3080 = vweird.f32 %v3073
        %vm3081 = vmor %vm3079, %vm3080
        %v3082 = vsel %vm3081, %v3073, %v3078
        %v3083 = vrsqrt.pop %v3001
        %v3084 = vmul.f32 %v3083, %v3001
        %v3085 = vmul.f32 %v3084, %v3083
        %v3086 = vmul.f32 0.5, %v3085
        %v3087 = vsub.f32 1.5, %v3086
        %v3088 = vmul.f32 %v3083, %v3087
        %vm3089 = vweird.f32 %v3001
        %vm3090 = vweird.f32 %v3083
        %vm3091 = vmor %vm3089, %vm3090
        %v3092 = vsel %vm3091, %v3083, %v3088
        %v3093 = vrsqrt.pop %v3002
        %v3094 = vmul.f32 %v3093, %v3002
        %v3095 = vmul.f32 %v3094, %v3093
        %v3096 = vmul.f32 0.5, %v3095
        %v3097 = vsub.f32 1.5, %v3096
        %v3098 = vmul.f32 %v3093, %v3097
        %vm3099 = vweird.f32 %v3002
        %vm3100 = vweird.f32 %v3093
        %vm3101 = vmor %vm3099, %vm3100
        %v3102 = vsel %vm3101, %v3093, %v3098
        %v3103 = vmul.f32 %v2933, %v3012
        %v3104 = vmul.f32 %v2934, %v3022
        %v3105 = vmul.f32 %v2935, %v3032
        %v3106 = vmul.f32 %v2936, %v3042
        %v3107 = vmul.f32 %v2937, %v3052
        %v3108 = vmul.f32 %v2938, %v3062
        %v3109 = vmul.f32 %v2939, %v3072
        %v3110 = vmul.f32 %v2940, %v3082
        %v3111 = vmul.f32 %v2941, %v3092
        %v3112 = vmul.f32 %v2942, %v3102
        %v3114 = vperm.slane %v2891, 0
        %v3116 = vmul.f32 %v3103, %v3114
        %v3117 = vmul.f32 %v3104, %v3114
        %v3118 = vmul.f32 %v3105, %v3114
        %v3119 = vmul.f32 %v3106, %v3114
        %v3120 = vmul.f32 %v3107, %v3114
        %v3121 = vmul.f32 %v3108, %v3114
        %v3122 = vmul.f32 %v3109, %v3114
        %v3123 = vmul.f32 %v3110, %v3114
        %v3124 = vmul.f32 %v3111, %v3114
        %v3125 = vmul.f32 %v3112, %v3114
        %v3127 = vperm.slane %v2892, 0
        %v3129 = vadd.f32 %v3116, %v3127
        %v3130 = vadd.f32 %v3117, %v3127
        %v3131 = vadd.f32 %v3118, %v3127
        %v3132 = vadd.f32 %v3119, %v3127
        %v3133 = vadd.f32 %v3120, %v3127
        %v3134 = vadd.f32 %v3121, %v3127
        %v3135 = vadd.f32 %v3122, %v3127
        %v3136 = vadd.f32 %v3123, %v3127
        %v3137 = vadd.f32 %v3124, %v3127
        %v3138 = vadd.f32 %v3125, %v3127
        %v3139 = vld [vmem:[%s15] sm:$0xff]
        %v3140 = vld [vmem:[%s15 + $0x8] sm:$0xff]
        %v3141 = vld [vmem:[%s15 + $0x10] sm:$0xff]
        %v3142 = vld [vmem:[%s15 + $0x18] sm:$0xff]
        %v3143 = vpack.c.bf16 %v3130, %v3129
        %v3144 = vpack.c.bf16 %v3132, %v3131
        %v3145 = vpack.c.bf16 %v3134, %v3133
        %v3146 = vpack.c.bf16 %v3136, %v3135
        %v3147 = vpack.c.bf16 %v3138, %v3137
        %v3148 = vpack.c.bf16 %v3140, %v3139
        %v3149 = vpack.c.bf16 %v3142, %v3141
        %v3150 = vld [vmem:[%s16] sm:$0x1]
        %v3152 = vperm.slane %v3150, 0
        %v3155 = vsel %vm713, %v3143, 0
        %v3158 = vsel %vm713, %v3144, 0
        %v3161 = vsel %vm713, %v3145, 0
        %v3164 = vsel %vm713, %v3146, 0
        %v3167 = vsel %vm713, %v3147, 0
        %3169 = vmatpush.bf16.msra.mxu0 0
        %3170 = vmatpush.bf16.msra.mxu0 0
        %3171 = vmatpush.bf16.msra.mxu0 0
        %3172 = vmatpush.bf16.msra.mxu0 0
        %3173 = vmatpush.bf16.msra.mxu0 0
        %3174 = vmatpush.bf16.msra.mxu0 0
        %3175 = vmatpush.bf16.msra.mxu0 %v3149
        %3176 = vmatpush.bf16.msra.mxu0 %v3148
        %3177 = vmatmul.bf16.gmra.mxu0 %v3155
        %v3178 = vpop.f32.mrf.mxu0
        %v3179 = vadd.f32 %v3152, %v3178
        %v3180 = vpop.f32.mrf.mxu0
        %v3181 = vadd.f32 %v3152, %v3180
        %3182 = vmatmul.bf16.gmra.mxu0 %v3158
        %v3183 = vpop.f32.mrf.mxu0
        %v3184 = vadd.f32 %v3152, %v3183
        %v3185 = vpop.f32.mrf.mxu0
        %v3186 = vadd.f32 %v3152, %v3185
        %3187 = vmatmul.bf16.gmra.mxu0 %v3161
        %v3188 = vpop.f32.mrf.mxu0
        %v3189 = vadd.f32 %v3152, %v3188
        %v3190 = vpop.f32.mrf.mxu0
        %v3191 = vadd.f32 %v3152, %v3190
        %3192 = vmatmul.bf16.gmra.mxu0 %v3164
        %v3193 = vpop.f32.mrf.mxu0
        %v3194 = vadd.f32 %v3152, %v3193
        %v3195 = vpop.f32.mrf.mxu0
        %v3196 = vadd.f32 %v3152, %v3195
        %3197 = vmatmul.bf16.gmra.mxu0 %v3167
        %v3198 = vpop.f32.mrf.mxu0
        %v3199 = vadd.f32 %v3152, %v3198
        %v3200 = vpop.f32.mrf.mxu0
        %v3201 = vadd.f32 %v3152, %v3200
        %3202 = vdwg.mxu0
        %v3203 = vmul.f32 %v3179, 0.5
        %v3204 = vmul.f32 %v3181, 0.5
        %v3205 = vmul.f32 %v3184, 0.5
        %v3206 = vmul.f32 %v3186, 0.5
        %v3207 = vmul.f32 %v3189, 0.5
        %v3208 = vmul.f32 %v3191, 0.5
        %v3209 = vmul.f32 %v3194, 0.5
        %v3210 = vmul.f32 %v3196, 0.5
        %v3211 = vmul.f32 %v3199, 0.5
        %v3212 = vmul.f32 %v3201, 0.5
        %v3213 = vmul.f32 %v3179, 0.044715
        %v3214 = vmul.f32 %v3181, 0.044715
        %v3215 = vmul.f32 %v3184, 0.044715
        %v3216 = vmul.f32 %v3186, 0.044715
        %v3217 = vmul.f32 %v3189, 0.044715
        %v3218 = vmul.f32 %v3191, 0.044715
        %v3219 = vmul.f32 %v3194, 0.044715
        %v3220 = vmul.f32 %v3196, 0.044715
        %v3221 = vmul.f32 %v3199, 0.044715
        %v3222 = vmul.f32 %v3201, 0.044715
        %v3223 = vmul.f32 %v3213, %v3179
        %v3224 = vmul.f32 %v3214, %v3181
        %v3225 = vmul.f32 %v3215, %v3184
        %v3226 = vmul.f32 %v3216, %v3186
        %v3227 = vmul.f32 %v3217, %v3189
        %v3228 = vmul.f32 %v3218, %v3191
        %v3229 = vmul.f32 %v3219, %v3194
        %v3230 = vmul.f32 %v3220, %v3196
        %v3231 = vmul.f32 %v3221, %v3199
        %v3232 = vmul.f32 %v3222, %v3201
        %v3233 = vmul.f32 %v3223, %v3179
        %v3234 = vmul.f32 %v3224, %v3181
        %v3235 = vmul.f32 %v3225, %v3184
        %v3236 = vmul.f32 %v3226, %v3186
        %v3237 = vmul.f32 %v3227, %v3189
        %v3238 = vmul.f32 %v3228, %v3191
        %v3239 = vmul.f32 %v3229, %v3194
        %v3240 = vmul.f32 %v3230, %v3196
        %v3241 = vmul.f32 %v3231, %v3199
        %v3242 = vmul.f32 %v3232, %v3201
        %v3243 = vadd.f32 %v3179, %v3233
        %v3244 = vadd.f32 %v3181, %v3234
        %v3245 = vadd.f32 %v3184, %v3235
        %v3246 = vadd.f32 %v3186, %v3236
        %v3247 = vadd.f32 %v3189, %v3237
        %v3248 = vadd.f32 %v3191, %v3238
        %v3249 = vadd.f32 %v3194, %v3239
        %v3250 = vadd.f32 %v3196, %v3240
        %v3251 = vadd.f32 %v3199, %v3241
        %v3252 = vadd.f32 %v3201, %v3242
        %v3253 = vmul.f32 %v3243, 0.7978846
        %v3254 = vmul.f32 %v3244, 0.7978846
        %v3255 = vmul.f32 %v3245, 0.7978846
        %v3256 = vmul.f32 %v3246, 0.7978846
        %v3257 = vmul.f32 %v3247, 0.7978846
        %v3258 = vmul.f32 %v3248, 0.7978846
        %v3259 = vmul.f32 %v3249, 0.7978846
        %v3260 = vmul.f32 %v3250, 0.7978846
        %v3261 = vmul.f32 %v3251, 0.7978846
        %v3262 = vmul.f32 %v3252, 0.7978846
        %v3263 = vtanh.pop %v3253
        %v3264 = vtanh.pop %v3254
        %v3265 = vtanh.pop %v3255
        %v3266 = vtanh.pop %v3256
        %v3267 = vtanh.pop %v3257
        %v3268 = vtanh.pop %v3258
        %v3269 = vtanh.pop %v3259
        %v3270 = vtanh.pop %v3260
        %v3271 = vtanh.pop %v3261
        %v3272 = vtanh.pop %v3262
        %v3273 = vadd.f32 %v3263, 1.0
        %v3274 = vadd.f32 %v3264, 1.0
        %v3275 = vadd.f32 %v3265, 1.0
        %v3276 = vadd.f32 %v3266, 1.0
        %v3277 = vadd.f32 %v3267, 1.0
        %v3278 = vadd.f32 %v3268, 1.0
        %v3279 = vadd.f32 %v3269, 1.0
        %v3280 = vadd.f32 %v3270, 1.0
        %v3281 = vadd.f32 %v3271, 1.0
        %v3282 = vadd.f32 %v3272, 1.0
        %v3283 = vmul.f32 %v3203, %v3273
        %v3284 = vmul.f32 %v3204, %v3274
        %v3285 = vmul.f32 %v3205, %v3275
        %v3286 = vmul.f32 %v3206, %v3276
        %v3287 = vmul.f32 %v3207, %v3277
        %v3288 = vmul.f32 %v3208, %v3278
        %v3289 = vmul.f32 %v3209, %v3279
        %v3290 = vmul.f32 %v3210, %v3280
        %v3291 = vmul.f32 %v3211, %v3281
        %v3292 = vmul.f32 %v3212, %v3282
        %v3293 = vld [vmem:[%s17] sm:$0xff]
        %v3294 = vld [vmem:[%s17 + $0x8] sm:$0xff]
        %v3295 = vld [vmem:[%s17 + $0x10] sm:$0xff]
        %v3296 = vld [vmem:[%s17 + $0x18] sm:$0xff]
        %v3297 = vpack.c.bf16 %v3284, %v3283
        %v3298 = vpack.c.bf16 %v3286, %v3285
        %v3299 = vpack.c.bf16 %v3288, %v3287
        %v3300 = vpack.c.bf16 %v3290, %v3289
        %v3301 = vpack.c.bf16 %v3292, %v3291
        %v3302 = vpack.c.bf16 %v3294, %v3293
        %v3303 = vpack.c.bf16 %v3296, %v3295
        %v3304 = vld [vmem:[%s18] sm:$0x1]
        %v3306 = vperm.slane %v3304, 0
        %v3309 = vsel %vm713, %v3297, 0
        %v3312 = vsel %vm713, %v3298, 0
        %v3315 = vsel %vm713, %v3299, 0
        %v3318 = vsel %vm713, %v3300, 0
        %v3321 = vsel %vm713, %v3301, 0
        %3323 = vmatpush.bf16.msra.mxu0 0
        %3324 = vmatpush.bf16.msra.mxu0 0
        %3325 = vmatpush.bf16.msra.mxu0 0
        %3326 = vmatpush.bf16.msra.mxu0 0
        %3327 = vmatpush.bf16.msra.mxu0 0
        %3328 = vmatpush.bf16.msra.mxu0 0
        %3329 = vmatpush.bf16.msra.mxu0 %v3303
        %3330 = vmatpush.bf16.msra.mxu0 %v3302
        %3331 = vmatmul.bf16.gmra.mxu0 %v3309
        %v3332 = vpop.f32.mrf.mxu0
        %v3333 = vpop.f32.mrf.mxu0
        %3334 = vmatmul.bf16.gmra.mxu0 %v3312
        %v3335 = vpop.f32.mrf.mxu0
        %v3336 = vpop.f32.mrf.mxu0
        %3337 = vmatmul.bf16.gmra.mxu0 %v3315
        %v3338 = vpop.f32.mrf.mxu0
        %v3339 = vpop.f32.mrf.mxu0
        %3340 = vmatmul.bf16.gmra.mxu0 %v3318
        %v3341 = vpop.f32.mrf.mxu0
        %v3342 = vpop.f32.mrf.mxu0
        %3343 = vmatmul.bf16.gmra.mxu0 %v3321
        %v3344 = vpop.f32.mrf.mxu0
        %v3345 = vadd.f32 %v3306, %v3344
        %v3346 = vpop.f32.mrf.mxu0
        %v3347 = vadd.f32 %v3306, %v3346
        %3348 = vdwg.mxu0
        %v3349 = vadd.f32 %v2889, %v3345
        %v3350 = vadd.f32 %v2890, %v3347
        %3351 = vst.msk [vmem:[%s636] sm:$0xff] %vm713, %v3349
        %3352 = vst.msk [vmem:[%s636 + $0x8] sm:$0xff] %vm713, %v3350
        %p3353 = scmp.lt.s32.totalorder %s32, 1
        %s3354 = scalar_select %p3353, %s32, 1
        %s3355 = smul.addr %s3354, 2
        %s3356 = smul.addr %s3355, 8
        %s3357 = scalar_lea.vmem %s19, %s3356
        // Predicated region
        $region105: #{_lambda_.2} parent=95 // pred_check
          %p3358 = pneg %p454
        $region106: #{_lambda_.2} parent=95 // pred_check_branch
          %3360 = sbr.rel (%p3358) target = $region108
        $region107: #{_lambda_.2} parent=95 // pred_region
          _
        $region108: #{_lambda_.2} parent=95 // pred_fallthru
          _
      $region96: #{_lambda_.2} parent=5 // pred_fallthru
        _
      %p3361 = scmp.le.s32.totalorder 2, %s27
      // Predicated region
      $region109: #{_lambda_.2} parent=5 // pred_check
        %p3362 = pneg %p3361
      $region110: #{_lambda_.2} parent=5 // pred_check_branch
        %3364 = sbr.rel (%p3362) target = $region112
      $region111: #{_lambda_.2} parent=5 // pred_region
        %s3365 = ssub.s32 %s27, 2
        // Predicated region
        $region113: #{_lambda_.2} parent=111 // pred_check
          %p3366 = pneg %p460
        $region114: #{_lambda_.2} parent=111 // pred_check_branch
          %3368 = sbr.rel (%p3366) target = $region116
        $region115: #{_lambda_.2} parent=111 // pred_region
          %p3369 = scmp.lt.s32.totalorder %s33, 1
          %s3370 = scalar_select %p3369, %s33, 1
          %s3371 = smul.addr %s3370, 2
          %s3372 = smul.addr %s3371, 8
          %s3373 = scalar_lea.vmem %s19, %s3372
        $region116: #{_lambda_.2} parent=111 // pred_fallthru
          _
      $region112: #{_lambda_.2} parent=5 // pred_fallthru
        _
    $region6: #{_lambda_.2} parent=1 // loop_footer
      %s31 = sadd.s32 1, %s27
    $region7: #{_lambda_.2} parent=1 // loop_footer_branch
      %26 = sbr.rel target = $region3
    $region8: #{_lambda_.2} parent=1 // loop_exit
      _
    %3374 = vsyncpa [#allocation3], 1
    %s3375 = scalar_lea.sflag [#allocation3], 1
    %3376 = vsyncpa %s3375, 1
    %3377 = vsyncpa [#allocation5], 1

// kernel: _lambda_.3
$region0: #{_lambda_.3}
  #allocation0 [shape = 'u32[]', space=smem, size = 0x4, offset = 0x4, fixed_abs, tag = 'smem constant byte address 0x4 - core index']
  #allocation1 [shape = 'u32[72,128]{1,0:T(1,128)}', space=vmem, size = 0x9000, scoped, tag = 'internal scratch']
  %s0 = inlined_call_operand.vmem [shape: f32[256,256], index: 0, kind: input, shape index: {}]
  %s1 = inlined_call_operand.vmem [shape: f32[2,32,256], index: 1, kind: input, shape index: {}]
  %s2 = inlined_call_operand.vmem [shape: f32[2,32,1], index: 2, kind: input, shape index: {}]
  %s3 = inlined_call_operand.vmem [shape: f32[2,32,32], index: 3, kind: input, shape index: {}]
  %s4 = inlined_call_operand.vmem [shape: f32[2,32,1], index: 4, kind: input, shape index: {}]
  %s5 = inlined_call_operand.vmem [shape: f32[16,32], index: 5, kind: input, shape index: {}]
  %s6 = inlined_call_operand.vmem [shape: f32[16,1], index: 6, kind: input, shape index: {}]
  %s7 = inlined_call_operand.vmem [shape: f32[2,16,256], index: 7, kind: input, shape index: {}]
  %s8 = inlined_call_operand.vmem [shape: f32[2,16,256], index: 8, kind: input, shape index: {}]
  %s9 = inlined_call_operand.vmem [shape: f32[4,16], index: 9, kind: input, shape index: {}]
  %s10 = inlined_call_operand.vmem [shape: f32[4,16], index: 10, kind: input, shape index: {}]
  %s11 = inlined_call_operand.vmem [shape: f32[4,1], index: 11, kind: input, shape index: {}]
  %s12 = inlined_call_operand.vmem [shape: f32[16,4], index: 12, kind: input, shape index: {}]
  %s13 = inlined_call_operand.vmem [shape: f32[16,1], index: 13, kind: input, shape index: {}]
  %s14 = inlined_call_operand.vmem [shape: f32[2,16,1], index: 14, kind: input, shape index: {}]
  %s15 = inlined_call_operand.vmem [shape: f32[2,16,1], index: 15, kind: input, shape index: {}]
  %s16 = inlined_call_operand.vmem [shape: f32[16,1], index: 16, kind: input, shape index: {}]
  %s17 = inlined_call_operand.vmem [shape: f32[2,16,256], index: 17, kind: output, shape index: {}]
  %s18 = sld [smem:[#allocation0]]
  $region101: #{_lambda_.3} parent=0
    _
  %s20 = ssub.s32 1, %s18
  %s21 = scalar_select 0, %s20, %s18
  loop: start=0, step=1, limit=4
  $region2: #{_lambda_.3} parent=0 // loop_pre_header
    _
  $region3: #{_lambda_.3} parent=0 // loop_header
    %s23 = sphi 0, %s27
    %p24 = scmp.ge.s32.totalorder %s23, 4
    %s31 = sphi 0, %s31
    %s33 = sphi 0, %s31
    %s34 = sphi 0, %s33
    %s48 = sphi 0, %s34
    %s54 = sphi 0, %s56
    %s57 = sphi 0, %s54
    %s58 = sphi 0, %s57
    %s74 = sphi 0, %s58
    %s80 = sphi 0, %s82
    %s83 = sphi 0, %s80
    %s84 = sphi 0, %s83
    %s100 = sphi 0, %s84
    %s106 = sphi 0, %s108
    %s109 = sphi 0, %s106
    %s110 = sphi 0, %s109
    %s126 = sphi 0, %s110
    %s132 = sphi 0, %s134
    %s135 = sphi 0, %s132
    %s136 = sphi 0, %s135
    %s152 = sphi 0, %s136
    %s156 = sphi 0, %s156
    %s158 = sphi 0, %s156
    %s159 = sphi 0, %s158
    %s173 = sphi 0, %s159
    %s177 = sphi 0, %s177
    %s179 = sphi 0, %s177
    %s180 = sphi 0, %s179
    %s194 = sphi 0, %s180
    %s200 = sphi 0, %s202
    %s203 = sphi 0, %s200
    %s204 = sphi 0, %s203
    %s220 = sphi 0, %s204
    %s226 = sphi 0, %s228
    %s229 = sphi 0, %s226
    %s230 = sphi 0, %s229
    %s246 = sphi 0, %s230
    %s250 = sphi 0, %s250
    %s252 = sphi 0, %s250
    %s253 = sphi 0, %s252
    %s267 = sphi 0, %s253
    %s271 = sphi 0, %s271
    %s273 = sphi 0, %s271
    %s274 = sphi 0, %s273
    %s288 = sphi 0, %s274
    %s292 = sphi 0, %s292
    %s294 = sphi 0, %s292
    %s295 = sphi 0, %s294
    %s309 = sphi 0, %s295
    %s313 = sphi 0, %s313
    %s315 = sphi 0, %s313
    %s316 = sphi 0, %s315
    %s330 = sphi 0, %s316
    %s334 = sphi 0, %s334
    %s336 = sphi 0, %s334
    %s337 = sphi 0, %s336
    %s351 = sphi 0, %s337
    %s357 = sphi 0, %s359
    %s360 = sphi 0, %s357
    %s361 = sphi 0, %s360
    %s377 = sphi 0, %s361
    %s383 = sphi 0, %s385
    %s386 = sphi 0, %s383
    %s387 = sphi 0, %s386
    %s403 = sphi 0, %s387
    %s407 = sphi 0, %s407
    %s409 = sphi 0, %s407
    %s410 = sphi 0, %s409
    %s424 = sphi 0, %s410
    %s430 = sphi 0, %s432
    %s433 = sphi 0, %s430
    %s434 = sphi 0, %s433
    %s450 = sphi 0, %s434
  $region4: #{_lambda_.3} parent=0 // loop_header_branch
    %26 = sbr.rel (%p24) target = $region8
  $region5: #{_lambda_.3} parent=0 // loop_body
    %s28 = ssub.s32 %s23, 1
    %s29 = ssub.s32 %s23, 2
    %s30 = sadd.s32 %s23, 1
    %s32 = sadd.s32 %s31, 1
    %p35 = scmp.eq.s32.totalorder %s23, 1
    %p36 = scmp.ne.s32.totalorder %s31, %s33
    %p37 = scmp.eq.s32.totalorder %s23, 0
    %p38 = por %p36, %p37
    %p39 = scmp.ne.s32.totalorder %s31, %s33
    %p40 = scmp.eq.s32.totalorder %s28, 1
    %p41 = por %p39, %p40
    %p42 = scmp.ne.s32.totalorder %s33, %s34
    %p43 = scmp.eq.s32.totalorder %s28, 0
    %p44 = por %p42, %p43
    %p45 = scmp.ne.s32.totalorder %s33, %s34
    %p46 = scmp.eq.s32.totalorder %s29, 1
    %p47 = por %p45, %p46
    %p49 = scmp.ne.s32.totalorder %s34, %s48
    %p50 = scmp.eq.s32.totalorder %s29, 0
    %p51 = por %p49, %p50
    %s52 = ssub.s32 %s23, %s30
    %p53 = scmp.eq.s32.totalorder %s52, 0
    %s55 = sadd.s32 %s54, 1
    %s56 = scalar_select %p53, %s54, %s55
    %p59 = pneg %p53
    %p60 = scmp.eq.s32.totalorder %s23, 1
    %p61 = por %p59, %p60
    %p62 = scmp.ne.s32.totalorder %s54, %s57
    %p63 = scmp.eq.s32.totalorder %s23, 0
    %p64 = por %p62, %p63
    %p65 = scmp.ne.s32.totalorder %s54, %s57
    %p66 = scmp.eq.s32.totalorder %s28, 1
    %p67 = por %p65, %p66
    %p68 = scmp.ne.s32.totalorder %s57, %s58
    %p69 = scmp.eq.s32.totalorder %s28, 0
    %p70 = por %p68, %p69
    %p71 = scmp.ne.s32.totalorder %s57, %s58
    %p72 = scmp.eq.s32.totalorder %s29, 1
    %p73 = por %p71, %p72
    %p75 = scmp.ne.s32.totalorder %s58, %s74
    %p76 = scmp.eq.s32.totalorder %s29, 0
    %p77 = por %p75, %p76
    %s78 = ssub.s32 %s23, %s30
    %p79 = scmp.eq.s32.totalorder %s78, 0
    %s81 = sadd.s32 %s80, 1
    %s82 = scalar_select %p79, %s80, %s81
    %p85 = pneg %p79
    %p86 = scmp.eq.s32.totalorder %s23, 1
    %p87 = por %p85, %p86
    %p88 = scmp.ne.s32.totalorder %s80, %s83
    %p89 = scmp.eq.s32.totalorder %s23, 0
    %p90 = por %p88, %p89
    %p91 = scmp.ne.s32.totalorder %s80, %s83
    %p92 = scmp.eq.s32.totalorder %s28, 1
    %p93 = por %p91, %p92
    %p94 = scmp.ne.s32.totalorder %s83, %s84
    %p95 = scmp.eq.s32.totalorder %s28, 0
    %p96 = por %p94, %p95
    %p97 = scmp.ne.s32.totalorder %s83, %s84
    %p98 = scmp.eq.s32.totalorder %s29, 1
    %p99 = por %p97, %p98
    %p101 = scmp.ne.s32.totalorder %s84, %s100
    %p102 = scmp.eq.s32.totalorder %s29, 0
    %p103 = por %p101, %p102
    %s104 = ssub.s32 %s23, %s30
    %p105 = scmp.eq.s32.totalorder %s104, 0
    %s107 = sadd.s32 %s106, 1
    %s108 = scalar_select %p105, %s106, %s107
    %p111 = pneg %p105
    %p112 = scmp.eq.s32.totalorder %s23, 1
    %p113 = por %p111, %p112
    %p114 = scmp.ne.s32.totalorder %s106, %s109
    %p115 = scmp.eq.s32.totalorder %s23, 0
    %p116 = por %p114, %p115
    %p117 = scmp.ne.s32.totalorder %s106, %s109
    %p118 = scmp.eq.s32.totalorder %s28, 1
    %p119 = por %p117, %p118
    %p120 = scmp.ne.s32.totalorder %s109, %s110
    %p121 = scmp.eq.s32.totalorder %s28, 0
    %p122 = por %p120, %p121
    %p123 = scmp.ne.s32.totalorder %s109, %s110
    %p124 = scmp.eq.s32.totalorder %s29, 1
    %p125 = por %p123, %p124
    %p127 = scmp.ne.s32.totalorder %s110, %s126
    %p128 = scmp.eq.s32.totalorder %s29, 0
    %p129 = por %p127, %p128
    %s130 = ssub.s32 %s23, %s30
    %p131 = scmp.eq.s32.totalorder %s130, 0
    %s133 = sadd.s32 %s132, 1
    %s134 = scalar_select %p131, %s132, %s133
    %p137 = pneg %p131
    %p138 = scmp.eq.s32.totalorder %s23, 1
    %p139 = por %p137, %p138
    %p140 = scmp.ne.s32.totalorder %s132, %s135
    %p141 = scmp.eq.s32.totalorder %s23, 0
    %p142 = por %p140, %p141
    %p143 = scmp.ne.s32.totalorder %s132, %s135
    %p144 = scmp.eq.s32.totalorder %s28, 1
    %p145 = por %p143, %p144
    %p146 = scmp.ne.s32.totalorder %s135, %s136
    %p147 = scmp.eq.s32.totalorder %s28, 0
    %p148 = por %p146, %p147
    %p149 = scmp.ne.s32.totalorder %s135, %s136
    %p150 = scmp.eq.s32.totalorder %s29, 1
    %p151 = por %p149, %p150
    %p153 = scmp.ne.s32.totalorder %s136, %s152
    %p154 = scmp.eq.s32.totalorder %s29, 0
    %p155 = por %p153, %p154
    %s157 = sadd.s32 %s156, 1
    %p160 = scmp.eq.s32.totalorder %s23, 1
    %p161 = scmp.ne.s32.totalorder %s156, %s158
    %p162 = scmp.eq.s32.totalorder %s23, 0
    %p163 = por %p161, %p162
    %p164 = scmp.ne.s32.totalorder %s156, %s158
    %p165 = scmp.eq.s32.totalorder %s28, 1
    %p166 = por %p164, %p165
    %p167 = scmp.ne.s32.totalorder %s158, %s159
    %p168 = scmp.eq.s32.totalorder %s28, 0
    %p169 = por %p167, %p168
    %p170 = scmp.ne.s32.totalorder %s158, %s159
    %p171 = scmp.eq.s32.totalorder %s29, 1
    %p172 = por %p170, %p171
    %p174 = scmp.ne.s32.totalorder %s159, %s173
    %p175 = scmp.eq.s32.totalorder %s29, 0
    %p176 = por %p174, %p175
    %s178 = sadd.s32 %s177, 1
    %p181 = scmp.eq.s32.totalorder %s23, 1
    %p182 = scmp.ne.s32.totalorder %s177, %s179
    %p183 = scmp.eq.s32.totalorder %s23, 0
    %p184 = por %p182, %p183
    %p185 = scmp.ne.s32.totalorder %s177, %s179
    %p186 = scmp.eq.s32.totalorder %s28, 1
    %p187 = por %p185, %p186
    %p188 = scmp.ne.s32.totalorder %s179, %s180
    %p189 = scmp.eq.s32.totalorder %s28, 0
    %p190 = por %p188, %p189
    %p191 = scmp.ne.s32.totalorder %s179, %s180
    %p192 = scmp.eq.s32.totalorder %s29, 1
    %p193 = por %p191, %p192
    %p195 = scmp.ne.s32.totalorder %s180, %s194
    %p196 = scmp.eq.s32.totalorder %s29, 0
    %p197 = por %p195, %p196
    %s198 = ssub.s32 %s23, %s30
    %p199 = scmp.eq.s32.totalorder %s198, 0
    %s201 = sadd.s32 %s200, 1
    %s202 = scalar_select %p199, %s200, %s201
    %p205 = pneg %p199
    %p206 = scmp.eq.s32.totalorder %s23, 1
    %p207 = por %p205, %p206
    %p208 = scmp.ne.s32.totalorder %s200, %s203
    %p209 = scmp.eq.s32.totalorder %s23, 0
    %p210 = por %p208, %p209
    %p211 = scmp.ne.s32.totalorder %s200, %s203
    %p212 = scmp.eq.s32.totalorder %s28, 1
    %p213 = por %p211, %p212
    %p214 = scmp.ne.s32.totalorder %s203, %s204
    %p215 = scmp.eq.s32.totalorder %s28, 0
    %p216 = por %p214, %p215
    %p217 = scmp.ne.s32.totalorder %s203, %s204
    %p218 = scmp.eq.s32.totalorder %s29, 1
    %p219 = por %p217, %p218
    %p221 = scmp.ne.s32.totalorder %s204, %s220
    %p222 = scmp.eq.s32.totalorder %s29, 0
    %p223 = por %p221, %p222
    %s224 = ssub.s32 %s23, %s30
    %p225 = scmp.eq.s32.totalorder %s224, 0
    %s227 = sadd.s32 %s226, 1
    %s228 = scalar_select %p225, %s226, %s227
    %p231 = pneg %p225
    %p232 = scmp.eq.s32.totalorder %s23, 1
    %p233 = por %p231, %p232
    %p234 = scmp.ne.s32.totalorder %s226, %s229
    %p235 = scmp.eq.s32.totalorder %s23, 0
    %p236 = por %p234, %p235
    %p237 = scmp.ne.s32.totalorder %s226, %s229
    %p238 = scmp.eq.s32.totalorder %s28, 1
    %p239 = por %p237, %p238
    %p240 = scmp.ne.s32.totalorder %s229, %s230
    %p241 = scmp.eq.s32.totalorder %s28, 0
    %p242 = por %p240, %p241
    %p243 = scmp.ne.s32.totalorder %s229, %s230
    %p244 = scmp.eq.s32.totalorder %s29, 1
    %p245 = por %p243, %p244
    %p247 = scmp.ne.s32.totalorder %s230, %s246
    %p248 = scmp.eq.s32.totalorder %s29, 0
    %p249 = por %p247, %p248
    %s251 = sadd.s32 %s250, 1
    %p254 = scmp.eq.s32.totalorder %s23, 1
    %p255 = scmp.ne.s32.totalorder %s250, %s252
    %p256 = scmp.eq.s32.totalorder %s23, 0
    %p257 = por %p255, %p256
    %p258 = scmp.ne.s32.totalorder %s250, %s252
    %p259 = scmp.eq.s32.totalorder %s28, 1
    %p260 = por %p258, %p259
    %p261 = scmp.ne.s32.totalorder %s252, %s253
    %p262 = scmp.eq.s32.totalorder %s28, 0
    %p263 = por %p261, %p262
    %p264 = scmp.ne.s32.totalorder %s252, %s253
    %p265 = scmp.eq.s32.totalorder %s29, 1
    %p266 = por %p264, %p265
    %p268 = scmp.ne.s32.totalorder %s253, %s267
    %p269 = scmp.eq.s32.totalorder %s29, 0
    %p270 = por %p268, %p269
    %s272 = sadd.s32 %s271, 1
    %p275 = scmp.eq.s32.totalorder %s23, 1
    %p276 = scmp.ne.s32.totalorder %s271, %s273
    %p277 = scmp.eq.s32.totalorder %s23, 0
    %p278 = por %p276, %p277
    %p279 = scmp.ne.s32.totalorder %s271, %s273
    %p280 = scmp.eq.s32.totalorder %s28, 1
    %p281 = por %p279, %p280
    %p282 = scmp.ne.s32.totalorder %s273, %s274
    %p283 = scmp.eq.s32.totalorder %s28, 0
    %p284 = por %p282, %p283
    %p285 = scmp.ne.s32.totalorder %s273, %s274
    %p286 = scmp.eq.s32.totalorder %s29, 1
    %p287 = por %p285, %p286
    %p289 = scmp.ne.s32.totalorder %s274, %s288
    %p290 = scmp.eq.s32.totalorder %s29, 0
    %p291 = por %p289, %p290
    %s293 = sadd.s32 %s292, 1
    %p296 = scmp.eq.s32.totalorder %s23, 1
    %p297 = scmp.ne.s32.totalorder %s292, %s294
    %p298 = scmp.eq.s32.totalorder %s23, 0
    %p299 = por %p297, %p298
    %p300 = scmp.ne.s32.totalorder %s292, %s294
    %p301 = scmp.eq.s32.totalorder %s28, 1
    %p302 = por %p300, %p301
    %p303 = scmp.ne.s32.totalorder %s294, %s295
    %p304 = scmp.eq.s32.totalorder %s28, 0
    %p305 = por %p303, %p304
    %p306 = scmp.ne.s32.totalorder %s294, %s295
    %p307 = scmp.eq.s32.totalorder %s29, 1
    %p308 = por %p306, %p307
    %p310 = scmp.ne.s32.totalorder %s295, %s309
    %p311 = scmp.eq.s32.totalorder %s29, 0
    %p312 = por %p310, %p311
    %s314 = sadd.s32 %s313, 1
    %p317 = scmp.eq.s32.totalorder %s23, 1
    %p318 = scmp.ne.s32.totalorder %s313, %s315
    %p319 = scmp.eq.s32.totalorder %s23, 0
    %p320 = por %p318, %p319
    %p321 = scmp.ne.s32.totalorder %s313, %s315
    %p322 = scmp.eq.s32.totalorder %s28, 1
    %p323 = por %p321, %p322
    %p324 = scmp.ne.s32.totalorder %s315, %s316
    %p325 = scmp.eq.s32.totalorder %s28, 0
    %p326 = por %p324, %p325
    %p327 = scmp.ne.s32.totalorder %s315, %s316
    %p328 = scmp.eq.s32.totalorder %s29, 1
    %p329 = por %p327, %p328
    %p331 = scmp.ne.s32.totalorder %s316, %s330
    %p332 = scmp.eq.s32.totalorder %s29, 0
    %p333 = por %p331, %p332
    %s335 = sadd.s32 %s334, 1
    %p338 = scmp.eq.s32.totalorder %s23, 1
    %p339 = scmp.ne.s32.totalorder %s334, %s336
    %p340 = scmp.eq.s32.totalorder %s23, 0
    %p341 = por %p339, %p340
    %p342 = scmp.ne.s32.totalorder %s334, %s336
    %p343 = scmp.eq.s32.totalorder %s28, 1
    %p344 = por %p342, %p343
    %p345 = scmp.ne.s32.totalorder %s336, %s337
    %p346 = scmp.eq.s32.totalorder %s28, 0
    %p347 = por %p345, %p346
    %p348 = scmp.ne.s32.totalorder %s336, %s337
    %p349 = scmp.eq.s32.totalorder %s29, 1
    %p350 = por %p348, %p349
    %p352 = scmp.ne.s32.totalorder %s337, %s351
    %p353 = scmp.eq.s32.totalorder %s29, 0
    %p354 = por %p352, %p353
    %s355 = ssub.s32 %s23, %s30
    %p356 = scmp.eq.s32.totalorder %s355, 0
    %s358 = sadd.s32 %s357, 1
    %s359 = scalar_select %p356, %s357, %s358
    %p362 = pneg %p356
    %p363 = scmp.eq.s32.totalorder %s23, 1
    %p364 = por %p362, %p363
    %p365 = scmp.ne.s32.totalorder %s357, %s360
    %p366 = scmp.eq.s32.totalorder %s23, 0
    %p367 = por %p365, %p366
    %p368 = scmp.ne.s32.totalorder %s357, %s360
    %p369 = scmp.eq.s32.totalorder %s28, 1
    %p370 = por %p368, %p369
    %p371 = scmp.ne.s32.totalorder %s360, %s361
    %p372 = scmp.eq.s32.totalorder %s28, 0
    %p373 = por %p371, %p372
    %p374 = scmp.ne.s32.totalorder %s360, %s361
    %p375 = scmp.eq.s32.totalorder %s29, 1
    %p376 = por %p374, %p375
    %p378 = scmp.ne.s32.totalorder %s361, %s377
    %p379 = scmp.eq.s32.totalorder %s29, 0
    %p380 = por %p378, %p379
    %s381 = ssub.s32 %s23, %s30
    %p382 = scmp.eq.s32.totalorder %s381, 0
    %s384 = sadd.s32 %s383, 1
    %s385 = scalar_select %p382, %s383, %s384
    %p388 = pneg %p382
    %p389 = scmp.eq.s32.totalorder %s23, 1
    %p390 = por %p388, %p389
    %p391 = scmp.ne.s32.totalorder %s383, %s386
    %p392 = scmp.eq.s32.totalorder %s23, 0
    %p393 = por %p391, %p392
    %p394 = scmp.ne.s32.totalorder %s383, %s386
    %p395 = scmp.eq.s32.totalorder %s28, 1
    %p396 = por %p394, %p395
    %p397 = scmp.ne.s32.totalorder %s386, %s387
    %p398 = scmp.eq.s32.totalorder %s28, 0
    %p399 = por %p397, %p398
    %p400 = scmp.ne.s32.totalorder %s386, %s387
    %p401 = scmp.eq.s32.totalorder %s29, 1
    %p402 = por %p400, %p401
    %p404 = scmp.ne.s32.totalorder %s387, %s403
    %p405 = scmp.eq.s32.totalorder %s29, 0
    %p406 = por %p404, %p405
    %s408 = sadd.s32 %s407, 1
    %p411 = scmp.eq.s32.totalorder %s23, 1
    %p412 = scmp.ne.s32.totalorder %s407, %s409
    %p413 = scmp.eq.s32.totalorder %s23, 0
    %p414 = por %p412, %p413
    %p415 = scmp.ne.s32.totalorder %s407, %s409
    %p416 = scmp.eq.s32.totalorder %s28, 1
    %p417 = por %p415, %p416
    %p418 = scmp.ne.s32.totalorder %s409, %s410
    %p419 = scmp.eq.s32.totalorder %s28, 0
    %p420 = por %p418, %p419
    %p421 = scmp.ne.s32.totalorder %s409, %s410
    %p422 = scmp.eq.s32.totalorder %s29, 1
    %p423 = por %p421, %p422
    %p425 = scmp.ne.s32.totalorder %s410, %s424
    %p426 = scmp.eq.s32.totalorder %s29, 0
    %p427 = por %p425, %p426
    %s428 = ssub.s32 %s23, %s30
    %p429 = scmp.eq.s32.totalorder %s428, 0
    %s431 = sadd.s32 %s430, 1
    %s432 = scalar_select %p429, %s430, %s431
    %p435 = pneg %p429
    %p436 = scmp.eq.s32.totalorder %s23, 1
    %p437 = por %p435, %p436
    %p438 = scmp.ne.s32.totalorder %s430, %s433
    %p439 = scmp.eq.s32.totalorder %s23, 0
    %p440 = por %p438, %p439
    %p441 = scmp.ne.s32.totalorder %s430, %s433
    %p442 = scmp.eq.s32.totalorder %s28, 1
    %p443 = por %p441, %p442
    %p444 = scmp.ne.s32.totalorder %s433, %s434
    %p445 = scmp.eq.s32.totalorder %s28, 0
    %p446 = por %p444, %p445
    %p447 = scmp.ne.s32.totalorder %s433, %s434
    %p448 = scmp.eq.s32.totalorder %s29, 1
    %p449 = por %p447, %p448
    %p451 = scmp.ne.s32.totalorder %s434, %s450
    %p452 = scmp.eq.s32.totalorder %s29, 0
    %p453 = por %p451, %p452
    %p454 = scmp.le.s32.totalorder 1, %s23
    %p455 = scmp.lt.s32.totalorder %s23, 3
    %p456 = pnand %p454, %p455
    %p457 = pneg %p456
    // Predicated region
    $region9: #{_lambda_.3} parent=5 // pred_check
      _
    $region10: #{_lambda_.3} parent=5 // pred_check_branch
      %459 = sbr.rel (%p456) target = $region12
    $region11: #{_lambda_.3} parent=5 // pred_region
      %s460 = ssub.s32 %s23, 1
      // Predicated region
      $region13: #{_lambda_.3} parent=11 // pred_check
        %p461 = pneg %p44
      $region14: #{_lambda_.3} parent=11 // pred_check_branch
        %463 = sbr.rel (%p461) target = $region16
      $region15: #{_lambda_.3} parent=11 // pred_region
        _
      $region16: #{_lambda_.3} parent=11 // pred_fallthru
        _
      // Predicated region
      $region17: #{_lambda_.3} parent=11 // pred_check
        %p464 = pneg %p169
      $region18: #{_lambda_.3} parent=11 // pred_check_branch
        %466 = sbr.rel (%p464) target = $region20
      $region19: #{_lambda_.3} parent=11 // pred_region
        _
      $region20: #{_lambda_.3} parent=11 // pred_fallthru
        _
      // Predicated region
      $region21: #{_lambda_.3} parent=11 // pred_check
        %p467 = pneg %p190
      $region22: #{_lambda_.3} parent=11 // pred_check_branch
        %469 = sbr.rel (%p467) target = $region24
      $region23: #{_lambda_.3} parent=11 // pred_region
        _
      $region24: #{_lambda_.3} parent=11 // pred_fallthru
        _
      // Predicated region
      $region25: #{_lambda_.3} parent=11 // pred_check
        %p470 = pneg %p263
      $region26: #{_lambda_.3} parent=11 // pred_check_branch
        %472 = sbr.rel (%p470) target = $region28
      $region27: #{_lambda_.3} parent=11 // pred_region
        _
      $region28: #{_lambda_.3} parent=11 // pred_fallthru
        _
      // Predicated region
      $region29: #{_lambda_.3} parent=11 // pred_check
        %p473 = pneg %p284
      $region30: #{_lambda_.3} parent=11 // pred_check_branch
        %475 = sbr.rel (%p473) target = $region32
      $region31: #{_lambda_.3} parent=11 // pred_region
        _
      $region32: #{_lambda_.3} parent=11 // pred_fallthru
        _
      // Predicated region
      $region33: #{_lambda_.3} parent=11 // pred_check
        %p476 = pneg %p305
      $region34: #{_lambda_.3} parent=11 // pred_check_branch
        %478 = sbr.rel (%p476) target = $region36
      $region35: #{_lambda_.3} parent=11 // pred_region
        _
      $region36: #{_lambda_.3} parent=11 // pred_fallthru
        _
      // Predicated region
      $region37: #{_lambda_.3} parent=11 // pred_check
        %p479 = pneg %p326
      $region38: #{_lambda_.3} parent=11 // pred_check_branch
        %481 = sbr.rel (%p479) target = $region40
      $region39: #{_lambda_.3} parent=11 // pred_region
        _
      $region40: #{_lambda_.3} parent=11 // pred_fallthru
        _
      // Predicated region
      $region41: #{_lambda_.3} parent=11 // pred_check
        %p482 = pneg %p347
      $region42: #{_lambda_.3} parent=11 // pred_check_branch
        %484 = sbr.rel (%p482) target = $region44
      $region43: #{_lambda_.3} parent=11 // pred_region
        _
      $region44: #{_lambda_.3} parent=11 // pred_fallthru
        _
      // Predicated region
      $region45: #{_lambda_.3} parent=11 // pred_check
        %p485 = pneg %p420
      $region46: #{_lambda_.3} parent=11 // pred_check_branch
        %487 = sbr.rel (%p485) target = $region48
      $region47: #{_lambda_.3} parent=11 // pred_region
        _
      $region48: #{_lambda_.3} parent=11 // pred_fallthru
        _
    $region12: #{_lambda_.3} parent=5 // pred_fallthru
      _
    %p488 = scmp.lt.s32.totalorder %s23, 2
    // Predicated region
    $region49: #{_lambda_.3} parent=5 // pred_check
      %p489 = pneg %p488
    $region50: #{_lambda_.3} parent=5 // pred_check_branch
      %491 = sbr.rel (%p489) target = $region52
    $region51: #{_lambda_.3} parent=5 // pred_region
      // Predicated region
      $region53: #{_lambda_.3} parent=51 // pred_check
        %p492 = pneg %p64
      $region54: #{_lambda_.3} parent=51 // pred_check_branch
        %494 = sbr.rel (%p492) target = $region56
      $region55: #{_lambda_.3} parent=51 // pred_region
        %p495 = scmp.lt.s32.totalorder %s23, 1
        %s496 = scalar_select %p495, %s23, 1
        %s497 = smul.addr %s496, 8
        %s498 = smul.addr %s497, 8
        %s499 = scalar_lea.vmem %s1, %s498
      $region56: #{_lambda_.3} parent=51 // pred_fallthru
        _
      // Predicated region
      $region57: #{_lambda_.3} parent=51 // pred_check
        %p500 = pneg %p90
      $region58: #{_lambda_.3} parent=51 // pred_check_branch
        %502 = sbr.rel (%p500) target = $region60
      $region59: #{_lambda_.3} parent=51 // pred_region
        %p503 = scmp.lt.s32.totalorder %s23, 1
        %s504 = scalar_select %p503, %s23, 1
        %s505 = smul.addr %s504, 4
        %s506 = smul.addr %s505, 8
        %s507 = scalar_lea.vmem %s2, %s506
      $region60: #{_lambda_.3} parent=51 // pred_fallthru
        _
      // Predicated region
      $region61: #{_lambda_.3} parent=51 // pred_check
        %p508 = pneg %p116
      $region62: #{_lambda_.3} parent=51 // pred_check_branch
        %510 = sbr.rel (%p508) target = $region64
      $region63: #{_lambda_.3} parent=51 // pred_region
        %p511 = scmp.lt.s32.totalorder %s23, 1
        %s512 = scalar_select %p511, %s23, 1
        %s513 = smul.addr %s512, 4
        %s514 = smul.addr %s513, 8
        %s515 = scalar_lea.vmem %s3, %s514
      $region64: #{_lambda_.3} parent=51 // pred_fallthru
        _
      // Predicated region
      $region65: #{_lambda_.3} parent=51 // pred_check
        %p516 = pneg %p142
      $region66: #{_lambda_.3} parent=51 // pred_check_branch
        %518 = sbr.rel (%p516) target = $region68
      $region67: #{_lambda_.3} parent=51 // pred_region
        %p519 = scmp.lt.s32.totalorder %s23, 1
        %s520 = scalar_select %p519, %s23, 1
        %s521 = smul.addr %s520, 4
        %s522 = smul.addr %s521, 8
        %s523 = scalar_lea.vmem %s4, %s522
      $region68: #{_lambda_.3} parent=51 // pred_fallthru
        _
      // Predicated region
      $region69: #{_lambda_.3} parent=51 // pred_check
        %p524 = pneg %p210
      $region70: #{_lambda_.3} parent=51 // pred_check_branch
        %526 = sbr.rel (%p524) target = $region72
      $region71: #{_lambda_.3} parent=51 // pred_region
        %p527 = scmp.lt.s32.totalorder %s23, 1
        %s528 = scalar_select %p527, %s23, 1
        %s529 = smul.addr %s528, 4
        %s530 = smul.addr %s529, 8
        %s531 = scalar_lea.vmem %s7, %s530
      $region72: #{_lambda_.3} parent=51 // pred_fallthru
        _
      // Predicated region
      $region73: #{_lambda_.3} parent=51 // pred_check
        %p532 = pneg %p236
      $region74: #{_lambda_.3} parent=51 // pred_check_branch
        %534 = sbr.rel (%p532) target = $region76
      $region75: #{_lambda_.3} parent=51 // pred_region
        %p535 = scmp.lt.s32.totalorder %s23, 1
        %s536 = scalar_select %p535, %s23, 1
        %s537 = smul.addr %s536, 4
        %s538 = smul.addr %s537, 8
        %s539 = scalar_lea.vmem %s8, %s538
      $region76: #{_lambda_.3} parent=51 // pred_fallthru
        _
      // Predicated region
      $region77: #{_lambda_.3} parent=51 // pred_check
        %p540 = pneg %p367
      $region78: #{_lambda_.3} parent=51 // pred_check_branch
        %542 = sbr.rel (%p540) target = $region80
      $region79: #{_lambda_.3} parent=51 // pred_region
        %p543 = scmp.lt.s32.totalorder %s23, 1
        %s544 = scalar_select %p543, %s23, 1
        %s545 = smul.addr %s544, 2
        %s546 = smul.addr %s545, 8
        %s547 = scalar_lea.vmem %s14, %s546
      $region80: #{_lambda_.3} parent=51 // pred_fallthru
        _
      // Predicated region
      $region81: #{_lambda_.3} parent=51 // pred_check
        %p548 = pneg %p393
      $region82: #{_lambda_.3} parent=51 // pred_check_branch
        %550 = sbr.rel (%p548) target = $region84
      $region83: #{_lambda_.3} parent=51 // pred_region
        %p551 = scmp.lt.s32.totalorder %s23, 1
        %s552 = scalar_select %p551, %s23, 1
        %s553 = smul.addr %s552, 2
        %s554 = smul.addr %s553, 8
        %s555 = scalar_lea.vmem %s15, %s554
      $region84: #{_lambda_.3} parent=51 // pred_fallthru
        _
    $region52: #{_lambda_.3} parent=5 // pred_fallthru
      _
    %p556 = scmp.le.s32.totalorder 1, %s23
    %p557 = scmp.lt.s32.totalorder %s23, 3
    %p558 = pnand %p556, %p557
    %p559 = pneg %p558
    // Predicated region
    $region85: #{_lambda_.3} parent=5 // pred_check
      _
    $region86: #{_lambda_.3} parent=5 // pred_check_branch
      %561 = sbr.rel (%p558) target = $region88
    $region87: #{_lambda_.3} parent=5 // pred_region
      %s562 = ssub.s32 %s23, 1
      %p563 = pneg %p44
      %p564 = pneg %p41
      %p565 = scmp.lt.s32.totalorder %s28, 1
      %s566 = scalar_select %p565, %s28, 1
      %s567 = smul.addr %s566, 8
      %s568 = smul.addr %s567, 8
      %s569 = scalar_lea.vmem %s1, %s568
      %p570 = pneg %p70
      %p571 = pneg %p67
      %p572 = scmp.lt.s32.totalorder %s28, 1
      %s573 = scalar_select %p572, %s28, 1
      %s574 = smul.addr %s573, 4
      %s575 = smul.addr %s574, 8
      %s576 = scalar_lea.vmem %s2, %s575
      %p577 = pneg %p96
      %p578 = pneg %p93
      %p579 = scmp.lt.s32.totalorder %s28, 1
      %s580 = scalar_select %p579, %s28, 1
      %s581 = smul.addr %s580, 4
      %s582 = smul.addr %s581, 8
      %s583 = scalar_lea.vmem %s3, %s582
      %p584 = pneg %p122
      %p585 = pneg %p119
      %p586 = scmp.lt.s32.totalorder %s28, 1
      %s587 = scalar_select %p586, %s28, 1
      %s588 = smul.addr %s587, 4
      %s589 = smul.addr %s588, 8
      %s590 = scalar_lea.vmem %s4, %s589
      %p591 = pneg %p148
      %p592 = pneg %p145
      %p593 = pneg %p169
      %p594 = pneg %p166
      %p595 = pneg %p190
      %p596 = pneg %p187
      %p597 = scmp.lt.s32.totalorder %s28, 1
      %s598 = scalar_select %p597, %s28, 1
      %s599 = smul.addr %s598, 4
      %s600 = smul.addr %s599, 8
      %s601 = scalar_lea.vmem %s7, %s600
      %p602 = pneg %p216
      %p603 = pneg %p213
      %p604 = scmp.lt.s32.totalorder %s28, 1
      %s605 = scalar_select %p604, %s28, 1
      %s606 = smul.addr %s605, 4
      %s607 = smul.addr %s606, 8
      %s608 = scalar_lea.vmem %s8, %s607
      %p609 = pneg %p242
      %p610 = pneg %p239
      %p611 = pneg %p263
      %p612 = pneg %p260
      %p613 = pneg %p284
      %p614 = pneg %p281
      %p615 = pneg %p305
      %p616 = pneg %p302
      %p617 = pneg %p326
      %p618 = pneg %p323
      %p619 = pneg %p347
      %p620 = pneg %p344
      %p621 = scmp.lt.s32.totalorder %s28, 1
      %s622 = scalar_select %p621, %s28, 1
      %s623 = smul.addr %s622, 2
      %s624 = smul.addr %s623, 8
      %s625 = scalar_lea.vmem %s14, %s624
      %p626 = pneg %p373
      %p627 = pneg %p370
      %p628 = scmp.lt.s32.totalorder %s28, 1
      %s629 = scalar_select %p628, %s28, 1
      %s630 = smul.addr %s629, 2
      %s631 = smul.addr %s630, 8
      %s632 = scalar_lea.vmem %s15, %s631
      %p633 = pneg %p399
      %p634 = pneg %p396
      %p635 = pneg %p420
      %p636 = pneg %p417
      %p637 = pneg %p446
      %p638 = pneg %p443
      %p639 = scmp.lt.s32.totalorder %s28, 1
      %s640 = scalar_select %p639, %s28, 1
      %s641 = smul.addr %s640, 4
      %s642 = smul.addr %s641, 8
      %s643 = scalar_lea.vmem %s17, %s642
      %p644 = scmp.lt.s32.totalorder %s28, 1
      %s645 = scalar_select %p644, %s28, 1
      %s646 = smul.addr %s645, 8
      %s647 = smul.addr %s646, 8
      %s648 = scalar_lea.vmem %s1, %s647
      %p649 = scmp.lt.s32.totalorder %s28, 1
      %s650 = scalar_select %p649, %s28, 1
      %s651 = smul.addr %s650, 4
      %s652 = smul.addr %s651, 8
      %s653 = scalar_lea.vmem %s2, %s652
      %p654 = scmp.lt.s32.totalorder %s28, 1
      %s655 = scalar_select %p654, %s28, 1
      %s656 = smul.addr %s655, 4
      %s657 = smul.addr %s656, 8
      %s658 = scalar_lea.vmem %s3, %s657
      %p659 = scmp.lt.s32.totalorder %s28, 1
      %s660 = scalar_select %p659, %s28, 1
      %s661 = smul.addr %s660, 4
      %s662 = smul.addr %s661, 8
      %s663 = scalar_lea.vmem %s4, %s662
      %p664 = scmp.lt.s32.totalorder %s28, 1
      %s665 = scalar_select %p664, %s28, 1
      %s666 = smul.addr %s665, 4
      %s667 = smul.addr %s666, 8
      %s668 = scalar_lea.vmem %s7, %s667
      %p669 = scmp.lt.s32.totalorder %s28, 1
      %s670 = scalar_select %p669, %s28, 1
      %s671 = smul.addr %s670, 4
      %s672 = smul.addr %s671, 8
      %s673 = scalar_lea.vmem %s8, %s672
      %p674 = scmp.lt.s32.totalorder %s28, 1
      %s675 = scalar_select %p674, %s28, 1
      %s676 = smul.addr %s675, 2
      %s677 = smul.addr %s676, 8
      %s678 = scalar_lea.vmem %s14, %s677
      %p679 = scmp.lt.s32.totalorder %s28, 1
      %s680 = scalar_select %p679, %s28, 1
      %s681 = smul.addr %s680, 2
      %s682 = smul.addr %s681, 8
      %s683 = scalar_lea.vmem %s15, %s682
      %p684 = scmp.lt.s32.totalorder %s28, 1
      %s685 = scalar_select %p684, %s28, 1
      %s686 = smul.addr %s685, 4
      %s687 = smul.addr %s686, 8
      %s688 = scalar_lea.vmem %s17, %s687
      %v690 = vld [vmem:[%s0] sm:$0xff]
      %v691 = vld [vmem:[%s0 + $0x8] sm:$0xff]
      %v692 = vld [vmem:[%s0 + $0x10] sm:$0xff]
      %v693 = vld [vmem:[%s0 + $0x18] sm:$0xff]
      %v694 = vld [vmem:[%s0 + $0x20] sm:$0xff]
      %v695 = vld [vmem:[%s0 + $0x28] sm:$0xff]
      %v696 = vld [vmem:[%s0 + $0x30] sm:$0xff]
      %v697 = vld [vmem:[%s0 + $0x38] sm:$0xff]
      %v698 = vld [vmem:[%s0 + $0x40] sm:$0xff]
      %v699 = vld [vmem:[%s0 + $0x48] sm:$0xff]
      %v700 = vld [vmem:[%s0 + $0x50] sm:$0xff]
      %v701 = vld [vmem:[%s0 + $0x58] sm:$0xff]
      %v702 = vld [vmem:[%s0 + $0x60] sm:$0xff]
      %v703 = vld [vmem:[%s0 + $0x68] sm:$0xff]
      %v704 = vld [vmem:[%s0 + $0x70] sm:$0xff]
      %v705 = vld [vmem:[%s0 + $0x78] sm:$0xff]
      %v706 = vld [vmem:[%s0 + $0x80] sm:$0xff]
      %v707 = vld [vmem:[%s0 + $0x88] sm:$0xff]
      %v708 = vld [vmem:[%s0 + $0x90] sm:$0xff]
      %v709 = vld [vmem:[%s0 + $0x98] sm:$0xff]
      %v710 = vld [vmem:[%s0 + $0xa0] sm:$0xff]
      %v711 = vld [vmem:[%s0 + $0xa8] sm:$0xff]
      %v712 = vld [vmem:[%s0 + $0xb0] sm:$0xff]
      %v713 = vld [vmem:[%s0 + $0xb8] sm:$0xff]
      %v714 = vld [vmem:[%s0 + $0xc0] sm:$0xff]
      %v715 = vld [vmem:[%s0 + $0xc8] sm:$0xff]
      %v716 = vld [vmem:[%s0 + $0xd0] sm:$0xff]
      %v717 = vld [vmem:[%s0 + $0xd8] sm:$0xff]
      %v718 = vld [vmem:[%s0 + $0xe0] sm:$0xff]
      %v719 = vld [vmem:[%s0 + $0xe8] sm:$0xff]
      %v720 = vld [vmem:[%s0 + $0xf0] sm:$0xff]
      %v721 = vld [vmem:[%s0 + $0xf8] sm:$0xff]
      %v722 = vld [vmem:[%s0 + $0x100] sm:$0xff]
      %v723 = vld [vmem:[%s0 + $0x108] sm:$0xff]
      %v724 = vld [vmem:[%s0 + $0x110] sm:$0xff]
      %v725 = vld [vmem:[%s0 + $0x118] sm:$0xff]
      %v726 = vld [vmem:[%s0 + $0x120] sm:$0xff]
      %v727 = vld [vmem:[%s0 + $0x128] sm:$0xff]
      %v728 = vld [vmem:[%s0 + $0x130] sm:$0xff]
      %v729 = vld [vmem:[%s0 + $0x138] sm:$0xff]
      %v730 = vld [vmem:[%s0 + $0x140] sm:$0xff]
      %v731 = vld [vmem:[%s0 + $0x148] sm:$0xff]
      %v732 = vld [vmem:[%s0 + $0x150] sm:$0xff]
      %v733 = vld [vmem:[%s0 + $0x158] sm:$0xff]
      %v734 = vld [vmem:[%s0 + $0x160] sm:$0xff]
      %v735 = vld [vmem:[%s0 + $0x168] sm:$0xff]
      %v736 = vld [vmem:[%s0 + $0x170] sm:$0xff]
      %v737 = vld [vmem:[%s0 + $0x178] sm:$0xff]
      %v738 = vld [vmem:[%s0 + $0x180] sm:$0xff]
      %v739 = vld [vmem:[%s0 + $0x188] sm:$0xff]
      %v740 = vld [vmem:[%s0 + $0x190] sm:$0xff]
      %v741 = vld [vmem:[%s0 + $0x198] sm:$0xff]
      %v742 = vld [vmem:[%s0 + $0x1a0] sm:$0xff]
      %v743 = vld [vmem:[%s0 + $0x1a8] sm:$0xff]
      %v744 = vld [vmem:[%s0 + $0x1b0] sm:$0xff]
      %v745 = vld [vmem:[%s0 + $0x1b8] sm:$0xff]
      %v746 = vld [vmem:[%s0 + $0x1c0] sm:$0xff]
      %v747 = vld [vmem:[%s0 + $0x1c8] sm:$0xff]
      %v748 = vld [vmem:[%s0 + $0x1d0] sm:$0xff]
      %v749 = vld [vmem:[%s0 + $0x1d8] sm:$0xff]
      %v750 = vld [vmem:[%s0 + $0x1e0] sm:$0xff]
      %v751 = vld [vmem:[%s0 + $0x1e8] sm:$0xff]
      %v752 = vld [vmem:[%s0 + $0x1f0] sm:$0xff]
      %v753 = vld [vmem:[%s0 + $0x1f8] sm:$0xff]
      %v754 = vld [vmem:[%s648] sm:$0xff]
      %v755 = vld [vmem:[%s648 + $0x8] sm:$0xff]
      %v756 = vld [vmem:[%s648 + $0x10] sm:$0xff]
      %v757 = vld [vmem:[%s648 + $0x18] sm:$0xff]
      %v758 = vld [vmem:[%s648 + $0x20] sm:$0xff]
      %v759 = vld [vmem:[%s648 + $0x28] sm:$0xff]
      %v760 = vld [vmem:[%s648 + $0x30] sm:$0xff]
      %v761 = vld [vmem:[%s648 + $0x38] sm:$0xff]
      %v762 = vpack.c.bf16 %v756, %v754
      %v763 = vpack.c.bf16 %v757, %v755
      %v764 = vpack.c.bf16 %v760, %v758
      %v765 = vpack.c.bf16 %v761, %v759
      %v766 = vpack.c.bf16 %v692, %v690
      %v767 = vpack.c.bf16 %v693, %v691
      %v768 = vpack.c.bf16 %v696, %v694
      %v769 = vpack.c.bf16 %v697, %v695
      %v770 = vpack.c.bf16 %v700, %v698
      %v771 = vpack.c.bf16 %v701, %v699
      %v772 = vpack.c.bf16 %v704, %v702
      %v773 = vpack.c.bf16 %v705, %v703
      %v774 = vpack.c.bf16 %v708, %v706
      %v775 = vpack.c.bf16 %v709, %v707
      %v776 = vpack.c.bf16 %v712, %v710
      %v777 = vpack.c.bf16 %v713, %v711
      %v778 = vpack.c.bf16 %v716, %v714
      %v779 = vpack.c.bf16 %v717, %v715
      %v780 = vpack.c.bf16 %v720, %v718
      %v781 = vpack.c.bf16 %v721, %v719
      %v782 = vpack.c.bf16 %v724, %v722
      %v783 = vpack.c.bf16 %v725, %v723
      %v784 = vpack.c.bf16 %v728, %v726
      %v785 = vpack.c.bf16 %v729, %v727
      %v786 = vpack.c.bf16 %v732, %v730
      %v787 = vpack.c.bf16 %v733, %v731
      %v788 = vpack.c.bf16 %v736, %v734
      %v789 = vpack.c.bf16 %v737, %v735
      %v790 = vpack.c.bf16 %v740, %v738
      %v791 = vpack.c.bf16 %v741, %v739
      %v792 = vpack.c.bf16 %v744, %v742
      %v793 = vpack.c.bf16 %v745, %v743
      %v794 = vpack.c.bf16 %v748, %v746
      %v795 = vpack.c.bf16 %v749, %v747
      %v796 = vpack.c.bf16 %v752, %v750
      %v797 = vpack.c.bf16 %v753, %v751
      %v798 = vld [vmem:[%s653] sm:$0xff]
      %v799 = vld [vmem:[%s653 + $0x8] sm:$0xff]
      %v800 = vld [vmem:[%s653 + $0x10] sm:$0xff]
      %v801 = vld [vmem:[%s653 + $0x18] sm:$0xff]
      %803 = vset.pattern.permute.xlu0 0
      %804 = vperm.xlu0 %803, %v798
      %v805 = vpop.permute.xlu0 %804
      %808 = vset.pattern.permute.xlu0 0
      %809 = vperm.xlu0 %808, %v799
      %v810 = vpop.permute.xlu0 %809
      %813 = vset.pattern.permute.xlu0 0
      %814 = vperm.xlu0 %813, %v800
      %v815 = vpop.permute.xlu0 %814
      %818 = vset.pattern.permute.xlu0 0
      %819 = vperm.xlu0 %818, %v801
      %v820 = vpop.permute.xlu0 %819
      %822 = vmatpush.bf16.msra.mxu0 %v780
      %823 = vmatpush.bf16.msra.mxu0 %v778
      %824 = vmatpush.bf16.msra.mxu0 %v776
      %825 = vmatpush.bf16.msra.mxu0 %v774
      %826 = vmatpush.bf16.msra.mxu0 %v772
      %827 = vmatpush.bf16.msra.mxu0 %v770
      %828 = vmatpush.bf16.msra.mxu0 %v768
      %829 = vmatpush.bf16.msra.mxu0 %v766
      %830 = vmatmul.bf16.gmra.mxu0 %v762
      %v831 = vpop.f32.mrf.mxu0
      %v832 = vadd.f32 %v805, %v831
      %v833 = vpop.f32.mrf.mxu0
      %v834 = vadd.f32 %v810, %v833
      %835 = vmatmul.bf16.gmra.mxu0 %v764
      %v836 = vpop.f32.mrf.mxu0
      %v837 = vadd.f32 %v815, %v836
      %v838 = vpop.f32.mrf.mxu0
      %v839 = vadd.f32 %v820, %v838
      %840 = vdwg.mxu0
      %841 = vmatpush.bf16.msra.mxu0 %v796
      %842 = vmatpush.bf16.msra.mxu0 %v794
      %843 = vmatpush.bf16.msra.mxu0 %v792
      %844 = vmatpush.bf16.msra.mxu0 %v790
      %845 = vmatpush.bf16.msra.mxu0 %v788
      %846 = vmatpush.bf16.msra.mxu0 %v786
      %847 = vmatpush.bf16.msra.mxu0 %v784
      %848 = vmatpush.bf16.msra.mxu0 %v782
      %849 = vmatmul.bf16.gmra.mxu0 %v763
      %v850 = vpop.f32.mrf.mxu0
      %v851 = vadd.f32 %v832, %v850
      %v852 = vpop.f32.mrf.mxu0
      %v853 = vadd.f32 %v834, %v852
      %854 = vmatmul.bf16.gmra.mxu0 %v765
      %v855 = vpop.f32.mrf.mxu0
      %v856 = vadd.f32 %v837, %v855
      %v857 = vpop.f32.mrf.mxu0
      %v858 = vadd.f32 %v839, %v857
      %859 = vdwg.mxu0
      %860 = vmatpush.bf16.msra.mxu0 %v781
      %861 = vmatpush.bf16.msra.mxu0 %v779
      %862 = vmatpush.bf16.msra.mxu0 %v777
      %863 = vmatpush.bf16.msra.mxu0 %v775
      %864 = vmatpush.bf16.msra.mxu0 %v773
      %865 = vmatpush.bf16.msra.mxu0 %v771
      %866 = vmatpush.bf16.msra.mxu0 %v769
      %867 = vmatpush.bf16.msra.mxu0 %v767
      %868 = vmatmul.bf16.gmra.mxu0 %v762
      %v869 = vpop.f32.mrf.mxu0
      %v870 = vadd.f32 %v805, %v869
      %v871 = vpop.f32.mrf.mxu0
      %v872 = vadd.f32 %v810, %v871
      %873 = vmatmul.bf16.gmra.mxu0 %v764
      %v874 = vpop.f32.mrf.mxu0
      %v875 = vadd.f32 %v815, %v874
      %v876 = vpop.f32.mrf.mxu0
      %v877 = vadd.f32 %v820, %v876
      %878 = vdwg.mxu0
      %879 = vmatpush.bf16.msra.mxu0 %v797
      %880 = vmatpush.bf16.msra.mxu0 %v795
      %881 = vmatpush.bf16.msra.mxu0 %v793
      %882 = vmatpush.bf16.msra.mxu0 %v791
      %883 = vmatpush.bf16.msra.mxu0 %v789
      %884 = vmatpush.bf16.msra.mxu0 %v787
      %885 = vmatpush.bf16.msra.mxu0 %v785
      %886 = vmatpush.bf16.msra.mxu0 %v783
      %887 = vmatmul.bf16.gmra.mxu0 %v763
      %v888 = vpop.f32.mrf.mxu0
      %v889 = vadd.f32 %v870, %v888
      %v890 = vpop.f32.mrf.mxu0
      %v891 = vadd.f32 %v872, %v890
      %892 = vmatmul.bf16.gmra.mxu0 %v765
      %v893 = vpop.f32.mrf.mxu0
      %v894 = vadd.f32 %v875, %v893
      %v895 = vpop.f32.mrf.mxu0
      %v896 = vadd.f32 %v877, %v895
      %897 = vdwg.mxu0
      %v898 = vmax.f32 %v851, 0.0
      %v899 = vmax.f32 %v889, 0.0
      %v900 = vmax.f32 %v853, 0.0
      %v901 = vmax.f32 %v891, 0.0
      %v902 = vmax.f32 %v856, 0.0
      %v903 = vmax.f32 %v894, 0.0
      %v904 = vmax.f32 %v858, 0.0
      %v905 = vmax.f32 %v896, 0.0
      %v906 = vld [vmem:[%s658] sm:$0xff]
      %v907 = vld [vmem:[%s658 + $0x8] sm:$0xff]
      %v908 = vld [vmem:[%s658 + $0x10] sm:$0xff]
      %v909 = vld [vmem:[%s658 + $0x18] sm:$0xff]
      %v910 = vpack.c.bf16 %v907, %v906
      %v911 = vpack.c.bf16 %v909, %v908
      %v912 = vpack.c.bf16 %v900, %v898
      %v913 = vpack.c.bf16 %v901, %v899
      %v914 = vpack.c.bf16 %v904, %v902
      %v915 = vpack.c.bf16 %v905, %v903
      %v916 = vld [vmem:[%s663] sm:$0xff]
      %v917 = vld [vmem:[%s663 + $0x8] sm:$0xff]
      %v918 = vld [vmem:[%s663 + $0x10] sm:$0xff]
      %v919 = vld [vmem:[%s663 + $0x18] sm:$0xff]
      %921 = vset.pattern.permute.xlu0 0
      %922 = vperm.xlu0 %921, %v916
      %v923 = vpop.permute.xlu0 %922
      %926 = vset.pattern.permute.xlu0 0
      %927 = vperm.xlu0 %926, %v917
      %v928 = vpop.permute.xlu0 %927
      %931 = vset.pattern.permute.xlu0 0
      %932 = vperm.xlu0 %931, %v918
      %v933 = vpop.permute.xlu0 %932
      %936 = vset.pattern.permute.xlu0 0
      %937 = vperm.xlu0 %936, %v919
      %v938 = vpop.permute.xlu0 %937
      %vm940 = vcmask 261120
      %v942 = vsel %vm940, %v910, 0
      %v945 = vsel %vm940, %v911, 0
      %947 = vmatpush.bf16.msra.mxu0 0
      %948 = vmatpush.bf16.msra.mxu0 0
      %949 = vmatpush.bf16.msra.mxu0 0
      %950 = vmatpush.bf16.msra.mxu0 0
      %951 = vmatpush.bf16.msra.mxu0 0
      %952 = vmatpush.bf16.msra.mxu0 0
      %953 = vmatpush.bf16.msra.mxu0 %v914
      %954 = vmatpush.bf16.msra.mxu0 %v912
      %955 = vmatmul.bf16.gmra.mxu0 %v942
      %v956 = vpop.f32.mrf.mxu0
      %v957 = vadd.f32 %v923, %v956
      %v958 = vpop.f32.mrf.mxu0
      %v959 = vadd.f32 %v928, %v958
      %960 = vmatmul.bf16.gmra.mxu0 %v945
      %v961 = vpop.f32.mrf.mxu0
      %v962 = vadd.f32 %v933, %v961
      %v963 = vpop.f32.mrf.mxu0
      %v964 = vadd.f32 %v938, %v963
      %965 = vdwg.mxu0
      %966 = vmatpush.bf16.msra.mxu0 0
      %967 = vmatpush.bf16.msra.mxu0 0
      %968 = vmatpush.bf16.msra.mxu0 0
      %969 = vmatpush.bf16.msra.mxu0 0
      %970 = vmatpush.bf16.msra.mxu0 0
      %971 = vmatpush.bf16.msra.mxu0 0
      %972 = vmatpush.bf16.msra.mxu0 %v915
      %973 = vmatpush.bf16.msra.mxu0 %v913
      %974 = vmatmul.bf16.gmra.mxu0 %v942
      %v975 = vpop.f32.mrf.mxu0
      %v976 = vadd.f32 %v923, %v975
      %v977 = vpop.f32.mrf.mxu0
      %v978 = vadd.f32 %v928, %v977
      %979 = vmatmul.bf16.gmra.mxu0 %v945
      %v980 = vpop.f32.mrf.mxu0
      %v981 = vadd.f32 %v933, %v980
      %v982 = vpop.f32.mrf.mxu0
      %v983 = vadd.f32 %v938, %v982
      %984 = vdwg.mxu0
      %v985 = vld [vmem:[%s5] sm:$0xff]
      %v986 = vld [vmem:[%s5 + $0x8] sm:$0xff]
      %v987 = vpack.c.bf16 %v986, %v985
      %v988 = vpack.c.bf16 %v959, %v957
      %v989 = vpack.c.bf16 %v978, %v976
      %v990 = vpack.c.bf16 %v964, %v962
      %v991 = vpack.c.bf16 %v983, %v981
      %v992 = vld [vmem:[%s6] sm:$0xff]
      %v993 = vld [vmem:[%s6 + $0x8] sm:$0xff]
      %995 = vset.pattern.permute.xlu0 0
      %996 = vperm.xlu0 %995, %v992
      %v997 = vpop.permute.xlu0 %996
      %1000 = vset.pattern.permute.xlu0 0
      %1001 = vperm.xlu0 %1000, %v993
      %v1002 = vpop.permute.xlu0 %1001
      %v1005 = vsel %vm940, %v987, 0
      %1007 = vmatpush.bf16.msra.mxu0 0
      %1008 = vmatpush.bf16.msra.mxu0 0
      %1009 = vmatpush.bf16.msra.mxu0 0
      %1010 = vmatpush.bf16.msra.mxu0 0
      %1011 = vmatpush.bf16.msra.mxu0 0
      %1012 = vmatpush.bf16.msra.mxu0 0
      %1013 = vmatpush.bf16.msra.mxu0 %v990
      %1014 = vmatpush.bf16.msra.mxu0 %v988
      %1015 = vmatmul.bf16.gmra.mxu0 %v1005
      %v1016 = vpop.f32.mrf.mxu0
      %v1017 = vadd.f32 %v997, %v1016
      %v1018 = vpop.f32.mrf.mxu0
      %v1019 = vadd.f32 %v1002, %v1018
      %1020 = vdwg.mxu0
      %1021 = vmatpush.bf16.msra.mxu0 0
      %1022 = vmatpush.bf16.msra.mxu0 0
      %1023 = vmatpush.bf16.msra.mxu0 0
      %1024 = vmatpush.bf16.msra.mxu0 0
      %1025 = vmatpush.bf16.msra.mxu0 0
      %1026 = vmatpush.bf16.msra.mxu0 0
      %1027 = vmatpush.bf16.msra.mxu0 %v991
      %1028 = vmatpush.bf16.msra.mxu0 %v989
      %1029 = vmatmul.bf16.gmra.mxu0 %v1005
      %v1030 = vpop.f32.mrf.mxu0
      %v1031 = vadd.f32 %v997, %v1030
      %v1032 = vpop.f32.mrf.mxu0
      %v1033 = vadd.f32 %v1002, %v1032
      %1034 = vdwg.mxu0
      %v1035 = vld [vmem:[%s668] sm:$0xff]
      %v1036 = vld [vmem:[%s668 + $0x8] sm:$0xff]
      %v1037 = vld [vmem:[%s668 + $0x10] sm:$0xff]
      %v1038 = vld [vmem:[%s668 + $0x18] sm:$0xff]
      %v1039 = vadd.f32 %v1017, %v1035
      %v1040 = vadd.f32 %v1031, %v1036
      %v1041 = vadd.f32 %v1019, %v1037
      %v1042 = vadd.f32 %v1033, %v1038
      %v1043 = vld [vmem:[%s9] sm:$0xf]
      %v1044 = vpack.c.bf16 %v1043, %v1043
      %v1045 = vpack.c.bf16 %v1041, %v1039
      %v1046 = vpack.c.bf16 %v1042, %v1040
      %v1047 = vld [vmem:[%s10] sm:$0xf]
      %v1048 = vld [vmem:[%s673] sm:$0xff]
      %v1049 = vld [vmem:[%s673 + $0x8] sm:$0xff]
      %v1050 = vld [vmem:[%s673 + $0x10] sm:$0xff]
      %v1051 = vld [vmem:[%s673 + $0x18] sm:$0xff]
      %v1052 = vpack.c.bf16 %v1047, %v1047
      %v1053 = vpack.c.bf16 %v1050, %v1048
      %v1054 = vpack.c.bf16 %v1051, %v1049
      %vm1055 = vcmask 130048
      %v1057 = vsel %vm1055, %v1052, 0
      %1059 = vmatpush.bf16.msra.mxu0 0
      %1060 = vmatpush.bf16.msra.mxu0 0
      %1061 = vmatpush.bf16.msra.mxu0 0
      %1062 = vmatpush.bf16.msra.mxu0 0
      %1063 = vmatpush.bf16.msra.mxu0 0
      %1064 = vmatpush.bf16.msra.mxu0 0
      %1065 = vmatpush.bf16.msra.mxu0 0
      %1066 = vmatpush.bf16.msra.mxu0 %v1053
      %1067 = vmatmul.bf16.gmra.mxu0 %v1057
      %v1068 = vpop.f32.mrf.mxu0
      %v1069 = vadd.f32 0.0, %v1068
      %v1070 = vpop.f32.mrf.mxu0
      %1071 = vdwg.mxu0
      %1072 = vmatpush.bf16.msra.mxu0 0
      %1073 = vmatpush.bf16.msra.mxu0 0
      %1074 = vmatpush.bf16.msra.mxu0 0
      %1075 = vmatpush.bf16.msra.mxu0 0
      %1076 = vmatpush.bf16.msra.mxu0 0
      %1077 = vmatpush.bf16.msra.mxu0 0
      %1078 = vmatpush.bf16.msra.mxu0 0
      %1079 = vmatpush.bf16.msra.mxu0 %v1054
      %1080 = vmatmul.bf16.gmra.mxu0 %v1057
      %v1081 = vpop.f32.mrf.mxu0
      %v1082 = vadd.f32 0.0, %v1081
      %v1083 = vpop.f32.mrf.mxu0
      %1084 = vdwg.mxu0
      %v1086 = vsel %vm1055, %v1044, 0
      %1088 = vmatpush.bf16.msra.mxu0 0
      %1089 = vmatpush.bf16.msra.mxu0 0
      %1090 = vmatpush.bf16.msra.mxu0 0
      %1091 = vmatpush.bf16.msra.mxu0 0
      %1092 = vmatpush.bf16.msra.mxu0 0
      %1093 = vmatpush.bf16.msra.mxu0 0
      %1094 = vmatpush.bf16.msra.mxu0 0
      %1095 = vmatpush.bf16.msra.mxu0 %v1045
      %1096 = vmatmul.bf16.gmra.mxu0 %v1086
      %v1097 = vpop.f32.mrf.mxu0
      %v1098 = vadd.f32 %v1069, %v1097
      %v1099 = vpop.f32.mrf.mxu0
      %1100 = vdwg.mxu0
      %1101 = vmatpush.bf16.msra.mxu0 0
      %1102 = vmatpush.bf16.msra.mxu0 0
      %1103 = vmatpush.bf16.msra.mxu0 0
      %1104 = vmatpush.bf16.msra.mxu0 0
      %1105 = vmatpush.bf16.msra.mxu0 0
      %1106 = vmatpush.bf16.msra.mxu0 0
      %1107 = vmatpush.bf16.msra.mxu0 0
      %1108 = vmatpush.bf16.msra.mxu0 %v1046
      %1109 = vmatmul.bf16.gmra.mxu0 %v1086
      %v1110 = vpop.f32.mrf.mxu0
      %v1111 = vadd.f32 %v1082, %v1110
      %v1112 = vpop.f32.mrf.mxu0
      %1113 = vdwg.mxu0
      %v1114 = vld [vmem:[%s11] sm:$0xf]
      %1116 = vset.pattern.permute.xlu0 0
      %1117 = vperm.xlu0 %1116, %v1114
      %v1118 = vpop.permute.xlu0 %1117
      %v1120 = vadd.f32 %v1098, %v1118
      %v1121 = vadd.f32 %v1111, %v1118
      %v1122 = vmul.f32 %v1120, 0.5
      %v1123 = vmul.f32 %v1121, 0.5
      %v1124 = vmul.f32 %v1120, 0.044715
      %v1125 = vmul.f32 %v1121, 0.044715
      %v1126 = vmul.f32 %v1124, %v1120
      %v1127 = vmul.f32 %v1125, %v1121
      %v1128 = vmul.f32 %v1126, %v1120
      %v1129 = vmul.f32 %v1127, %v1121
      %v1130 = vadd.f32 %v1120, %v1128
      %v1131 = vadd.f32 %v1121, %v1129
      %v1132 = vmul.f32 %v1130, 0.7978846
      %v1133 = vmul.f32 %v1131, 0.7978846
      %v1134 = vtanh.pop %v1132
      %v1135 = vtanh.pop %v1133
      %v1136 = vadd.f32 %v1134, 1.0
      %v1137 = vadd.f32 %v1135, 1.0
      %v1138 = vmul.f32 %v1122, %v1136
      %v1139 = vmul.f32 %v1123, %v1137
      %v1140 = vld [vmem:[%s12] sm:$0xff]
      %v1141 = vld [vmem:[%s12 + $0x8] sm:$0xff]
      %v1142 = vpack.c.bf16 %v1141, %v1140
      %v1143 = vpack.c.bf16 %v1138, %v1138
      %v1144 = vpack.c.bf16 %v1139, %v1139
      %v1145 = vld [vmem:[%s13] sm:$0xff]
      %v1146 = vld [vmem:[%s13 + $0x8] sm:$0xff]
      %1148 = vset.pattern.permute.xlu0 0
      %1149 = vperm.xlu0 %1148, %v1145
      %v1150 = vpop.permute.xlu0 %1149
      %1153 = vset.pattern.permute.xlu0 0
      %1154 = vperm.xlu0 %1153, %v1146
      %v1155 = vpop.permute.xlu0 %1154
      %vm1157 = vcmask 31744
      %v1159 = vsel %vm1157, %v1142, 0
      %vm1161 = vcmask 1041408
      %v1163 = vsel %vm1161, %v1143, 0
      %v1166 = vsel %vm1161, %v1144, 0
      %1168 = vmatpush.bf16.msra.mxu0 0
      %1169 = vmatpush.bf16.msra.mxu0 0
      %1170 = vmatpush.bf16.msra.mxu0 0
      %1171 = vmatpush.bf16.msra.mxu0 0
      %1172 = vmatpush.bf16.msra.mxu0 0
      %1173 = vmatpush.bf16.msra.mxu0 0
      %1174 = vmatpush.bf16.msra.mxu0 0
      %1175 = vmatpush.bf16.msra.mxu0 %v1163
      %1176 = vmatmul.bf16.gmra.mxu0 %v1159
      %v1177 = vpop.f32.mrf.mxu0
      %v1178 = vadd.f32 %v1150, %v1177
      %v1179 = vpop.f32.mrf.mxu0
      %v1180 = vadd.f32 %v1155, %v1179
      %1181 = vdwg.mxu0
      %1182 = vmatpush.bf16.msra.mxu0 0
      %1183 = vmatpush.bf16.msra.mxu0 0
      %1184 = vmatpush.bf16.msra.mxu0 0
      %1185 = vmatpush.bf16.msra.mxu0 0
      %1186 = vmatpush.bf16.msra.mxu0 0
      %1187 = vmatpush.bf16.msra.mxu0 0
      %1188 = vmatpush.bf16.msra.mxu0 0
      %1189 = vmatpush.bf16.msra.mxu0 %v1166
      %1190 = vmatmul.bf16.gmra.mxu0 %v1159
      %v1191 = vpop.f32.mrf.mxu0
      %v1192 = vadd.f32 %v1150, %v1191
      %v1193 = vpop.f32.mrf.mxu0
      %v1194 = vadd.f32 %v1155, %v1193
      %1195 = vdwg.mxu0
      %v1196 = vld [vmem:[%s678] sm:$0xff]
      %v1197 = vld [vmem:[%s678 + $0x8] sm:$0xff]
      %v1198 = vadd.f32 %v1196, 1.0
      %v1199 = vadd.f32 %v1197, 1.0
      %1201 = vset.pattern.permute.xlu0 0
      %1202 = vperm.xlu0 %1201, %v1198
      %v1203 = vpop.permute.xlu0 %1202
      %1206 = vset.pattern.permute.xlu0 0
      %1207 = vperm.xlu0 %1206, %v1199
      %v1208 = vpop.permute.xlu0 %1207
      %v1210 = vmul.f32 %v1178, %v1203
      %v1211 = vmul.f32 %v1192, %v1203
      %v1212 = vmul.f32 %v1180, %v1208
      %v1213 = vmul.f32 %v1194, %v1208
      %v1214 = vld [vmem:[%s683] sm:$0xff]
      %v1215 = vld [vmem:[%s683 + $0x8] sm:$0xff]
      %1217 = vset.pattern.permute.xlu0 0
      %1218 = vperm.xlu0 %1217, %v1214
      %v1219 = vpop.permute.xlu0 %1218
      %1222 = vset.pattern.permute.xlu0 0
      %1223 = vperm.xlu0 %1222, %v1215
      %v1224 = vpop.permute.xlu0 %1223
      %v1226 = vadd.f32 %v1210, %v1219
      %v1227 = vadd.f32 %v1211, %v1219
      %v1228 = vadd.f32 %v1212, %v1224
      %v1229 = vadd.f32 %v1213, %v1224
      %v1230 = vadd.f32 %v1226, %v1228
      %v1231 = vrot.slane %v1230, 4
      %v1232 = vadd.f32 %v1230, %v1231
      %v1233 = vrot.slane %v1232, 2
      %v1234 = vadd.f32 %v1232, %v1233
      %v1235 = vrot.slane %v1234, 1
      %v1236 = vadd.f32 %v1234, %v1235
      %v1237 = vadd.f32 %v1227, %v1229
      %v1238 = vrot.slane %v1237, 4
      %v1239 = vadd.f32 %v1237, %v1238
      %v1240 = vrot.slane %v1239, 2
      %v1241 = vadd.f32 %v1239, %v1240
      %v1242 = vrot.slane %v1241, 1
      %v1243 = vadd.f32 %v1241, %v1242
      %v1244 = vrcp.pop 16.0
      %v1245 = vmul.f32 16.0, %v1244
      %v1246 = vsub.f32 1.0, %v1245
      %v1247 = vmul.f32 %v1244, %v1246
      %v1248 = vadd.f32 %v1244, %v1247
      %vm1249 = vweird.f32 %v1244
      %v1250 = vsel %vm1249, %v1244, %v1248
      %v1251 = vmul.f32 %v1236, %v1250
      %v1252 = vmul.f32 %v1243, %v1250
      %v1253 = vsub.f32 %v1226, %v1251
      %v1254 = vsub.f32 %v1227, %v1252
      %v1255 = vsub.f32 %v1228, %v1251
      %v1256 = vsub.f32 %v1229, %v1252
      %v1257 = vmul.f32 %v1253, %v1253
      %v1258 = vmul.f32 %v1254, %v1254
      %v1259 = vmul.f32 %v1255, %v1255
      %v1260 = vmul.f32 %v1256, %v1256
      %v1261 = vadd.f32 %v1257, %v1259
      %v1262 = vrot.slane %v1261, 4
      %v1263 = vadd.f32 %v1261, %v1262
      %v1264 = vrot.slane %v1263, 2
      %v1265 = vadd.f32 %v1263, %v1264
      %v1266 = vrot.slane %v1265, 1
      %v1267 = vadd.f32 %v1265, %v1266
      %v1268 = vadd.f32 %v1258, %v1260
      %v1269 = vrot.slane %v1268, 4
      %v1270 = vadd.f32 %v1268, %v1269
      %v1271 = vrot.slane %v1270, 2
      %v1272 = vadd.f32 %v1270, %v1271
      %v1273 = vrot.slane %v1272, 1
      %v1274 = vadd.f32 %v1272, %v1273
      %v1275 = vmul.f32 %v1267, %v1250
      %v1276 = vmul.f32 %v1274, %v1250
      %v1277 = vadd.f32 %v1275, 1e-06
      %v1278 = vadd.f32 %v1276, 1e-06
      %v1279 = vrsqrt.pop %v1277
      %v1280 = vmul.f32 %v1279, %v1277
      %v1281 = vmul.f32 %v1280, %v1279
      %v1282 = vmul.f32 0.5, %v1281
      %v1283 = vsub.f32 1.5, %v1282
      %v1284 = vmul.f32 %v1279, %v1283
      %vm1285 = vweird.f32 %v1277
      %vm1286 = vweird.f32 %v1279
      %vm1287 = vmor %vm1285, %vm1286
      %v1288 = vsel %vm1287, %v1279, %v1284
      %v1289 = vrsqrt.pop %v1278
      %v1290 = vmul.f32 %v1289, %v1278
      %v1291 = vmul.f32 %v1290, %v1289
      %v1292 = vmul.f32 0.5, %v1291
      %v1293 = vsub.f32 1.5, %v1292
      %v1294 = vmul.f32 %v1289, %v1293
      %vm1295 = vweird.f32 %v1278
      %vm1296 = vweird.f32 %v1289
      %vm1297 = vmor %vm1295, %vm1296
      %v1298 = vsel %vm1297, %v1289, %v1294
      %v1299 = vmul.f32 %v1253, %v1288
      %v1300 = vmul.f32 %v1254, %v1298
      %v1301 = vmul.f32 %v1255, %v1288
      %v1302 = vmul.f32 %v1256, %v1298
      %v1303 = vld [vmem:[%s16] sm:$0xff]
      %v1304 = vld [vmem:[%s16 + $0x8] sm:$0xff]
      %v1305 = vadd.f32 %v1299, %v1301
      %v1306 = vrot.slane %v1305, 4
      %v1307 = vadd.f32 %v1305, %v1306
      %v1308 = vrot.slane %v1307, 2
      %v1309 = vadd.f32 %v1307, %v1308
      %v1310 = vrot.slane %v1309, 1
      %v1311 = vadd.f32 %v1309, %v1310
      %v1312 = vadd.f32 %v1300, %v1302
      %v1313 = vrot.slane %v1312, 4
      %v1314 = vadd.f32 %v1312, %v1313
      %v1315 = vrot.slane %v1314, 2
      %v1316 = vadd.f32 %v1314, %v1315
      %v1317 = vrot.slane %v1316, 1
      %v1318 = vadd.f32 %v1316, %v1317
      %v1319 = vmul.f32 %v1311, %v1250
      %v1320 = vmul.f32 %v1318, %v1250
      %v1321 = vsub.f32 %v1299, %v1319
      %v1322 = vsub.f32 %v1300, %v1320
      %v1323 = vsub.f32 %v1301, %v1319
      %v1324 = vsub.f32 %v1302, %v1320
      %v1325 = vmul.f32 %v1321, %v1321
      %v1326 = vmul.f32 %v1322, %v1322
      %v1327 = vmul.f32 %v1323, %v1323
      %v1328 = vmul.f32 %v1324, %v1324
      %v1329 = vadd.f32 %v1325, %v1327
      %v1330 = vrot.slane %v1329, 4
      %v1331 = vadd.f32 %v1329, %v1330
      %v1332 = vrot.slane %v1331, 2
      %v1333 = vadd.f32 %v1331, %v1332
      %v1334 = vrot.slane %v1333, 1
      %v1335 = vadd.f32 %v1333, %v1334
      %v1336 = vadd.f32 %v1326, %v1328
      %v1337 = vrot.slane %v1336, 4
      %v1338 = vadd.f32 %v1336, %v1337
      %v1339 = vrot.slane %v1338, 2
      %v1340 = vadd.f32 %v1338, %v1339
      %v1341 = vrot.slane %v1340, 1
      %v1342 = vadd.f32 %v1340, %v1341
      %v1343 = vmul.f32 %v1335, %v1250
      %v1344 = vmul.f32 %v1342, %v1250
      %v1345 = vadd.f32 %v1343, 1e-06
      %v1346 = vadd.f32 %v1344, 1e-06
      %v1347 = vrsqrt.pop %v1345
      %v1348 = vmul.f32 %v1347, %v1345
      %v1349 = vmul.f32 %v1348, %v1347
      %v1350 = vmul.f32 0.5, %v1349
      %v1351 = vsub.f32 1.5, %v1350
      %v1352 = vmul.f32 %v1347, %v1351
      %vm1353 = vweird.f32 %v1345
      %vm1354 = vweird.f32 %v1347
      %vm1355 = vmor %vm1353, %vm1354
      %v1356 = vsel %vm1355, %v1347, %v1352
      %v1357 = vrsqrt.pop %v1346
      %v1358 = vmul.f32 %v1357, %v1346
      %v1359 = vmul.f32 %v1358, %v1357
      %v1360 = vmul.f32 0.5, %v1359
      %v1361 = vsub.f32 1.5, %v1360
      %v1362 = vmul.f32 %v1357, %v1361
      %vm1363 = vweird.f32 %v1346
      %vm1364 = vweird.f32 %v1357
      %vm1365 = vmor %vm1363, %vm1364
      %v1366 = vsel %vm1365, %v1357, %v1362
      %v1367 = vmul.f32 %v1321, %v1356
      %v1368 = vmul.f32 %v1322, %v1366
      %v1369 = vmul.f32 %v1323, %v1356
      %v1370 = vmul.f32 %v1324, %v1366
      %1372 = vset.pattern.permute.xlu0 0
      %1373 = vperm.xlu0 %1372, %v1303
      %v1374 = vpop.permute.xlu0 %1373
      %1377 = vset.pattern.permute.xlu0 0
      %1378 = vperm.xlu0 %1377, %v1304
      %v1379 = vpop.permute.xlu0 %1378
      %v1381 = vmul.f32 %v1374, %v1367
      %v1382 = vmul.f32 %v1374, %v1368
      %v1383 = vmul.f32 %v1379, %v1369
      %v1384 = vmul.f32 %v1379, %v1370
      %v1385 = vadd.f32 %v1299, %v1381
      %v1386 = vadd.f32 %v1300, %v1382
      %v1387 = vadd.f32 %v1301, %v1383
      %v1388 = vadd.f32 %v1302, %v1384
      %1389 = vst [vmem:[%s688] sm:$0xff] %v1385
      %1390 = vst [vmem:[%s688 + $0x8] sm:$0xff] %v1386
      %1391 = vst [vmem:[%s688 + $0x10] sm:$0xff] %v1387
      %1392 = vst [vmem:[%s688 + $0x18] sm:$0xff] %v1388
      %p1393 = scmp.lt.s32.totalorder %s28, 1
      %s1394 = scalar_select %p1393, %s28, 1
      %s1395 = smul.addr %s1394, 4
      %s1396 = smul.addr %s1395, 8
      %s1397 = scalar_lea.vmem %s17, %s1396
      // Predicated region
      $region89: #{_lambda_.3} parent=87 // pred_check
        %p1398 = pneg %p443
      $region90: #{_lambda_.3} parent=87 // pred_check_branch
        %1400 = sbr.rel (%p1398) target = $region92
      $region91: #{_lambda_.3} parent=87 // pred_region
        _
      $region92: #{_lambda_.3} parent=87 // pred_fallthru
        _
    $region88: #{_lambda_.3} parent=5 // pred_fallthru
      _
    %p1401 = scmp.le.s32.totalorder 2, %s23
    // Predicated region
    $region93: #{_lambda_.3} parent=5 // pred_check
      %p1402 = pneg %p1401
    $region94: #{_lambda_.3} parent=5 // pred_check_branch
      %1404 = sbr.rel (%p1402) target = $region96
    $region95: #{_lambda_.3} parent=5 // pred_region
      %s1405 = ssub.s32 %s23, 2
      // Predicated region
      $region97: #{_lambda_.3} parent=95 // pred_check
        %p1406 = pneg %p449
      $region98: #{_lambda_.3} parent=95 // pred_check_branch
        %1408 = sbr.rel (%p1406) target = $region100
      $region99: #{_lambda_.3} parent=95 // pred_region
        %p1409 = scmp.lt.s32.totalorder %s29, 1
        %s1410 = scalar_select %p1409, %s29, 1
        %s1411 = smul.addr %s1410, 4
        %s1412 = smul.addr %s1411, 8
        %s1413 = scalar_lea.vmem %s17, %s1412
      $region100: #{_lambda_.3} parent=95 // pred_fallthru
        _
    $region96: #{_lambda_.3} parent=5 // pred_fallthru
      _
  $region6: #{_lambda_.3} parent=0 // loop_footer
    %s27 = sadd.s32 1, %s23
  $region7: #{_lambda_.3} parent=0 // loop_footer_branch
    %22 = sbr.rel target = $region3
  $region8: #{_lambda_.3} parent=0 // loop_exit
    _

</llo_original>
